<compile_context>
chip_gen: v7x
topology: tpu7x:2x2x1
jax: 0.10.0
libtpu: 0.0.40
codegen_flags: <defaults>
</compile_context>

<pallas_src>
import jax
import jax.numpy as jnp
from jax.experimental import pallas as pl
from jax.experimental.pallas import tpu as pltpu

NUM_CLASSES = 10
C_FEAT = 2048  # inception_v3 feature dim feeding the classifier


def _head_kernel(feat_ref, w_ref, b_ref, out_ref):
    """Fused global-avg-pool + linear classifier for a tile of TB images.

    feat_ref: (TB, S, C)   NHWC feature maps, spatial flattened (C lane-dense)
    w_ref:    (C, NPAD)    classifier weight^T, pre-scaled by 1/S, zero padded
    b_ref:    (1, NPAD)    classifier bias, zero padded
    out_ref:  (TB, NPAD)   padded logits (f32)
    """
    # AdaptiveAvgPool2d((1,1)) == sum over the spatial (sublane) axis with f32
    # accumulation; the 1/S averaging factor is folded into w_ref.
    pooled = jnp.sum(feat_ref[...], axis=1, dtype=jnp.float32)        # (TB, C)
    # nn.Linear: pooled @ (W^T / S) + b — one tiny MXU matmul, lane-dense out.
    logits = jnp.dot(pooled, w_ref[...],
                     preferred_element_type=jnp.float32)              # (TB, NPAD)
    out_ref[...] = logits + b_ref[...]


def _padded_block_bytes(block_shape, dtype):
    """VMEM bytes of a block including (sublane, lane) layout padding."""
    itemsize = jnp.dtype(dtype).itemsize
    lane = 128
    sublane = 8 * max(1, 4 // itemsize)     # 8 (f32) / 16 (bf16) / 32 (int8)
    dims = list(block_shape)
    if dims:
        dims[-1] = pl.cdiv(dims[-1], lane) * lane
    if len(dims) >= 2:
        dims[-2] = pl.cdiv(dims[-2], sublane) * sublane
    total = itemsize
    for d in dims:
        total *= int(d)
    return total


def _tpu_chip_info():
    """Best-effort (vmem_capacity_bytes, tensorcores_per_chip)."""
    vmem_bytes = 64 << 20    # conservative default = v7x per-TC physical VMEM
    num_tc = 1               # v5e / v6e
    try:
        info = pltpu.get_tpu_info()
        for name in ("vmem_capacity_bytes", "vmem_bytes", "vmem_size_bytes"):
            val = getattr(info, name, None)
            if val:
                vmem_bytes = int(val)
                break
        for name in ("num_cores", "tensorcores_per_chip", "num_tensorcores",
                     "cores_per_chip"):
            val = getattr(info, name, None)
            if val:
                num_tc = int(val)
                break
    except Exception:
        pass
    return vmem_bytes, num_tc


def _pick_tb(n, s, c, feat_dtype, min_steps, feat_budget_bytes):
    """Largest batch tile that (a) divides n, (b) fits the per-step feature
    budget (double-buffered feature stream + in-kernel f32 reduce temp, all
    (8,128)-padded), and (c) keeps >= min_steps grid steps (2 only on
    multi-TensorCore chips)."""
    per_img = (2 * _padded_block_bytes((1, s, c), feat_dtype)      # double buffer
               + _padded_block_bytes((1, s, c), jnp.float32))      # f32 reduce tmp
    tb_cap = max(1, int(feat_budget_bytes) // per_img)
    tb_cap = min(tb_cap, n)
    for tb in range(tb_cap, 0, -1):
        if n % tb == 0 and (n // tb) >= min_steps:
            return tb
    return 1


def inception_custom_head(feat_nhwc, weight, bias):
    """feat_nhwc: (N, H, W, 2048) bf16/f32 frozen-backbone feature map (NHWC).
    weight:    (num_classes, 2048)  PyTorch nn.Linear layout.
    bias:      (num_classes,)
    returns:   (N, num_classes) float32 logits.
    """
    n, h, w, c = feat_nhwc.shape
    assert c == C_FEAT
    s = h * w
    num_classes = weight.shape[0]
    npad = pl.cdiv(num_classes, 128) * 128   # lane-dense output width

    # Free reshape (no layout change): (N, H, W, C) -> (N, S, C).
    feat = feat_nhwc.reshape(n, s, c)

    # Fold the 1/S pooling average into the f32 weights; zero-pad lane-dense.
    w_scaled = weight.astype(jnp.float32).T / jnp.float32(s)            # (C, nc)
    w_pad = jnp.pad(w_scaled, ((0, 0), (0, npad - num_classes)))        # (C, NPAD)
    b_pad = jnp.pad(bias.astype(jnp.float32).reshape(1, -1),
                    ((0, 0), (0, npad - num_classes)))                  # (1, NPAD)

    vmem_bytes, num_tc = _tpu_chip_info()

    # (8,128)-padded byte sizes of the VMEM-resident constants.
    w_bytes = _padded_block_bytes(w_pad.shape, jnp.float32)
    b_bytes = _padded_block_bytes(b_pad.shape, jnp.float32)

    # Budget for the streamed feature input: half the physical VMEM minus the
    # resident weights/bias (counted double-buffered in case the single-buffer
    # request is not honored) and fixed headroom.
    reserve = 2 * (w_bytes + b_bytes) + (4 << 20)
    feat_budget = max(2 << 20, vmem_bytes // 2 - reserve)

    min_steps = 2 if num_tc >= 2 else 1       # keep both TCs fed only on v7x
    tb = _pick_tb(n, s, c, feat.dtype, min_steps, feat_budget)
    grid = (n // tb,)

    # Explicit VMEM limit from the actual (8,128)-padded working set.
    feat_db = 2 * tb * _padded_block_bytes((1, s, c), feat.dtype)
    reduce_tmp = tb * _padded_block_bytes((1, s, c), jnp.float32)
    out_db = 2 * _padded_block_bytes((tb, npad), jnp.float32)
    vmem_limit = feat_db + reduce_tmp + 2 * (w_bytes + b_bytes) + out_db + (4 << 20)
    vmem_limit = int(min(max(vmem_limit, 16 << 20), vmem_bytes))

    feat_spec = pl.BlockSpec((tb, s, c), lambda i: (i, 0, 0))
    out_spec = pl.BlockSpec((tb, npad), lambda i: (i, 0))

    def call(single_buffer_consts):
        if single_buffer_consts:
            # Constant index maps: fetched once, no double buffer needed.
            w_spec = pl.BlockSpec((c, npad), lambda i: (0, 0),
                                  pipeline_mode=pl.Buffered(1))
            b_spec = pl.BlockSpec((1, npad), lambda i: (0, 0),
                                  pipeline_mode=pl.Buffered(1))
        else:
            w_spec = pl.BlockSpec((c, npad), lambda i: (0, 0))
            b_spec = pl.BlockSpec((1, npad), lambda i: (0, 0))
        return pl.pallas_call(
            _head_kernel,
            out_shape=jax.ShapeDtypeStruct((n, npad), jnp.float32),
            grid_spec=pltpu.PrefetchScalarGridSpec(
                num_scalar_prefetch=0,
                grid=grid,
                in_specs=[feat_spec, w_spec, b_spec],
                out_specs=out_spec,
            ),
            compiler_params=pltpu.CompilerParams(
                dimension_semantics=("parallel",),
                vmem_limit_bytes=vmem_limit,
            ),
        )(feat, w_pad, b_pad)

    try:
        out_pad = call(True)
    except Exception:
        # pl.Buffered(1) unsupported on this jax version -> default buffering.
        out_pad = call(False)

    # Drop the lane padding outside the kernel (tiny op).
    return out_pad[:, :num_classes]


if __name__ == "__main__":
    key = jax.random.PRNGKey(0)
    k_feat, k_w, k_b = jax.random.split(key, 3)

    # Small shapes: batch=2, inception final feature map 8 x 8 x 2048 (NHWC).
    N, H, W = 2, 8, 8
    feat_f32 = jax.random.normal(k_feat, (N, H, W, C_FEAT), dtype=jnp.float32)
    feat_bf16 = feat_f32.astype(jnp.bfloat16)   # bf16 feature stream (HBM-bound)

    # Deterministic Linear(2048, num_classes) params (PyTorch fan-in scale).
    bound = 1.0 / jnp.sqrt(jnp.float32(C_FEAT))
    weight = jax.random.uniform(k_w, (NUM_CLASSES, C_FEAT), jnp.float32,
                                minval=-bound, maxval=bound)
    bias = jax.random.uniform(k_b, (NUM_CLASSES,), jnp.float32,
                              minval=-bound, maxval=bound)

    logits = inception_custom_head(feat_bf16, weight, bias)
    logits = jax.block_until_ready(logits)

    # Pure-JAX reference of the implemented head, on the same bf16 features.
    ref = jnp.mean(feat_bf16.astype(jnp.float32), axis=(1, 2)) @ weight.T + bias
    assert logits.shape == (N, NUM_CLASSES)
    assert jnp.allclose(logits, ref, rtol=1e-2, atol=1e-2)

    print("KERNEL_OK")
</pallas_src>

<mosaic_0001>
module attributes {stable_mosaic.version = 11 : i64} {
  func.func @_head_kernel(%arg0: i32, %arg1: memref<2x64x2048xbf16, #tpu.memory_space<vmem>>, %arg2: memref<2048x128xf32, #tpu.memory_space<vmem>>, %arg3: memref<1x128xf32, #tpu.memory_space<vmem>>, %arg4: memref<2x128xf32, #tpu.memory_space<vmem>>) attributes {dimension_semantics = [#tpu.dimension_semantics<parallel>], iteration_bounds = array<i64: 1>, scalar_prefetch = 0 : i64, scratch_operands = 0 : i64, tpu.core_type = #tpu.core_type<tc>, window_params = [{transform_indices = @transform_0, window_bounds = array<i64: 2, 64, 2048>}, {pipeline_mode = #tpu.pipeline_mode<synchronous>, transform_indices = @transform_1, window_bounds = array<i64: 2048, 128>}, {pipeline_mode = #tpu.pipeline_mode<synchronous>, transform_indices = @transform_2, window_bounds = array<i64: 1, 128>}, {transform_indices = @transform_3, window_bounds = array<i64: 2, 128>}]} {
    %c0 = arith.constant 0 : index
    %c0_0 = arith.constant 0 : index
    %c0_1 = arith.constant 0 : index
    %0 = vector.load %arg1[%c0, %c0_0, %c0_1] : memref<2x64x2048xbf16, #tpu.memory_space<vmem>>, vector<2x64x2048xbf16>
    %1 = arith.extf %0 : vector<2x64x2048xbf16> to vector<2x64x2048xf32>
    %cst = arith.constant dense<0.000000e+00> : vector<2x2048xf32>
    %2 = vector.multi_reduction <add>, %1, %cst [1] : vector<2x64x2048xf32> to vector<2x2048xf32>
    %c0_2 = arith.constant 0 : index
    %c0_3 = arith.constant 0 : index
    %3 = vector.load %arg2[%c0_2, %c0_3] : memref<2048x128xf32, #tpu.memory_space<vmem>>, vector<2048x128xf32>
    %cst_4 = arith.constant dense<0.000000e+00> : vector<2x128xf32>
    %4 = tpu.matmul %2, %3, %cst_4 {dimension_numbers = #tpu.dot_dimension_numbers<[1], [0], [0], [1], [0, 0, 1, 1], [], []>} : vector<2x2048xf32>, vector<2048x128xf32>, vector<2x128xf32> -> vector<2x128xf32>
    %c0_5 = arith.constant 0 : index
    %c0_6 = arith.constant 0 : index
    %5 = vector.load %arg3[%c0_5, %c0_6] : memref<1x128xf32, #tpu.memory_space<vmem>>, vector<1x128xf32>
    %6 = vector.broadcast %5 : vector<1x128xf32> to vector<2x128xf32>
    %7 = arith.addf %4, %6 : vector<2x128xf32>
    %c0_7 = arith.constant 0 : index
    %c0_8 = arith.constant 0 : index
    %8 = vector.load %arg4[%c0_7, %c0_8] : memref<2x128xf32, #tpu.memory_space<vmem>>, vector<2x128xf32>
    tpu.vector_store %arg4[%c0_7, %c0_8], %7 {strides = array<i32>} : memref<2x128xf32, #tpu.memory_space<vmem>>, vector<2x128xf32>,
    return
  }
  func.func @transform_0(%arg0: i32) -> (i32, i32, i32) {
    %c0_i32 = arith.constant 0 : i32
    %c0_i32_0 = arith.constant 0 : i32
    %c0_i32_1 = arith.constant 0 : i32
    return %arg0, %c0_i32, %c0_i32_0 : i32, i32, i32
  }
  func.func @transform_1(%arg0: i32) -> (i32, i32) {
    %c0_i32 = arith.constant 0 : i32
    %c0_i32_0 = arith.constant 0 : i32
    %c0_i32_1 = arith.constant 0 : i32
    return %c0_i32, %c0_i32_0 : i32, i32
  }
  func.func @transform_2(%arg0: i32) -> (i32, i32) {
    %c0_i32 = arith.constant 0 : i32
    %c0_i32_0 = arith.constant 0 : i32
    %c0_i32_1 = arith.constant 0 : i32
    return %c0_i32, %c0_i32_0 : i32, i32
  }
  func.func @transform_3(%arg0: i32) -> (i32, i32) {
    %c0_i32 = arith.constant 0 : i32
    %c0_i32_0 = arith.constant 0 : i32
    return %arg0, %c0_i32 : i32, i32
  }
}

module attributes {stable_mosaic.version = 11 : i64} {
  func.func @_head_kernel(%arg0: i32, %arg1: memref<2x64x2048xbf16, #tpu.memory_space<vmem>>, %arg2: memref<2048x128xf32, #tpu.memory_space<vmem>>, %arg3: memref<1x128xf32, #tpu.memory_space<vmem>>, %arg4: memref<2x128xf32, #tpu.memory_space<vmem>>) attributes {dimension_semantics = [#tpu.dimension_semantics<parallel>], iteration_bounds = array<i64: 1>, scalar_prefetch = 0 : i64, scratch_operands = 0 : i64, tpu.core_type = #tpu.core_type<tc>, window_params = [{transform_indices = @transform_0, window_bounds = array<i64: 2, 64, 2048>}, {pipeline_mode = #tpu.pipeline_mode<synchronous>, transform_indices = @transform_1, window_bounds = array<i64: 2048, 128>}, {pipeline_mode = #tpu.pipeline_mode<synchronous>, transform_indices = @transform_2, window_bounds = array<i64: 1, 128>}, {transform_indices = @transform_3, window_bounds = array<i64: 2, 128>}]} {
    %c0 = arith.constant 0 : index
    %c0_0 = arith.constant 0 : index
    %c0_1 = arith.constant 0 : index
    %0 = vector.load %arg1[%c0, %c0_0, %c0_1] : memref<2x64x2048xbf16, #tpu.memory_space<vmem>>, vector<2x64x2048xbf16>
    %1 = arith.extf %0 : vector<2x64x2048xbf16> to vector<2x64x2048xf32>
    %cst = arith.constant dense<0.000000e+00> : vector<2x2048xf32>
    %2 = vector.multi_reduction <add>, %1, %cst [1] : vector<2x64x2048xf32> to vector<2x2048xf32>
    %c0_2 = arith.constant 0 : index
    %c0_3 = arith.constant 0 : index
    %3 = vector.load %arg2[%c0_2, %c0_3] : memref<2048x128xf32, #tpu.memory_space<vmem>>, vector<2048x128xf32>
    %cst_4 = arith.constant dense<0.000000e+00> : vector<2x128xf32>
    %4 = tpu.matmul %2, %3, %cst_4 {dimension_numbers = #tpu.dot_dimension_numbers<[1], [0], [0], [1], [0, 0, 1, 1], [], []>} : vector<2x2048xf32>, vector<2048x128xf32>, vector<2x128xf32> -> vector<2x128xf32>
    %c0_5 = arith.constant 0 : index
    %c0_6 = arith.constant 0 : index
    %5 = vector.load %arg3[%c0_5, %c0_6] : memref<1x128xf32, #tpu.memory_space<vmem>>, vector<1x128xf32>
    %6 = vector.broadcast %5 : vector<1x128xf32> to vector<2x128xf32>
    %7 = arith.addf %4, %6 : vector<2x128xf32>
    %c0_7 = arith.constant 0 : index
    %c0_8 = arith.constant 0 : index
    %8 = vector.load %arg4[%c0_7, %c0_8] : memref<2x128xf32, #tpu.memory_space<vmem>>, vector<2x128xf32>
    tpu.vector_store %arg4[%c0_7, %c0_8], %7 {strides = array<i32>} : memref<2x128xf32, #tpu.memory_space<vmem>>, vector<2x128xf32>,
    return
  }
  func.func @transform_0(%arg0: i32) -> (i32, i32, i32) {
    %c0_i32 = arith.constant 0 : i32
    %c0_i32_0 = arith.constant 0 : i32
    %c0_i32_1 = arith.constant 0 : i32
    return %arg0, %c0_i32, %c0_i32_0 : i32, i32, i32
  }
  func.func @transform_1(%arg0: i32) -> (i32, i32) {
    %c0_i32 = arith.constant 0 : i32
    %c0_i32_0 = arith.constant 0 : i32
    %c0_i32_1 = arith.constant 0 : i32
    return %c0_i32, %c0_i32_0 : i32, i32
  }
  func.func @transform_2(%arg0: i32) -> (i32, i32) {
    %c0_i32 = arith.constant 0 : i32
    %c0_i32_0 = arith.constant 0 : i32
    %c0_i32_1 = arith.constant 0 : i32
    return %c0_i32, %c0_i32_0 : i32, i32
  }
  func.func @transform_3(%arg0: i32) -> (i32, i32) {
    %c0_i32 = arith.constant 0 : i32
    %c0_i32_0 = arith.constant 0 : i32
    return %arg0, %c0_i32 : i32, i32
  }
}

</mosaic_0001>

<llo_original>
// kernel: tpu_custom_call.1
$region0: #{tpu_custom_call.1}
  #allocation0 [shape = 'u32[]', space=smem, size = 0x4, offset = 0x4, fixed_abs, tag = 'smem constant byte address 0x4 - core index']
  #allocation1 [shape = 'u32[144,128]{1,0:T(1,128)}', space=vmem, size = 0x12000, scoped, tag = 'internal scratch']
  %s0 = inlined_call_operand.hbm [shape: bf16[2,64,2048], index: 0, kind: input, shape index: {}]
  %s1 = inlined_call_operand.hbm [shape: f32[2048,128], index: 1, kind: input, shape index: {}]
  %s2 = inlined_call_operand.vmem [shape: f32[1,128], index: 2, kind: input, shape index: {}]
  %s3 = inlined_call_operand.hbm [shape: f32[2,128], index: 3, kind: output, shape index: {}]
  %s4 = sld [smem:[#allocation0]]
  $region30: #{tpu_custom_call.1} parent=0
    _
  %s6 = ssub.s32 1, %s4
  %s7 = scalar_select 0, %s6, %s4
  $region1: #{tpu_custom_call.1} parent=0
    #allocation2 [shape = 'u8[524288]{0}', space=vmem, size = 0x80000, scoped, tag = 'input window, operand 0, single buffered']
    #allocation3 [shape = 's32[1]{0}', space=sflag, size = 0x4, scoped, tag = 'scoped memory for tpu_custom_call.1']
    #allocation4 [shape = 's32[1]{0}', space=sflag, size = 0x4, scoped, tag = 'scoped memory for tpu_custom_call.1']
    #allocation5 [shape = 'u8[1048576]{0}', space=vmem, size = 0x100000, scoped, tag = 'input window, operand 1, single buffered']
    #allocation6 [shape = 's32[1]{0}', space=sflag, size = 0x4, scoped, tag = 'scoped memory for tpu_custom_call.1']
    #allocation7 [shape = 'u8[1024]{0}', space=vmem, size = 0x400, scoped, tag = 'output window, operand 0, single buffered']
    %8 = vsyncpa [#allocation3], 0
    %9 = vsyncpa [#allocation6], 0
    %10 = vsyncpa [#allocation4], 0
    // Predicated region
    $region2: #{tpu_custom_call.1} parent=1 // pred_check
      _
    $region3: #{tpu_custom_call.1} parent=1 // pred_check_branch
      %12 = sbr.rel (0) target = $region5
    $region4: #{tpu_custom_call.1} parent=1 // pred_region
      %s14 = ssub.s32 16384, 16384
      %15 = vsyncadd [#allocation3], %s14
      %s16 = sshll.u32 [#allocation2], 4
      %s17 = int_to_ptr.vmem [resolvable:$true] %s16
      %22 = dma.hbm_to_vmem [thread:$0]  %s0, 16384, %s17, [#allocation3], 1024, 1024, 64
    $region5: #{tpu_custom_call.1} parent=1 // pred_fallthru
      _
    // Predicated region
    $region6: #{tpu_custom_call.1} parent=1 // pred_check
      _
    $region7: #{tpu_custom_call.1} parent=1 // pred_check_branch
      %24 = sbr.rel (0) target = $region9
    $region8: #{tpu_custom_call.1} parent=1 // pred_region
      %s26 = ssub.s32 32768, 32768
      %27 = vsyncadd [#allocation6], %s26
      %s28 = sshll.u32 [#allocation5], 4
      %s29 = int_to_ptr.vmem [resolvable:$true] %s28
      %34 = dma.hbm_to_vmem [thread:$0]  %s1, 32768, %s29, [#allocation6], 128, 128, 8
    $region9: #{tpu_custom_call.1} parent=1 // pred_fallthru
      _
    // Predicated region
    $region10: #{tpu_custom_call.1} parent=1 // pred_check
      _
    $region11: #{tpu_custom_call.1} parent=1 // pred_check_branch
      %36 = sbr.rel (0) target = $region13
    $region12: #{tpu_custom_call.1} parent=1 // pred_region
      _
    $region13: #{tpu_custom_call.1} parent=1 // pred_fallthru
      _
    // Predicated region
    $region14: #{tpu_custom_call.1} parent=1 // pred_check
      _
    $region15: #{tpu_custom_call.1} parent=1 // pred_check_branch
      %38 = sbr.rel (0) target = $region17
    $region16: #{tpu_custom_call.1} parent=1 // pred_region
      %39 = dma.done [#allocation3], 16384
    $region17: #{tpu_custom_call.1} parent=1 // pred_fallthru
      _
    // Predicated region
    $region18: #{tpu_custom_call.1} parent=1 // pred_check
      _
    $region19: #{tpu_custom_call.1} parent=1 // pred_check_branch
      %41 = sbr.rel (0) target = $region21
    $region20: #{tpu_custom_call.1} parent=1 // pred_region
      %42 = dma.done [#allocation6], 32768
    $region21: #{tpu_custom_call.1} parent=1 // pred_fallthru
      _
    %v43 = vld [vmem:[#allocation2] sm:$0xff]
    %v44 = vld [vmem:[#allocation2 + $0x8] sm:$0xff]
    %v45 = vld [vmem:[#allocation2 + $0x10] sm:$0xff]
    %v46 = vld [vmem:[#allocation2 + $0x18] sm:$0xff]
    %v47 = vld [vmem:[#allocation2 + $0x20] sm:$0xff]
    %v48 = vld [vmem:[#allocation2 + $0x28] sm:$0xff]
    %v49 = vld [vmem:[#allocation2 + $0x30] sm:$0xff]
    %v50 = vld [vmem:[#allocation2 + $0x38] sm:$0xff]
    %v51 = vld [vmem:[#allocation2 + $0x40] sm:$0xff]
    %v52 = vld [vmem:[#allocation2 + $0x48] sm:$0xff]
    %v53 = vld [vmem:[#allocation2 + $0x50] sm:$0xff]
    %v54 = vld [vmem:[#allocation2 + $0x58] sm:$0xff]
    %v55 = vld [vmem:[#allocation2 + $0x60] sm:$0xff]
    %v56 = vld [vmem:[#allocation2 + $0x68] sm:$0xff]
    %v57 = vld [vmem:[#allocation2 + $0x70] sm:$0xff]
    %v58 = vld [vmem:[#allocation2 + $0x78] sm:$0xff]
    %v59 = vld [vmem:[#allocation2 + $0x80] sm:$0xff]
    %v60 = vld [vmem:[#allocation2 + $0x88] sm:$0xff]
    %v61 = vld [vmem:[#allocation2 + $0x90] sm:$0xff]
    %v62 = vld [vmem:[#allocation2 + $0x98] sm:$0xff]
    %v63 = vld [vmem:[#allocation2 + $0xa0] sm:$0xff]
    %v64 = vld [vmem:[#allocation2 + $0xa8] sm:$0xff]
    %v65 = vld [vmem:[#allocation2 + $0xb0] sm:$0xff]
    %v66 = vld [vmem:[#allocation2 + $0xb8] sm:$0xff]
    %v67 = vld [vmem:[#allocation2 + $0xc0] sm:$0xff]
    %v68 = vld [vmem:[#allocation2 + $0xc8] sm:$0xff]
    %v69 = vld [vmem:[#allocation2 + $0xd0] sm:$0xff]
    %v70 = vld [vmem:[#allocation2 + $0xd8] sm:$0xff]
    %v71 = vld [vmem:[#allocation2 + $0xe0] sm:$0xff]
    %v72 = vld [vmem:[#allocation2 + $0xe8] sm:$0xff]
    %v73 = vld [vmem:[#allocation2 + $0xf0] sm:$0xff]
    %v74 = vld [vmem:[#allocation2 + $0xf8] sm:$0xff]
    %v75 = vld [vmem:[#allocation2 + $0x100] sm:$0xff]
    %v76 = vld [vmem:[#allocation2 + $0x108] sm:$0xff]
    %v77 = vld [vmem:[#allocation2 + $0x110] sm:$0xff]
    %v78 = vld [vmem:[#allocation2 + $0x118] sm:$0xff]
    %v79 = vld [vmem:[#allocation2 + $0x120] sm:$0xff]
    %v80 = vld [vmem:[#allocation2 + $0x128] sm:$0xff]
    %v81 = vld [vmem:[#allocation2 + $0x130] sm:$0xff]
    %v82 = vld [vmem:[#allocation2 + $0x138] sm:$0xff]
    %v83 = vld [vmem:[#allocation2 + $0x140] sm:$0xff]
    %v84 = vld [vmem:[#allocation2 + $0x148] sm:$0xff]
    %v85 = vld [vmem:[#allocation2 + $0x150] sm:$0xff]
    %v86 = vld [vmem:[#allocation2 + $0x158] sm:$0xff]
    %v87 = vld [vmem:[#allocation2 + $0x160] sm:$0xff]
    %v88 = vld [vmem:[#allocation2 + $0x168] sm:$0xff]
    %v89 = vld [vmem:[#allocation2 + $0x170] sm:$0xff]
    %v90 = vld [vmem:[#allocation2 + $0x178] sm:$0xff]
    %v91 = vld [vmem:[#allocation2 + $0x180] sm:$0xff]
    %v92 = vld [vmem:[#allocation2 + $0x188] sm:$0xff]
    %v93 = vld [vmem:[#allocation2 + $0x190] sm:$0xff]
    %v94 = vld [vmem:[#allocation2 + $0x198] sm:$0xff]
    %v95 = vld [vmem:[#allocation2 + $0x1a0] sm:$0xff]
    %v96 = vld [vmem:[#allocation2 + $0x1a8] sm:$0xff]
    %v97 = vld [vmem:[#allocation2 + $0x1b0] sm:$0xff]
    %v98 = vld [vmem:[#allocation2 + $0x1b8] sm:$0xff]
    %v99 = vld [vmem:[#allocation2 + $0x1c0] sm:$0xff]
    %v100 = vld [vmem:[#allocation2 + $0x1c8] sm:$0xff]
    %v101 = vld [vmem:[#allocation2 + $0x1d0] sm:$0xff]
    %v102 = vld [vmem:[#allocation2 + $0x1d8] sm:$0xff]
    %v103 = vld [vmem:[#allocation2 + $0x1e0] sm:$0xff]
    %v104 = vld [vmem:[#allocation2 + $0x1e8] sm:$0xff]
    %v105 = vld [vmem:[#allocation2 + $0x1f0] sm:$0xff]
    %v106 = vld [vmem:[#allocation2 + $0x1f8] sm:$0xff]
    %v107 = vld [vmem:[#allocation2 + $0x200] sm:$0xff]
    %v108 = vld [vmem:[#allocation2 + $0x208] sm:$0xff]
    %v109 = vld [vmem:[#allocation2 + $0x210] sm:$0xff]
    %v110 = vld [vmem:[#allocation2 + $0x218] sm:$0xff]
    %v111 = vld [vmem:[#allocation2 + $0x220] sm:$0xff]
    %v112 = vld [vmem:[#allocation2 + $0x228] sm:$0xff]
    %v113 = vld [vmem:[#allocation2 + $0x230] sm:$0xff]
    %v114 = vld [vmem:[#allocation2 + $0x238] sm:$0xff]
    %v115 = vld [vmem:[#allocation2 + $0x240] sm:$0xff]
    %v116 = vld [vmem:[#allocation2 + $0x248] sm:$0xff]
    %v117 = vld [vmem:[#allocation2 + $0x250] sm:$0xff]
    %v118 = vld [vmem:[#allocation2 + $0x258] sm:$0xff]
    %v119 = vld [vmem:[#allocation2 + $0x260] sm:$0xff]
    %v120 = vld [vmem:[#allocation2 + $0x268] sm:$0xff]
    %v121 = vld [vmem:[#allocation2 + $0x270] sm:$0xff]
    %v122 = vld [vmem:[#allocation2 + $0x278] sm:$0xff]
    %v123 = vld [vmem:[#allocation2 + $0x280] sm:$0xff]
    %v124 = vld [vmem:[#allocation2 + $0x288] sm:$0xff]
    %v125 = vld [vmem:[#allocation2 + $0x290] sm:$0xff]
    %v126 = vld [vmem:[#allocation2 + $0x298] sm:$0xff]
    %v127 = vld [vmem:[#allocation2 + $0x2a0] sm:$0xff]
    %v128 = vld [vmem:[#allocation2 + $0x2a8] sm:$0xff]
    %v129 = vld [vmem:[#allocation2 + $0x2b0] sm:$0xff]
    %v130 = vld [vmem:[#allocation2 + $0x2b8] sm:$0xff]
    %v131 = vld [vmem:[#allocation2 + $0x2c0] sm:$0xff]
    %v132 = vld [vmem:[#allocation2 + $0x2c8] sm:$0xff]
    %v133 = vld [vmem:[#allocation2 + $0x2d0] sm:$0xff]
    %v134 = vld [vmem:[#allocation2 + $0x2d8] sm:$0xff]
    %v135 = vld [vmem:[#allocation2 + $0x2e0] sm:$0xff]
    %v136 = vld [vmem:[#allocation2 + $0x2e8] sm:$0xff]
    %v137 = vld [vmem:[#allocation2 + $0x2f0] sm:$0xff]
    %v138 = vld [vmem:[#allocation2 + $0x2f8] sm:$0xff]
    %v139 = vld [vmem:[#allocation2 + $0x300] sm:$0xff]
    %v140 = vld [vmem:[#allocation2 + $0x308] sm:$0xff]
    %v141 = vld [vmem:[#allocation2 + $0x310] sm:$0xff]
    %v142 = vld [vmem:[#allocation2 + $0x318] sm:$0xff]
    %v143 = vld [vmem:[#allocation2 + $0x320] sm:$0xff]
    %v144 = vld [vmem:[#allocation2 + $0x328] sm:$0xff]
    %v145 = vld [vmem:[#allocation2 + $0x330] sm:$0xff]
    %v146 = vld [vmem:[#allocation2 + $0x338] sm:$0xff]
    %v147 = vld [vmem:[#allocation2 + $0x340] sm:$0xff]
    %v148 = vld [vmem:[#allocation2 + $0x348] sm:$0xff]
    %v149 = vld [vmem:[#allocation2 + $0x350] sm:$0xff]
    %v150 = vld [vmem:[#allocation2 + $0x358] sm:$0xff]
    %v151 = vld [vmem:[#allocation2 + $0x360] sm:$0xff]
    %v152 = vld [vmem:[#allocation2 + $0x368] sm:$0xff]
    %v153 = vld [vmem:[#allocation2 + $0x370] sm:$0xff]
    %v154 = vld [vmem:[#allocation2 + $0x378] sm:$0xff]
    %v155 = vld [vmem:[#allocation2 + $0x380] sm:$0xff]
    %v156 = vld [vmem:[#allocation2 + $0x388] sm:$0xff]
    %v157 = vld [vmem:[#allocation2 + $0x390] sm:$0xff]
    %v158 = vld [vmem:[#allocation2 + $0x398] sm:$0xff]
    %v159 = vld [vmem:[#allocation2 + $0x3a0] sm:$0xff]
    %v160 = vld [vmem:[#allocation2 + $0x3a8] sm:$0xff]
    %v161 = vld [vmem:[#allocation2 + $0x3b0] sm:$0xff]
    %v162 = vld [vmem:[#allocation2 + $0x3b8] sm:$0xff]
    %v163 = vld [vmem:[#allocation2 + $0x3c0] sm:$0xff]
    %v164 = vld [vmem:[#allocation2 + $0x3c8] sm:$0xff]
    %v165 = vld [vmem:[#allocation2 + $0x3d0] sm:$0xff]
    %v166 = vld [vmem:[#allocation2 + $0x3d8] sm:$0xff]
    %v167 = vld [vmem:[#allocation2 + $0x3e0] sm:$0xff]
    %v168 = vld [vmem:[#allocation2 + $0x3e8] sm:$0xff]
    %v169 = vld [vmem:[#allocation2 + $0x3f0] sm:$0xff]
    %v170 = vld [vmem:[#allocation2 + $0x3f8] sm:$0xff]
    %v171 = vunpack.c.l.bf16 %v43
    %v172 = vunpack.c.h.bf16 %v43
    %v173 = vunpack.c.l.bf16 %v44
    %v174 = vunpack.c.h.bf16 %v44
    %v175 = vunpack.c.l.bf16 %v45
    %v176 = vunpack.c.h.bf16 %v45
    %v177 = vunpack.c.l.bf16 %v46
    %v178 = vunpack.c.h.bf16 %v46
    %v179 = vunpack.c.l.bf16 %v47
    %v180 = vunpack.c.h.bf16 %v47
    %v181 = vunpack.c.l.bf16 %v48
    %v182 = vunpack.c.h.bf16 %v48
    %v183 = vunpack.c.l.bf16 %v49
    %v184 = vunpack.c.h.bf16 %v49
    %v185 = vunpack.c.l.bf16 %v50
    %v186 = vunpack.c.h.bf16 %v50
    %v187 = vunpack.c.l.bf16 %v51
    %v188 = vunpack.c.h.bf16 %v51
    %v189 = vunpack.c.l.bf16 %v52
    %v190 = vunpack.c.h.bf16 %v52
    %v191 = vunpack.c.l.bf16 %v53
    %v192 = vunpack.c.h.bf16 %v53
    %v193 = vunpack.c.l.bf16 %v54
    %v194 = vunpack.c.h.bf16 %v54
    %v195 = vunpack.c.l.bf16 %v55
    %v196 = vunpack.c.h.bf16 %v55
    %v197 = vunpack.c.l.bf16 %v56
    %v198 = vunpack.c.h.bf16 %v56
    %v199 = vunpack.c.l.bf16 %v57
    %v200 = vunpack.c.h.bf16 %v57
    %v201 = vunpack.c.l.bf16 %v58
    %v202 = vunpack.c.h.bf16 %v58
    %v203 = vunpack.c.l.bf16 %v59
    %v204 = vunpack.c.h.bf16 %v59
    %v205 = vunpack.c.l.bf16 %v60
    %v206 = vunpack.c.h.bf16 %v60
    %v207 = vunpack.c.l.bf16 %v61
    %v208 = vunpack.c.h.bf16 %v61
    %v209 = vunpack.c.l.bf16 %v62
    %v210 = vunpack.c.h.bf16 %v62
    %v211 = vunpack.c.l.bf16 %v63
    %v212 = vunpack.c.h.bf16 %v63
    %v213 = vunpack.c.l.bf16 %v64
    %v214 = vunpack.c.h.bf16 %v64
    %v215 = vunpack.c.l.bf16 %v65
    %v216 = vunpack.c.h.bf16 %v65
    %v217 = vunpack.c.l.bf16 %v66
    %v218 = vunpack.c.h.bf16 %v66
    %v219 = vunpack.c.l.bf16 %v67
    %v220 = vunpack.c.h.bf16 %v67
    %v221 = vunpack.c.l.bf16 %v68
    %v222 = vunpack.c.h.bf16 %v68
    %v223 = vunpack.c.l.bf16 %v69
    %v224 = vunpack.c.h.bf16 %v69
    %v225 = vunpack.c.l.bf16 %v70
    %v226 = vunpack.c.h.bf16 %v70
    %v227 = vunpack.c.l.bf16 %v71
    %v228 = vunpack.c.h.bf16 %v71
    %v229 = vunpack.c.l.bf16 %v72
    %v230 = vunpack.c.h.bf16 %v72
    %v231 = vunpack.c.l.bf16 %v73
    %v232 = vunpack.c.h.bf16 %v73
    %v233 = vunpack.c.l.bf16 %v74
    %v234 = vunpack.c.h.bf16 %v74
    %v235 = vunpack.c.l.bf16 %v75
    %v236 = vunpack.c.h.bf16 %v75
    %v237 = vunpack.c.l.bf16 %v76
    %v238 = vunpack.c.h.bf16 %v76
    %v239 = vunpack.c.l.bf16 %v77
    %v240 = vunpack.c.h.bf16 %v77
    %v241 = vunpack.c.l.bf16 %v78
    %v242 = vunpack.c.h.bf16 %v78
    %v243 = vunpack.c.l.bf16 %v79
    %v244 = vunpack.c.h.bf16 %v79
    %v245 = vunpack.c.l.bf16 %v80
    %v246 = vunpack.c.h.bf16 %v80
    %v247 = vunpack.c.l.bf16 %v81
    %v248 = vunpack.c.h.bf16 %v81
    %v249 = vunpack.c.l.bf16 %v82
    %v250 = vunpack.c.h.bf16 %v82
    %v251 = vunpack.c.l.bf16 %v83
    %v252 = vunpack.c.h.bf16 %v83
    %v253 = vunpack.c.l.bf16 %v84
    %v254 = vunpack.c.h.bf16 %v84
    %v255 = vunpack.c.l.bf16 %v85
    %v256 = vunpack.c.h.bf16 %v85
    %v257 = vunpack.c.l.bf16 %v86
    %v258 = vunpack.c.h.bf16 %v86
    %v259 = vunpack.c.l.bf16 %v87
    %v260 = vunpack.c.h.bf16 %v87
    %v261 = vunpack.c.l.bf16 %v88
    %v262 = vunpack.c.h.bf16 %v88
    %v263 = vunpack.c.l.bf16 %v89
    %v264 = vunpack.c.h.bf16 %v89
    %v265 = vunpack.c.l.bf16 %v90
    %v266 = vunpack.c.h.bf16 %v90
    %v267 = vunpack.c.l.bf16 %v91
    %v268 = vunpack.c.h.bf16 %v91
    %v269 = vunpack.c.l.bf16 %v92
    %v270 = vunpack.c.h.bf16 %v92
    %v271 = vunpack.c.l.bf16 %v93
    %v272 = vunpack.c.h.bf16 %v93
    %v273 = vunpack.c.l.bf16 %v94
    %v274 = vunpack.c.h.bf16 %v94
    %v275 = vunpack.c.l.bf16 %v95
    %v276 = vunpack.c.h.bf16 %v95
    %v277 = vunpack.c.l.bf16 %v96
    %v278 = vunpack.c.h.bf16 %v96
    %v279 = vunpack.c.l.bf16 %v97
    %v280 = vunpack.c.h.bf16 %v97
    %v281 = vunpack.c.l.bf16 %v98
    %v282 = vunpack.c.h.bf16 %v98
    %v283 = vunpack.c.l.bf16 %v99
    %v284 = vunpack.c.h.bf16 %v99
    %v285 = vunpack.c.l.bf16 %v100
    %v286 = vunpack.c.h.bf16 %v100
    %v287 = vunpack.c.l.bf16 %v101
    %v288 = vunpack.c.h.bf16 %v101
    %v289 = vunpack.c.l.bf16 %v102
    %v290 = vunpack.c.h.bf16 %v102
    %v291 = vunpack.c.l.bf16 %v103
    %v292 = vunpack.c.h.bf16 %v103
    %v293 = vunpack.c.l.bf16 %v104
    %v294 = vunpack.c.h.bf16 %v104
    %v295 = vunpack.c.l.bf16 %v105
    %v296 = vunpack.c.h.bf16 %v105
    %v297 = vunpack.c.l.bf16 %v106
    %v298 = vunpack.c.h.bf16 %v106
    %v299 = vunpack.c.l.bf16 %v107
    %v300 = vunpack.c.h.bf16 %v107
    %v301 = vunpack.c.l.bf16 %v108
    %v302 = vunpack.c.h.bf16 %v108
    %v303 = vunpack.c.l.bf16 %v109
    %v304 = vunpack.c.h.bf16 %v109
    %v305 = vunpack.c.l.bf16 %v110
    %v306 = vunpack.c.h.bf16 %v110
    %v307 = vunpack.c.l.bf16 %v111
    %v308 = vunpack.c.h.bf16 %v111
    %v309 = vunpack.c.l.bf16 %v112
    %v310 = vunpack.c.h.bf16 %v112
    %v311 = vunpack.c.l.bf16 %v113
    %v312 = vunpack.c.h.bf16 %v113
    %v313 = vunpack.c.l.bf16 %v114
    %v314 = vunpack.c.h.bf16 %v114
    %v315 = vunpack.c.l.bf16 %v115
    %v316 = vunpack.c.h.bf16 %v115
    %v317 = vunpack.c.l.bf16 %v116
    %v318 = vunpack.c.h.bf16 %v116
    %v319 = vunpack.c.l.bf16 %v117
    %v320 = vunpack.c.h.bf16 %v117
    %v321 = vunpack.c.l.bf16 %v118
    %v322 = vunpack.c.h.bf16 %v118
    %v323 = vunpack.c.l.bf16 %v119
    %v324 = vunpack.c.h.bf16 %v119
    %v325 = vunpack.c.l.bf16 %v120
    %v326 = vunpack.c.h.bf16 %v120
    %v327 = vunpack.c.l.bf16 %v121
    %v328 = vunpack.c.h.bf16 %v121
    %v329 = vunpack.c.l.bf16 %v122
    %v330 = vunpack.c.h.bf16 %v122
    %v331 = vunpack.c.l.bf16 %v123
    %v332 = vunpack.c.h.bf16 %v123
    %v333 = vunpack.c.l.bf16 %v124
    %v334 = vunpack.c.h.bf16 %v124
    %v335 = vunpack.c.l.bf16 %v125
    %v336 = vunpack.c.h.bf16 %v125
    %v337 = vunpack.c.l.bf16 %v126
    %v338 = vunpack.c.h.bf16 %v126
    %v339 = vunpack.c.l.bf16 %v127
    %v340 = vunpack.c.h.bf16 %v127
    %v341 = vunpack.c.l.bf16 %v128
    %v342 = vunpack.c.h.bf16 %v128
    %v343 = vunpack.c.l.bf16 %v129
    %v344 = vunpack.c.h.bf16 %v129
    %v345 = vunpack.c.l.bf16 %v130
    %v346 = vunpack.c.h.bf16 %v130
    %v347 = vunpack.c.l.bf16 %v131
    %v348 = vunpack.c.h.bf16 %v131
    %v349 = vunpack.c.l.bf16 %v132
    %v350 = vunpack.c.h.bf16 %v132
    %v351 = vunpack.c.l.bf16 %v133
    %v352 = vunpack.c.h.bf16 %v133
    %v353 = vunpack.c.l.bf16 %v134
    %v354 = vunpack.c.h.bf16 %v134
    %v355 = vunpack.c.l.bf16 %v135
    %v356 = vunpack.c.h.bf16 %v135
    %v357 = vunpack.c.l.bf16 %v136
    %v358 = vunpack.c.h.bf16 %v136
    %v359 = vunpack.c.l.bf16 %v137
    %v360 = vunpack.c.h.bf16 %v137
    %v361 = vunpack.c.l.bf16 %v138
    %v362 = vunpack.c.h.bf16 %v138
    %v363 = vunpack.c.l.bf16 %v139
    %v364 = vunpack.c.h.bf16 %v139
    %v365 = vunpack.c.l.bf16 %v140
    %v366 = vunpack.c.h.bf16 %v140
    %v367 = vunpack.c.l.bf16 %v141
    %v368 = vunpack.c.h.bf16 %v141
    %v369 = vunpack.c.l.bf16 %v142
    %v370 = vunpack.c.h.bf16 %v142
    %v371 = vunpack.c.l.bf16 %v143
    %v372 = vunpack.c.h.bf16 %v143
    %v373 = vunpack.c.l.bf16 %v144
    %v374 = vunpack.c.h.bf16 %v144
    %v375 = vunpack.c.l.bf16 %v145
    %v376 = vunpack.c.h.bf16 %v145
    %v377 = vunpack.c.l.bf16 %v146
    %v378 = vunpack.c.h.bf16 %v146
    %v379 = vunpack.c.l.bf16 %v147
    %v380 = vunpack.c.h.bf16 %v147
    %v381 = vunpack.c.l.bf16 %v148
    %v382 = vunpack.c.h.bf16 %v148
    %v383 = vunpack.c.l.bf16 %v149
    %v384 = vunpack.c.h.bf16 %v149
    %v385 = vunpack.c.l.bf16 %v150
    %v386 = vunpack.c.h.bf16 %v150
    %v387 = vunpack.c.l.bf16 %v151
    %v388 = vunpack.c.h.bf16 %v151
    %v389 = vunpack.c.l.bf16 %v152
    %v390 = vunpack.c.h.bf16 %v152
    %v391 = vunpack.c.l.bf16 %v153
    %v392 = vunpack.c.h.bf16 %v153
    %v393 = vunpack.c.l.bf16 %v154
    %v394 = vunpack.c.h.bf16 %v154
    %v395 = vunpack.c.l.bf16 %v155
    %v396 = vunpack.c.h.bf16 %v155
    %v397 = vunpack.c.l.bf16 %v156
    %v398 = vunpack.c.h.bf16 %v156
    %v399 = vunpack.c.l.bf16 %v157
    %v400 = vunpack.c.h.bf16 %v157
    %v401 = vunpack.c.l.bf16 %v158
    %v402 = vunpack.c.h.bf16 %v158
    %v403 = vunpack.c.l.bf16 %v159
    %v404 = vunpack.c.h.bf16 %v159
    %v405 = vunpack.c.l.bf16 %v160
    %v406 = vunpack.c.h.bf16 %v160
    %v407 = vunpack.c.l.bf16 %v161
    %v408 = vunpack.c.h.bf16 %v161
    %v409 = vunpack.c.l.bf16 %v162
    %v410 = vunpack.c.h.bf16 %v162
    %v411 = vunpack.c.l.bf16 %v163
    %v412 = vunpack.c.h.bf16 %v163
    %v413 = vunpack.c.l.bf16 %v164
    %v414 = vunpack.c.h.bf16 %v164
    %v415 = vunpack.c.l.bf16 %v165
    %v416 = vunpack.c.h.bf16 %v165
    %v417 = vunpack.c.l.bf16 %v166
    %v418 = vunpack.c.h.bf16 %v166
    %v419 = vunpack.c.l.bf16 %v167
    %v420 = vunpack.c.h.bf16 %v167
    %v421 = vunpack.c.l.bf16 %v168
    %v422 = vunpack.c.h.bf16 %v168
    %v423 = vunpack.c.l.bf16 %v169
    %v424 = vunpack.c.h.bf16 %v169
    %v425 = vunpack.c.l.bf16 %v170
    %v426 = vunpack.c.h.bf16 %v170
    %v427 = vadd.f32 %v171, %v187
    %v428 = vadd.f32 %v427, %v203
    %v429 = vadd.f32 %v428, %v219
    %v430 = vadd.f32 %v429, %v235
    %v431 = vadd.f32 %v430, %v251
    %v432 = vadd.f32 %v431, %v267
    %v433 = vadd.f32 %v432, %v283
    %v434 = vrot.slane %v433, 4
    %v435 = vadd.f32 %v433, %v434
    %v436 = vrot.slane %v435, 2
    %v437 = vadd.f32 %v435, %v436
    %v438 = vrot.slane %v437, 1
    %v439 = vadd.f32 %v437, %v438
    %v440 = vadd.f32 %v172, %v188
    %v441 = vadd.f32 %v440, %v204
    %v442 = vadd.f32 %v441, %v220
    %v443 = vadd.f32 %v442, %v236
    %v444 = vadd.f32 %v443, %v252
    %v445 = vadd.f32 %v444, %v268
    %v446 = vadd.f32 %v445, %v284
    %v447 = vrot.slane %v446, 4
    %v448 = vadd.f32 %v446, %v447
    %v449 = vrot.slane %v448, 2
    %v450 = vadd.f32 %v448, %v449
    %v451 = vrot.slane %v450, 1
    %v452 = vadd.f32 %v450, %v451
    %v453 = vadd.f32 %v173, %v189
    %v454 = vadd.f32 %v453, %v205
    %v455 = vadd.f32 %v454, %v221
    %v456 = vadd.f32 %v455, %v237
    %v457 = vadd.f32 %v456, %v253
    %v458 = vadd.f32 %v457, %v269
    %v459 = vadd.f32 %v458, %v285
    %v460 = vrot.slane %v459, 4
    %v461 = vadd.f32 %v459, %v460
    %v462 = vrot.slane %v461, 2
    %v463 = vadd.f32 %v461, %v462
    %v464 = vrot.slane %v463, 1
    %v465 = vadd.f32 %v463, %v464
    %v466 = vadd.f32 %v174, %v190
    %v467 = vadd.f32 %v466, %v206
    %v468 = vadd.f32 %v467, %v222
    %v469 = vadd.f32 %v468, %v238
    %v470 = vadd.f32 %v469, %v254
    %v471 = vadd.f32 %v470, %v270
    %v472 = vadd.f32 %v471, %v286
    %v473 = vrot.slane %v472, 4
    %v474 = vadd.f32 %v472, %v473
    %v475 = vrot.slane %v474, 2
    %v476 = vadd.f32 %v474, %v475
    %v477 = vrot.slane %v476, 1
    %v478 = vadd.f32 %v476, %v477
    %v479 = vadd.f32 %v175, %v191
    %v480 = vadd.f32 %v479, %v207
    %v481 = vadd.f32 %v480, %v223
    %v482 = vadd.f32 %v481, %v239
    %v483 = vadd.f32 %v482, %v255
    %v484 = vadd.f32 %v483, %v271
    %v485 = vadd.f32 %v484, %v287
    %v486 = vrot.slane %v485, 4
    %v487 = vadd.f32 %v485, %v486
    %v488 = vrot.slane %v487, 2
    %v489 = vadd.f32 %v487, %v488
    %v490 = vrot.slane %v489, 1
    %v491 = vadd.f32 %v489, %v490
    %v492 = vadd.f32 %v176, %v192
    %v493 = vadd.f32 %v492, %v208
    %v494 = vadd.f32 %v493, %v224
    %v495 = vadd.f32 %v494, %v240
    %v496 = vadd.f32 %v495, %v256
    %v497 = vadd.f32 %v496, %v272
    %v498 = vadd.f32 %v497, %v288
    %v499 = vrot.slane %v498, 4
    %v500 = vadd.f32 %v498, %v499
    %v501 = vrot.slane %v500, 2
    %v502 = vadd.f32 %v500, %v501
    %v503 = vrot.slane %v502, 1
    %v504 = vadd.f32 %v502, %v503
    %v505 = vadd.f32 %v177, %v193
    %v506 = vadd.f32 %v505, %v209
    %v507 = vadd.f32 %v506, %v225
    %v508 = vadd.f32 %v507, %v241
    %v509 = vadd.f32 %v508, %v257
    %v510 = vadd.f32 %v509, %v273
    %v511 = vadd.f32 %v510, %v289
    %v512 = vrot.slane %v511, 4
    %v513 = vadd.f32 %v511, %v512
    %v514 = vrot.slane %v513, 2
    %v515 = vadd.f32 %v513, %v514
    %v516 = vrot.slane %v515, 1
    %v517 = vadd.f32 %v515, %v516
    %v518 = vadd.f32 %v178, %v194
    %v519 = vadd.f32 %v518, %v210
    %v520 = vadd.f32 %v519, %v226
    %v521 = vadd.f32 %v520, %v242
    %v522 = vadd.f32 %v521, %v258
    %v523 = vadd.f32 %v522, %v274
    %v524 = vadd.f32 %v523, %v290
    %v525 = vrot.slane %v524, 4
    %v526 = vadd.f32 %v524, %v525
    %v527 = vrot.slane %v526, 2
    %v528 = vadd.f32 %v526, %v527
    %v529 = vrot.slane %v528, 1
    %v530 = vadd.f32 %v528, %v529
    %v531 = vadd.f32 %v179, %v195
    %v532 = vadd.f32 %v531, %v211
    %v533 = vadd.f32 %v532, %v227
    %v534 = vadd.f32 %v533, %v243
    %v535 = vadd.f32 %v534, %v259
    %v536 = vadd.f32 %v535, %v275
    %v537 = vadd.f32 %v536, %v291
    %v538 = vrot.slane %v537, 4
    %v539 = vadd.f32 %v537, %v538
    %v540 = vrot.slane %v539, 2
    %v541 = vadd.f32 %v539, %v540
    %v542 = vrot.slane %v541, 1
    %v543 = vadd.f32 %v541, %v542
    %v544 = vadd.f32 %v180, %v196
    %v545 = vadd.f32 %v544, %v212
    %v546 = vadd.f32 %v545, %v228
    %v547 = vadd.f32 %v546, %v244
    %v548 = vadd.f32 %v547, %v260
    %v549 = vadd.f32 %v548, %v276
    %v550 = vadd.f32 %v549, %v292
    %v551 = vrot.slane %v550, 4
    %v552 = vadd.f32 %v550, %v551
    %v553 = vrot.slane %v552, 2
    %v554 = vadd.f32 %v552, %v553
    %v555 = vrot.slane %v554, 1
    %v556 = vadd.f32 %v554, %v555
    %v557 = vadd.f32 %v181, %v197
    %v558 = vadd.f32 %v557, %v213
    %v559 = vadd.f32 %v558, %v229
    %v560 = vadd.f32 %v559, %v245
    %v561 = vadd.f32 %v560, %v261
    %v562 = vadd.f32 %v561, %v277
    %v563 = vadd.f32 %v562, %v293
    %v564 = vrot.slane %v563, 4
    %v565 = vadd.f32 %v563, %v564
    %v566 = vrot.slane %v565, 2
    %v567 = vadd.f32 %v565, %v566
    %v568 = vrot.slane %v567, 1
    %v569 = vadd.f32 %v567, %v568
    %v570 = vadd.f32 %v182, %v198
    %v571 = vadd.f32 %v570, %v214
    %v572 = vadd.f32 %v571, %v230
    %v573 = vadd.f32 %v572, %v246
    %v574 = vadd.f32 %v573, %v262
    %v575 = vadd.f32 %v574, %v278
    %v576 = vadd.f32 %v575, %v294
    %v577 = vrot.slane %v576, 4
    %v578 = vadd.f32 %v576, %v577
    %v579 = vrot.slane %v578, 2
    %v580 = vadd.f32 %v578, %v579
    %v581 = vrot.slane %v580, 1
    %v582 = vadd.f32 %v580, %v581
    %v583 = vadd.f32 %v183, %v199
    %v584 = vadd.f32 %v583, %v215
    %v585 = vadd.f32 %v584, %v231
    %v586 = vadd.f32 %v585, %v247
    %v587 = vadd.f32 %v586, %v263
    %v588 = vadd.f32 %v587, %v279
    %v589 = vadd.f32 %v588, %v295
    %v590 = vrot.slane %v589, 4
    %v591 = vadd.f32 %v589, %v590
    %v592 = vrot.slane %v591, 2
    %v593 = vadd.f32 %v591, %v592
    %v594 = vrot.slane %v593, 1
    %v595 = vadd.f32 %v593, %v594
    %v596 = vadd.f32 %v184, %v200
    %v597 = vadd.f32 %v596, %v216
    %v598 = vadd.f32 %v597, %v232
    %v599 = vadd.f32 %v598, %v248
    %v600 = vadd.f32 %v599, %v264
    %v601 = vadd.f32 %v600, %v280
    %v602 = vadd.f32 %v601, %v296
    %v603 = vrot.slane %v602, 4
    %v604 = vadd.f32 %v602, %v603
    %v605 = vrot.slane %v604, 2
    %v606 = vadd.f32 %v604, %v605
    %v607 = vrot.slane %v606, 1
    %v608 = vadd.f32 %v606, %v607
    %v609 = vadd.f32 %v185, %v201
    %v610 = vadd.f32 %v609, %v217
    %v611 = vadd.f32 %v610, %v233
    %v612 = vadd.f32 %v611, %v249
    %v613 = vadd.f32 %v612, %v265
    %v614 = vadd.f32 %v613, %v281
    %v615 = vadd.f32 %v614, %v297
    %v616 = vrot.slane %v615, 4
    %v617 = vadd.f32 %v615, %v616
    %v618 = vrot.slane %v617, 2
    %v619 = vadd.f32 %v617, %v618
    %v620 = vrot.slane %v619, 1
    %v621 = vadd.f32 %v619, %v620
    %v622 = vadd.f32 %v186, %v202
    %v623 = vadd.f32 %v622, %v218
    %v624 = vadd.f32 %v623, %v234
    %v625 = vadd.f32 %v624, %v250
    %v626 = vadd.f32 %v625, %v266
    %v627 = vadd.f32 %v626, %v282
    %v628 = vadd.f32 %v627, %v298
    %v629 = vrot.slane %v628, 4
    %v630 = vadd.f32 %v628, %v629
    %v631 = vrot.slane %v630, 2
    %v632 = vadd.f32 %v630, %v631
    %v633 = vrot.slane %v632, 1
    %v634 = vadd.f32 %v632, %v633
    %v635 = vadd.f32 %v299, %v315
    %v636 = vadd.f32 %v635, %v331
    %v637 = vadd.f32 %v636, %v347
    %v638 = vadd.f32 %v637, %v363
    %v639 = vadd.f32 %v638, %v379
    %v640 = vadd.f32 %v639, %v395
    %v641 = vadd.f32 %v640, %v411
    %v642 = vrot.slane %v641, 4
    %v643 = vadd.f32 %v641, %v642
    %v644 = vrot.slane %v643, 2
    %v645 = vadd.f32 %v643, %v644
    %v646 = vrot.slane %v645, 1
    %v647 = vadd.f32 %v645, %v646
    %v648 = vadd.f32 %v300, %v316
    %v649 = vadd.f32 %v648, %v332
    %v650 = vadd.f32 %v649, %v348
    %v651 = vadd.f32 %v650, %v364
    %v652 = vadd.f32 %v651, %v380
    %v653 = vadd.f32 %v652, %v396
    %v654 = vadd.f32 %v653, %v412
    %v655 = vrot.slane %v654, 4
    %v656 = vadd.f32 %v654, %v655
    %v657 = vrot.slane %v656, 2
    %v658 = vadd.f32 %v656, %v657
    %v659 = vrot.slane %v658, 1
    %v660 = vadd.f32 %v658, %v659
    %v661 = vadd.f32 %v301, %v317
    %v662 = vadd.f32 %v661, %v333
    %v663 = vadd.f32 %v662, %v349
    %v664 = vadd.f32 %v663, %v365
    %v665 = vadd.f32 %v664, %v381
    %v666 = vadd.f32 %v665, %v397
    %v667 = vadd.f32 %v666, %v413
    %v668 = vrot.slane %v667, 4
    %v669 = vadd.f32 %v667, %v668
    %v670 = vrot.slane %v669, 2
    %v671 = vadd.f32 %v669, %v670
    %v672 = vrot.slane %v671, 1
    %v673 = vadd.f32 %v671, %v672
    %v674 = vadd.f32 %v302, %v318
    %v675 = vadd.f32 %v674, %v334
    %v676 = vadd.f32 %v675, %v350
    %v677 = vadd.f32 %v676, %v366
    %v678 = vadd.f32 %v677, %v382
    %v679 = vadd.f32 %v678, %v398
    %v680 = vadd.f32 %v679, %v414
    %v681 = vrot.slane %v680, 4
    %v682 = vadd.f32 %v680, %v681
    %v683 = vrot.slane %v682, 2
    %v684 = vadd.f32 %v682, %v683
    %v685 = vrot.slane %v684, 1
    %v686 = vadd.f32 %v684, %v685
    %v687 = vadd.f32 %v303, %v319
    %v688 = vadd.f32 %v687, %v335
    %v689 = vadd.f32 %v688, %v351
    %v690 = vadd.f32 %v689, %v367
    %v691 = vadd.f32 %v690, %v383
    %v692 = vadd.f32 %v691, %v399
    %v693 = vadd.f32 %v692, %v415
    %v694 = vrot.slane %v693, 4
    %v695 = vadd.f32 %v693, %v694
    %v696 = vrot.slane %v695, 2
    %v697 = vadd.f32 %v695, %v696
    %v698 = vrot.slane %v697, 1
    %v699 = vadd.f32 %v697, %v698
    %v700 = vadd.f32 %v304, %v320
    %v701 = vadd.f32 %v700, %v336
    %v702 = vadd.f32 %v701, %v352
    %v703 = vadd.f32 %v702, %v368
    %v704 = vadd.f32 %v703, %v384
    %v705 = vadd.f32 %v704, %v400
    %v706 = vadd.f32 %v705, %v416
    %v707 = vrot.slane %v706, 4
    %v708 = vadd.f32 %v706, %v707
    %v709 = vrot.slane %v708, 2
    %v710 = vadd.f32 %v708, %v709
    %v711 = vrot.slane %v710, 1
    %v712 = vadd.f32 %v710, %v711
    %v713 = vadd.f32 %v305, %v321
    %v714 = vadd.f32 %v713, %v337
    %v715 = vadd.f32 %v714, %v353
    %v716 = vadd.f32 %v715, %v369
    %v717 = vadd.f32 %v716, %v385
    %v718 = vadd.f32 %v717, %v401
    %v719 = vadd.f32 %v718, %v417
    %v720 = vrot.slane %v719, 4
    %v721 = vadd.f32 %v719, %v720
    %v722 = vrot.slane %v721, 2
    %v723 = vadd.f32 %v721, %v722
    %v724 = vrot.slane %v723, 1
    %v725 = vadd.f32 %v723, %v724
    %v726 = vadd.f32 %v306, %v322
    %v727 = vadd.f32 %v726, %v338
    %v728 = vadd.f32 %v727, %v354
    %v729 = vadd.f32 %v728, %v370
    %v730 = vadd.f32 %v729, %v386
    %v731 = vadd.f32 %v730, %v402
    %v732 = vadd.f32 %v731, %v418
    %v733 = vrot.slane %v732, 4
    %v734 = vadd.f32 %v732, %v733
    %v735 = vrot.slane %v734, 2
    %v736 = vadd.f32 %v734, %v735
    %v737 = vrot.slane %v736, 1
    %v738 = vadd.f32 %v736, %v737
    %v739 = vadd.f32 %v307, %v323
    %v740 = vadd.f32 %v739, %v339
    %v741 = vadd.f32 %v740, %v355
    %v742 = vadd.f32 %v741, %v371
    %v743 = vadd.f32 %v742, %v387
    %v744 = vadd.f32 %v743, %v403
    %v745 = vadd.f32 %v744, %v419
    %v746 = vrot.slane %v745, 4
    %v747 = vadd.f32 %v745, %v746
    %v748 = vrot.slane %v747, 2
    %v749 = vadd.f32 %v747, %v748
    %v750 = vrot.slane %v749, 1
    %v751 = vadd.f32 %v749, %v750
    %v752 = vadd.f32 %v308, %v324
    %v753 = vadd.f32 %v752, %v340
    %v754 = vadd.f32 %v753, %v356
    %v755 = vadd.f32 %v754, %v372
    %v756 = vadd.f32 %v755, %v388
    %v757 = vadd.f32 %v756, %v404
    %v758 = vadd.f32 %v757, %v420
    %v759 = vrot.slane %v758, 4
    %v760 = vadd.f32 %v758, %v759
    %v761 = vrot.slane %v760, 2
    %v762 = vadd.f32 %v760, %v761
    %v763 = vrot.slane %v762, 1
    %v764 = vadd.f32 %v762, %v763
    %v765 = vadd.f32 %v309, %v325
    %v766 = vadd.f32 %v765, %v341
    %v767 = vadd.f32 %v766, %v357
    %v768 = vadd.f32 %v767, %v373
    %v769 = vadd.f32 %v768, %v389
    %v770 = vadd.f32 %v769, %v405
    %v771 = vadd.f32 %v770, %v421
    %v772 = vrot.slane %v771, 4
    %v773 = vadd.f32 %v771, %v772
    %v774 = vrot.slane %v773, 2
    %v775 = vadd.f32 %v773, %v774
    %v776 = vrot.slane %v775, 1
    %v777 = vadd.f32 %v775, %v776
    %v778 = vadd.f32 %v310, %v326
    %v779 = vadd.f32 %v778, %v342
    %v780 = vadd.f32 %v779, %v358
    %v781 = vadd.f32 %v780, %v374
    %v782 = vadd.f32 %v781, %v390
    %v783 = vadd.f32 %v782, %v406
    %v784 = vadd.f32 %v783, %v422
    %v785 = vrot.slane %v784, 4
    %v786 = vadd.f32 %v784, %v785
    %v787 = vrot.slane %v786, 2
    %v788 = vadd.f32 %v786, %v787
    %v789 = vrot.slane %v788, 1
    %v790 = vadd.f32 %v788, %v789
    %v791 = vadd.f32 %v311, %v327
    %v792 = vadd.f32 %v791, %v343
    %v793 = vadd.f32 %v792, %v359
    %v794 = vadd.f32 %v793, %v375
    %v795 = vadd.f32 %v794, %v391
    %v796 = vadd.f32 %v795, %v407
    %v797 = vadd.f32 %v796, %v423
    %v798 = vrot.slane %v797, 4
    %v799 = vadd.f32 %v797, %v798
    %v800 = vrot.slane %v799, 2
    %v801 = vadd.f32 %v799, %v800
    %v802 = vrot.slane %v801, 1
    %v803 = vadd.f32 %v801, %v802
    %v804 = vadd.f32 %v312, %v328
    %v805 = vadd.f32 %v804, %v344
    %v806 = vadd.f32 %v805, %v360
    %v807 = vadd.f32 %v806, %v376
    %v808 = vadd.f32 %v807, %v392
    %v809 = vadd.f32 %v808, %v408
    %v810 = vadd.f32 %v809, %v424
    %v811 = vrot.slane %v810, 4
    %v812 = vadd.f32 %v810, %v811
    %v813 = vrot.slane %v812, 2
    %v814 = vadd.f32 %v812, %v813
    %v815 = vrot.slane %v814, 1
    %v816 = vadd.f32 %v814, %v815
    %v817 = vadd.f32 %v313, %v329
    %v818 = vadd.f32 %v817, %v345
    %v819 = vadd.f32 %v818, %v361
    %v820 = vadd.f32 %v819, %v377
    %v821 = vadd.f32 %v820, %v393
    %v822 = vadd.f32 %v821, %v409
    %v823 = vadd.f32 %v822, %v425
    %v824 = vrot.slane %v823, 4
    %v825 = vadd.f32 %v823, %v824
    %v826 = vrot.slane %v825, 2
    %v827 = vadd.f32 %v825, %v826
    %v828 = vrot.slane %v827, 1
    %v829 = vadd.f32 %v827, %v828
    %v830 = vadd.f32 %v314, %v330
    %v831 = vadd.f32 %v830, %v346
    %v832 = vadd.f32 %v831, %v362
    %v833 = vadd.f32 %v832, %v378
    %v834 = vadd.f32 %v833, %v394
    %v835 = vadd.f32 %v834, %v410
    %v836 = vadd.f32 %v835, %v426
    %v837 = vrot.slane %v836, 4
    %v838 = vadd.f32 %v836, %v837
    %v839 = vrot.slane %v838, 2
    %v840 = vadd.f32 %v838, %v839
    %v841 = vrot.slane %v840, 1
    %v842 = vadd.f32 %v840, %v841
    %v843 = vld [vmem:[#allocation5] sm:$0xff]
    %v844 = vld [vmem:[#allocation5 + $0x8] sm:$0xff]
    %v845 = vld [vmem:[#allocation5 + $0x10] sm:$0xff]
    %v846 = vld [vmem:[#allocation5 + $0x18] sm:$0xff]
    %v847 = vld [vmem:[#allocation5 + $0x20] sm:$0xff]
    %v848 = vld [vmem:[#allocation5 + $0x28] sm:$0xff]
    %v849 = vld [vmem:[#allocation5 + $0x30] sm:$0xff]
    %v850 = vld [vmem:[#allocation5 + $0x38] sm:$0xff]
    %v851 = vld [vmem:[#allocation5 + $0x40] sm:$0xff]
    %v852 = vld [vmem:[#allocation5 + $0x48] sm:$0xff]
    %v853 = vld [vmem:[#allocation5 + $0x50] sm:$0xff]
    %v854 = vld [vmem:[#allocation5 + $0x58] sm:$0xff]
    %v855 = vld [vmem:[#allocation5 + $0x60] sm:$0xff]
    %v856 = vld [vmem:[#allocation5 + $0x68] sm:$0xff]
    %v857 = vld [vmem:[#allocation5 + $0x70] sm:$0xff]
    %v858 = vld [vmem:[#allocation5 + $0x78] sm:$0xff]
    %v859 = vld [vmem:[#allocation5 + $0x80] sm:$0xff]
    %v860 = vld [vmem:[#allocation5 + $0x88] sm:$0xff]
    %v861 = vld [vmem:[#allocation5 + $0x90] sm:$0xff]
    %v862 = vld [vmem:[#allocation5 + $0x98] sm:$0xff]
    %v863 = vld [vmem:[#allocation5 + $0xa0] sm:$0xff]
    %v864 = vld [vmem:[#allocation5 + $0xa8] sm:$0xff]
    %v865 = vld [vmem:[#allocation5 + $0xb0] sm:$0xff]
    %v866 = vld [vmem:[#allocation5 + $0xb8] sm:$0xff]
    %v867 = vld [vmem:[#allocation5 + $0xc0] sm:$0xff]
    %v868 = vld [vmem:[#allocation5 + $0xc8] sm:$0xff]
    %v869 = vld [vmem:[#allocation5 + $0xd0] sm:$0xff]
    %v870 = vld [vmem:[#allocation5 + $0xd8] sm:$0xff]
    %v871 = vld [vmem:[#allocation5 + $0xe0] sm:$0xff]
    %v872 = vld [vmem:[#allocation5 + $0xe8] sm:$0xff]
    %v873 = vld [vmem:[#allocation5 + $0xf0] sm:$0xff]
    %v874 = vld [vmem:[#allocation5 + $0xf8] sm:$0xff]
    %v875 = vld [vmem:[#allocation5 + $0x100] sm:$0xff]
    %v876 = vld [vmem:[#allocation5 + $0x108] sm:$0xff]
    %v877 = vld [vmem:[#allocation5 + $0x110] sm:$0xff]
    %v878 = vld [vmem:[#allocation5 + $0x118] sm:$0xff]
    %v879 = vld [vmem:[#allocation5 + $0x120] sm:$0xff]
    %v880 = vld [vmem:[#allocation5 + $0x128] sm:$0xff]
    %v881 = vld [vmem:[#allocation5 + $0x130] sm:$0xff]
    %v882 = vld [vmem:[#allocation5 + $0x138] sm:$0xff]
    %v883 = vld [vmem:[#allocation5 + $0x140] sm:$0xff]
    %v884 = vld [vmem:[#allocation5 + $0x148] sm:$0xff]
    %v885 = vld [vmem:[#allocation5 + $0x150] sm:$0xff]
    %v886 = vld [vmem:[#allocation5 + $0x158] sm:$0xff]
    %v887 = vld [vmem:[#allocation5 + $0x160] sm:$0xff]
    %v888 = vld [vmem:[#allocation5 + $0x168] sm:$0xff]
    %v889 = vld [vmem:[#allocation5 + $0x170] sm:$0xff]
    %v890 = vld [vmem:[#allocation5 + $0x178] sm:$0xff]
    %v891 = vld [vmem:[#allocation5 + $0x180] sm:$0xff]
    %v892 = vld [vmem:[#allocation5 + $0x188] sm:$0xff]
    %v893 = vld [vmem:[#allocation5 + $0x190] sm:$0xff]
    %v894 = vld [vmem:[#allocation5 + $0x198] sm:$0xff]
    %v895 = vld [vmem:[#allocation5 + $0x1a0] sm:$0xff]
    %v896 = vld [vmem:[#allocation5 + $0x1a8] sm:$0xff]
    %v897 = vld [vmem:[#allocation5 + $0x1b0] sm:$0xff]
    %v898 = vld [vmem:[#allocation5 + $0x1b8] sm:$0xff]
    %v899 = vld [vmem:[#allocation5 + $0x1c0] sm:$0xff]
    %v900 = vld [vmem:[#allocation5 + $0x1c8] sm:$0xff]
    %v901 = vld [vmem:[#allocation5 + $0x1d0] sm:$0xff]
    %v902 = vld [vmem:[#allocation5 + $0x1d8] sm:$0xff]
    %v903 = vld [vmem:[#allocation5 + $0x1e0] sm:$0xff]
    %v904 = vld [vmem:[#allocation5 + $0x1e8] sm:$0xff]
    %v905 = vld [vmem:[#allocation5 + $0x1f0] sm:$0xff]
    %v906 = vld [vmem:[#allocation5 + $0x1f8] sm:$0xff]
    %v907 = vld [vmem:[#allocation5 + $0x200] sm:$0xff]
    %v908 = vld [vmem:[#allocation5 + $0x208] sm:$0xff]
    %v909 = vld [vmem:[#allocation5 + $0x210] sm:$0xff]
    %v910 = vld [vmem:[#allocation5 + $0x218] sm:$0xff]
    %v911 = vld [vmem:[#allocation5 + $0x220] sm:$0xff]
    %v912 = vld [vmem:[#allocation5 + $0x228] sm:$0xff]
    %v913 = vld [vmem:[#allocation5 + $0x230] sm:$0xff]
    %v914 = vld [vmem:[#allocation5 + $0x238] sm:$0xff]
    %v915 = vld [vmem:[#allocation5 + $0x240] sm:$0xff]
    %v916 = vld [vmem:[#allocation5 + $0x248] sm:$0xff]
    %v917 = vld [vmem:[#allocation5 + $0x250] sm:$0xff]
    %v918 = vld [vmem:[#allocation5 + $0x258] sm:$0xff]
    %v919 = vld [vmem:[#allocation5 + $0x260] sm:$0xff]
    %v920 = vld [vmem:[#allocation5 + $0x268] sm:$0xff]
    %v921 = vld [vmem:[#allocation5 + $0x270] sm:$0xff]
    %v922 = vld [vmem:[#allocation5 + $0x278] sm:$0xff]
    %v923 = vld [vmem:[#allocation5 + $0x280] sm:$0xff]
    %v924 = vld [vmem:[#allocation5 + $0x288] sm:$0xff]
    %v925 = vld [vmem:[#allocation5 + $0x290] sm:$0xff]
    %v926 = vld [vmem:[#allocation5 + $0x298] sm:$0xff]
    %v927 = vld [vmem:[#allocation5 + $0x2a0] sm:$0xff]
    %v928 = vld [vmem:[#allocation5 + $0x2a8] sm:$0xff]
    %v929 = vld [vmem:[#allocation5 + $0x2b0] sm:$0xff]
    %v930 = vld [vmem:[#allocation5 + $0x2b8] sm:$0xff]
    %v931 = vld [vmem:[#allocation5 + $0x2c0] sm:$0xff]
    %v932 = vld [vmem:[#allocation5 + $0x2c8] sm:$0xff]
    %v933 = vld [vmem:[#allocation5 + $0x2d0] sm:$0xff]
    %v934 = vld [vmem:[#allocation5 + $0x2d8] sm:$0xff]
    %v935 = vld [vmem:[#allocation5 + $0x2e0] sm:$0xff]
    %v936 = vld [vmem:[#allocation5 + $0x2e8] sm:$0xff]
    %v937 = vld [vmem:[#allocation5 + $0x2f0] sm:$0xff]
    %v938 = vld [vmem:[#allocation5 + $0x2f8] sm:$0xff]
    %v939 = vld [vmem:[#allocation5 + $0x300] sm:$0xff]
    %v940 = vld [vmem:[#allocation5 + $0x308] sm:$0xff]
    %v941 = vld [vmem:[#allocation5 + $0x310] sm:$0xff]
    %v942 = vld [vmem:[#allocation5 + $0x318] sm:$0xff]
    %v943 = vld [vmem:[#allocation5 + $0x320] sm:$0xff]
    %v944 = vld [vmem:[#allocation5 + $0x328] sm:$0xff]
    %v945 = vld [vmem:[#allocation5 + $0x330] sm:$0xff]
    %v946 = vld [vmem:[#allocation5 + $0x338] sm:$0xff]
    %v947 = vld [vmem:[#allocation5 + $0x340] sm:$0xff]
    %v948 = vld [vmem:[#allocation5 + $0x348] sm:$0xff]
    %v949 = vld [vmem:[#allocation5 + $0x350] sm:$0xff]
    %v950 = vld [vmem:[#allocation5 + $0x358] sm:$0xff]
    %v951 = vld [vmem:[#allocation5 + $0x360] sm:$0xff]
    %v952 = vld [vmem:[#allocation5 + $0x368] sm:$0xff]
    %v953 = vld [vmem:[#allocation5 + $0x370] sm:$0xff]
    %v954 = vld [vmem:[#allocation5 + $0x378] sm:$0xff]
    %v955 = vld [vmem:[#allocation5 + $0x380] sm:$0xff]
    %v956 = vld [vmem:[#allocation5 + $0x388] sm:$0xff]
    %v957 = vld [vmem:[#allocation5 + $0x390] sm:$0xff]
    %v958 = vld [vmem:[#allocation5 + $0x398] sm:$0xff]
    %v959 = vld [vmem:[#allocation5 + $0x3a0] sm:$0xff]
    %v960 = vld [vmem:[#allocation5 + $0x3a8] sm:$0xff]
    %v961 = vld [vmem:[#allocation5 + $0x3b0] sm:$0xff]
    %v962 = vld [vmem:[#allocation5 + $0x3b8] sm:$0xff]
    %v963 = vld [vmem:[#allocation5 + $0x3c0] sm:$0xff]
    %v964 = vld [vmem:[#allocation5 + $0x3c8] sm:$0xff]
    %v965 = vld [vmem:[#allocation5 + $0x3d0] sm:$0xff]
    %v966 = vld [vmem:[#allocation5 + $0x3d8] sm:$0xff]
    %v967 = vld [vmem:[#allocation5 + $0x3e0] sm:$0xff]
    %v968 = vld [vmem:[#allocation5 + $0x3e8] sm:$0xff]
    %v969 = vld [vmem:[#allocation5 + $0x3f0] sm:$0xff]
    %v970 = vld [vmem:[#allocation5 + $0x3f8] sm:$0xff]
    %v971 = vld [vmem:[#allocation5 + $0x400] sm:$0xff]
    %v972 = vld [vmem:[#allocation5 + $0x408] sm:$0xff]
    %v973 = vld [vmem:[#allocation5 + $0x410] sm:$0xff]
    %v974 = vld [vmem:[#allocation5 + $0x418] sm:$0xff]
    %v975 = vld [vmem:[#allocation5 + $0x420] sm:$0xff]
    %v976 = vld [vmem:[#allocation5 + $0x428] sm:$0xff]
    %v977 = vld [vmem:[#allocation5 + $0x430] sm:$0xff]
    %v978 = vld [vmem:[#allocation5 + $0x438] sm:$0xff]
    %v979 = vld [vmem:[#allocation5 + $0x440] sm:$0xff]
    %v980 = vld [vmem:[#allocation5 + $0x448] sm:$0xff]
    %v981 = vld [vmem:[#allocation5 + $0x450] sm:$0xff]
    %v982 = vld [vmem:[#allocation5 + $0x458] sm:$0xff]
    %v983 = vld [vmem:[#allocation5 + $0x460] sm:$0xff]
    %v984 = vld [vmem:[#allocation5 + $0x468] sm:$0xff]
    %v985 = vld [vmem:[#allocation5 + $0x470] sm:$0xff]
    %v986 = vld [vmem:[#allocation5 + $0x478] sm:$0xff]
    %v987 = vld [vmem:[#allocation5 + $0x480] sm:$0xff]
    %v988 = vld [vmem:[#allocation5 + $0x488] sm:$0xff]
    %v989 = vld [vmem:[#allocation5 + $0x490] sm:$0xff]
    %v990 = vld [vmem:[#allocation5 + $0x498] sm:$0xff]
    %v991 = vld [vmem:[#allocation5 + $0x4a0] sm:$0xff]
    %v992 = vld [vmem:[#allocation5 + $0x4a8] sm:$0xff]
    %v993 = vld [vmem:[#allocation5 + $0x4b0] sm:$0xff]
    %v994 = vld [vmem:[#allocation5 + $0x4b8] sm:$0xff]
    %v995 = vld [vmem:[#allocation5 + $0x4c0] sm:$0xff]
    %v996 = vld [vmem:[#allocation5 + $0x4c8] sm:$0xff]
    %v997 = vld [vmem:[#allocation5 + $0x4d0] sm:$0xff]
    %v998 = vld [vmem:[#allocation5 + $0x4d8] sm:$0xff]
    %v999 = vld [vmem:[#allocation5 + $0x4e0] sm:$0xff]
    %v1000 = vld [vmem:[#allocation5 + $0x4e8] sm:$0xff]
    %v1001 = vld [vmem:[#allocation5 + $0x4f0] sm:$0xff]
    %v1002 = vld [vmem:[#allocation5 + $0x4f8] sm:$0xff]
    %v1003 = vld [vmem:[#allocation5 + $0x500] sm:$0xff]
    %v1004 = vld [vmem:[#allocation5 + $0x508] sm:$0xff]
    %v1005 = vld [vmem:[#allocation5 + $0x510] sm:$0xff]
    %v1006 = vld [vmem:[#allocation5 + $0x518] sm:$0xff]
    %v1007 = vld [vmem:[#allocation5 + $0x520] sm:$0xff]
    %v1008 = vld [vmem:[#allocation5 + $0x528] sm:$0xff]
    %v1009 = vld [vmem:[#allocation5 + $0x530] sm:$0xff]
    %v1010 = vld [vmem:[#allocation5 + $0x538] sm:$0xff]
    %v1011 = vld [vmem:[#allocation5 + $0x540] sm:$0xff]
    %v1012 = vld [vmem:[#allocation5 + $0x548] sm:$0xff]
    %v1013 = vld [vmem:[#allocation5 + $0x550] sm:$0xff]
    %v1014 = vld [vmem:[#allocation5 + $0x558] sm:$0xff]
    %v1015 = vld [vmem:[#allocation5 + $0x560] sm:$0xff]
    %v1016 = vld [vmem:[#allocation5 + $0x568] sm:$0xff]
    %v1017 = vld [vmem:[#allocation5 + $0x570] sm:$0xff]
    %v1018 = vld [vmem:[#allocation5 + $0x578] sm:$0xff]
    %v1019 = vld [vmem:[#allocation5 + $0x580] sm:$0xff]
    %v1020 = vld [vmem:[#allocation5 + $0x588] sm:$0xff]
    %v1021 = vld [vmem:[#allocation5 + $0x590] sm:$0xff]
    %v1022 = vld [vmem:[#allocation5 + $0x598] sm:$0xff]
    %v1023 = vld [vmem:[#allocation5 + $0x5a0] sm:$0xff]
    %v1024 = vld [vmem:[#allocation5 + $0x5a8] sm:$0xff]
    %v1025 = vld [vmem:[#allocation5 + $0x5b0] sm:$0xff]
    %v1026 = vld [vmem:[#allocation5 + $0x5b8] sm:$0xff]
    %v1027 = vld [vmem:[#allocation5 + $0x5c0] sm:$0xff]
    %v1028 = vld [vmem:[#allocation5 + $0x5c8] sm:$0xff]
    %v1029 = vld [vmem:[#allocation5 + $0x5d0] sm:$0xff]
    %v1030 = vld [vmem:[#allocation5 + $0x5d8] sm:$0xff]
    %v1031 = vld [vmem:[#allocation5 + $0x5e0] sm:$0xff]
    %v1032 = vld [vmem:[#allocation5 + $0x5e8] sm:$0xff]
    %v1033 = vld [vmem:[#allocation5 + $0x5f0] sm:$0xff]
    %v1034 = vld [vmem:[#allocation5 + $0x5f8] sm:$0xff]
    %v1035 = vld [vmem:[#allocation5 + $0x600] sm:$0xff]
    %v1036 = vld [vmem:[#allocation5 + $0x608] sm:$0xff]
    %v1037 = vld [vmem:[#allocation5 + $0x610] sm:$0xff]
    %v1038 = vld [vmem:[#allocation5 + $0x618] sm:$0xff]
    %v1039 = vld [vmem:[#allocation5 + $0x620] sm:$0xff]
    %v1040 = vld [vmem:[#allocation5 + $0x628] sm:$0xff]
    %v1041 = vld [vmem:[#allocation5 + $0x630] sm:$0xff]
    %v1042 = vld [vmem:[#allocation5 + $0x638] sm:$0xff]
    %v1043 = vld [vmem:[#allocation5 + $0x640] sm:$0xff]
    %v1044 = vld [vmem:[#allocation5 + $0x648] sm:$0xff]
    %v1045 = vld [vmem:[#allocation5 + $0x650] sm:$0xff]
    %v1046 = vld [vmem:[#allocation5 + $0x658] sm:$0xff]
    %v1047 = vld [vmem:[#allocation5 + $0x660] sm:$0xff]
    %v1048 = vld [vmem:[#allocation5 + $0x668] sm:$0xff]
    %v1049 = vld [vmem:[#allocation5 + $0x670] sm:$0xff]
    %v1050 = vld [vmem:[#allocation5 + $0x678] sm:$0xff]
    %v1051 = vld [vmem:[#allocation5 + $0x680] sm:$0xff]
    %v1052 = vld [vmem:[#allocation5 + $0x688] sm:$0xff]
    %v1053 = vld [vmem:[#allocation5 + $0x690] sm:$0xff]
    %v1054 = vld [vmem:[#allocation5 + $0x698] sm:$0xff]
    %v1055 = vld [vmem:[#allocation5 + $0x6a0] sm:$0xff]
    %v1056 = vld [vmem:[#allocation5 + $0x6a8] sm:$0xff]
    %v1057 = vld [vmem:[#allocation5 + $0x6b0] sm:$0xff]
    %v1058 = vld [vmem:[#allocation5 + $0x6b8] sm:$0xff]
    %v1059 = vld [vmem:[#allocation5 + $0x6c0] sm:$0xff]
    %v1060 = vld [vmem:[#allocation5 + $0x6c8] sm:$0xff]
    %v1061 = vld [vmem:[#allocation5 + $0x6d0] sm:$0xff]
    %v1062 = vld [vmem:[#allocation5 + $0x6d8] sm:$0xff]
    %v1063 = vld [vmem:[#allocation5 + $0x6e0] sm:$0xff]
    %v1064 = vld [vmem:[#allocation5 + $0x6e8] sm:$0xff]
    %v1065 = vld [vmem:[#allocation5 + $0x6f0] sm:$0xff]
    %v1066 = vld [vmem:[#allocation5 + $0x6f8] sm:$0xff]
    %v1067 = vld [vmem:[#allocation5 + $0x700] sm:$0xff]
    %v1068 = vld [vmem:[#allocation5 + $0x708] sm:$0xff]
    %v1069 = vld [vmem:[#allocation5 + $0x710] sm:$0xff]
    %v1070 = vld [vmem:[#allocation5 + $0x718] sm:$0xff]
    %v1071 = vld [vmem:[#allocation5 + $0x720] sm:$0xff]
    %v1072 = vld [vmem:[#allocation5 + $0x728] sm:$0xff]
    %v1073 = vld [vmem:[#allocation5 + $0x730] sm:$0xff]
    %v1074 = vld [vmem:[#allocation5 + $0x738] sm:$0xff]
    %v1075 = vld [vmem:[#allocation5 + $0x740] sm:$0xff]
    %v1076 = vld [vmem:[#allocation5 + $0x748] sm:$0xff]
    %v1077 = vld [vmem:[#allocation5 + $0x750] sm:$0xff]
    %v1078 = vld [vmem:[#allocation5 + $0x758] sm:$0xff]
    %v1079 = vld [vmem:[#allocation5 + $0x760] sm:$0xff]
    %v1080 = vld [vmem:[#allocation5 + $0x768] sm:$0xff]
    %v1081 = vld [vmem:[#allocation5 + $0x770] sm:$0xff]
    %v1082 = vld [vmem:[#allocation5 + $0x778] sm:$0xff]
    %v1083 = vld [vmem:[#allocation5 + $0x780] sm:$0xff]
    %v1084 = vld [vmem:[#allocation5 + $0x788] sm:$0xff]
    %v1085 = vld [vmem:[#allocation5 + $0x790] sm:$0xff]
    %v1086 = vld [vmem:[#allocation5 + $0x798] sm:$0xff]
    %v1087 = vld [vmem:[#allocation5 + $0x7a0] sm:$0xff]
    %v1088 = vld [vmem:[#allocation5 + $0x7a8] sm:$0xff]
    %v1089 = vld [vmem:[#allocation5 + $0x7b0] sm:$0xff]
    %v1090 = vld [vmem:[#allocation5 + $0x7b8] sm:$0xff]
    %v1091 = vld [vmem:[#allocation5 + $0x7c0] sm:$0xff]
    %v1092 = vld [vmem:[#allocation5 + $0x7c8] sm:$0xff]
    %v1093 = vld [vmem:[#allocation5 + $0x7d0] sm:$0xff]
    %v1094 = vld [vmem:[#allocation5 + $0x7d8] sm:$0xff]
    %v1095 = vld [vmem:[#allocation5 + $0x7e0] sm:$0xff]
    %v1096 = vld [vmem:[#allocation5 + $0x7e8] sm:$0xff]
    %v1097 = vld [vmem:[#allocation5 + $0x7f0] sm:$0xff]
    %v1098 = vld [vmem:[#allocation5 + $0x7f8] sm:$0xff]
    %v1099 = vld [vmem:[%s2] sm:$0x1]
    %v1101 = vlaneseq
    %v1102 = vshrl.u32 %v1101, 7
    %v1103 = vsub.s32 0, %v1102
    %v1104 = vrot.slane %v1099, %v1103
    %vm1138 = vcmask 1041409
    %v1139 = vsel %vm1138, %v647, %v439
    %v1140 = vsel %vm1138, %v660, %v452
    %v1141 = vsel %vm1138, %v673, %v465
    %v1142 = vsel %vm1138, %v686, %v478
    %v1143 = vsel %vm1138, %v699, %v491
    %v1144 = vsel %vm1138, %v712, %v504
    %v1145 = vsel %vm1138, %v725, %v517
    %v1146 = vsel %vm1138, %v738, %v530
    %v1147 = vsel %vm1138, %v751, %v543
    %v1148 = vsel %vm1138, %v764, %v556
    %v1149 = vsel %vm1138, %v777, %v569
    %v1150 = vsel %vm1138, %v790, %v582
    %v1151 = vsel %vm1138, %v803, %v595
    %v1152 = vsel %vm1138, %v816, %v608
    %v1153 = vsel %vm1138, %v829, %v621
    %v1154 = vsel %vm1138, %v842, %v634
    %1171 = vmatprep.subr.mxu0 0.0
    %1172 = vmatpush1.msra.mxu0 %v843
    %1173 = vmatprep.subr.mxu0 0.0
    %1174 = vmatpush1.msra.mxu0 %v844
    %1175 = vmatprep.subr.mxu0 0.0
    %1176 = vmatpush1.msra.mxu0 %v845
    %1177 = vmatprep.subr.mxu0 0.0
    %1178 = vmatpush1.msra.mxu0 %v846
    %1179 = vmatprep.subr.mxu0 0.0
    %1180 = vmatpush1.msra.mxu0 %v847
    %1181 = vmatprep.subr.mxu0 0.0
    %1182 = vmatpush1.msra.mxu0 %v848
    %1183 = vmatprep.subr.mxu0 0.0
    %1184 = vmatpush1.msra.mxu0 %v849
    %1185 = vmatprep.subr.mxu0 0.0
    %1186 = vmatpush1.msra.mxu0 %v850
    %1187 = vmatprep.subr.mxu0 0.0
    %1188 = vmatpush1.msra.mxu0 %v851
    %1189 = vmatprep.subr.mxu0 0.0
    %1190 = vmatpush1.msra.mxu0 %v852
    %1191 = vmatprep.subr.mxu0 0.0
    %1192 = vmatpush1.msra.mxu0 %v853
    %1193 = vmatprep.subr.mxu0 0.0
    %1194 = vmatpush1.msra.mxu0 %v854
    %1195 = vmatprep.subr.mxu0 0.0
    %1196 = vmatpush1.msra.mxu0 %v855
    %1197 = vmatprep.subr.mxu0 0.0
    %1198 = vmatpush1.msra.mxu0 %v856
    %1199 = vmatprep.subr.mxu0 0.0
    %1200 = vmatpush1.msra.mxu0 %v857
    %1201 = vmatprep.subr.mxu0 0.0
    %1202 = vmatpush1.msra.mxu0 %v858
    %1203 = vmatprep.subr.mxu0 0.0
    %1204 = vmatpush1.msra.mxu0 %v859
    %1205 = vmatprep.subr.mxu0 0.0
    %1206 = vmatpush1.msra.mxu0 %v860
    %1207 = vmatprep.subr.mxu0 0.0
    %1208 = vmatpush1.msra.mxu0 %v861
    %1209 = vmatprep.subr.mxu0 0.0
    %1210 = vmatpush1.msra.mxu0 %v862
    %1211 = vmatprep.subr.mxu0 0.0
    %1212 = vmatpush1.msra.mxu0 %v863
    %1213 = vmatprep.subr.mxu0 0.0
    %1214 = vmatpush1.msra.mxu0 %v864
    %1215 = vmatprep.subr.mxu0 0.0
    %1216 = vmatpush1.msra.mxu0 %v865
    %1217 = vmatprep.subr.mxu0 0.0
    %1218 = vmatpush1.msra.mxu0 %v866
    %1219 = vmatprep.subr.mxu0 0.0
    %1220 = vmatpush1.msra.mxu0 %v867
    %1221 = vmatprep.subr.mxu0 0.0
    %1222 = vmatpush1.msra.mxu0 %v868
    %1223 = vmatprep.subr.mxu0 0.0
    %1224 = vmatpush1.msra.mxu0 %v869
    %1225 = vmatprep.subr.mxu0 0.0
    %1226 = vmatpush1.msra.mxu0 %v870
    %1227 = vmatprep.subr.mxu0 0.0
    %1228 = vmatpush1.msra.mxu0 %v871
    %1229 = vmatprep.subr.mxu0 0.0
    %1230 = vmatpush1.msra.mxu0 %v872
    %1231 = vmatprep.subr.mxu0 0.0
    %1232 = vmatpush1.msra.mxu0 %v873
    %1233 = vmatprep.subr.mxu0 0.0
    %1234 = vmatpush1.msra.mxu0 %v874
    %1235 = vmatprep.mubr.f32.mxu0 %v1140
    %1236 = vmatmul.mubr.f32.gmra.mrb[0].mxu0 %v1139
    %v1237 = vpop.f32.mrb[0].mxu0
    %v1238 = vadd.f32 %v1104, %v1237
    %v1239 = vpop.f32.mrb[0].mxu0
    %1240 = vdwg.mxu0
    %1241 = vmatprep.subr.mxu0 0.0
    %1242 = vmatpush1.msra.mxu0 %v875
    %1243 = vmatprep.subr.mxu0 0.0
    %1244 = vmatpush1.msra.mxu0 %v876
    %1245 = vmatprep.subr.mxu0 0.0
    %1246 = vmatpush1.msra.mxu0 %v877
    %1247 = vmatprep.subr.mxu0 0.0
    %1248 = vmatpush1.msra.mxu0 %v878
    %1249 = vmatprep.subr.mxu0 0.0
    %1250 = vmatpush1.msra.mxu0 %v879
    %1251 = vmatprep.subr.mxu0 0.0
    %1252 = vmatpush1.msra.mxu0 %v880
    %1253 = vmatprep.subr.mxu0 0.0
    %1254 = vmatpush1.msra.mxu0 %v881
    %1255 = vmatprep.subr.mxu0 0.0
    %1256 = vmatpush1.msra.mxu0 %v882
    %1257 = vmatprep.subr.mxu0 0.0
    %1258 = vmatpush1.msra.mxu0 %v883
    %1259 = vmatprep.subr.mxu0 0.0
    %1260 = vmatpush1.msra.mxu0 %v884
    %1261 = vmatprep.subr.mxu0 0.0
    %1262 = vmatpush1.msra.mxu0 %v885
    %1263 = vmatprep.subr.mxu0 0.0
    %1264 = vmatpush1.msra.mxu0 %v886
    %1265 = vmatprep.subr.mxu0 0.0
    %1266 = vmatpush1.msra.mxu0 %v887
    %1267 = vmatprep.subr.mxu0 0.0
    %1268 = vmatpush1.msra.mxu0 %v888
    %1269 = vmatprep.subr.mxu0 0.0
    %1270 = vmatpush1.msra.mxu0 %v889
    %1271 = vmatprep.subr.mxu0 0.0
    %1272 = vmatpush1.msra.mxu0 %v890
    %1273 = vmatprep.subr.mxu0 0.0
    %1274 = vmatpush1.msra.mxu0 %v891
    %1275 = vmatprep.subr.mxu0 0.0
    %1276 = vmatpush1.msra.mxu0 %v892
    %1277 = vmatprep.subr.mxu0 0.0
    %1278 = vmatpush1.msra.mxu0 %v893
    %1279 = vmatprep.subr.mxu0 0.0
    %1280 = vmatpush1.msra.mxu0 %v894
    %1281 = vmatprep.subr.mxu0 0.0
    %1282 = vmatpush1.msra.mxu0 %v895
    %1283 = vmatprep.subr.mxu0 0.0
    %1284 = vmatpush1.msra.mxu0 %v896
    %1285 = vmatprep.subr.mxu0 0.0
    %1286 = vmatpush1.msra.mxu0 %v897
    %1287 = vmatprep.subr.mxu0 0.0
    %1288 = vmatpush1.msra.mxu0 %v898
    %1289 = vmatprep.subr.mxu0 0.0
    %1290 = vmatpush1.msra.mxu0 %v899
    %1291 = vmatprep.subr.mxu0 0.0
    %1292 = vmatpush1.msra.mxu0 %v900
    %1293 = vmatprep.subr.mxu0 0.0
    %1294 = vmatpush1.msra.mxu0 %v901
    %1295 = vmatprep.subr.mxu0 0.0
    %1296 = vmatpush1.msra.mxu0 %v902
    %1297 = vmatprep.subr.mxu0 0.0
    %1298 = vmatpush1.msra.mxu0 %v903
    %1299 = vmatprep.subr.mxu0 0.0
    %1300 = vmatpush1.msra.mxu0 %v904
    %1301 = vmatprep.subr.mxu0 0.0
    %1302 = vmatpush1.msra.mxu0 %v905
    %1303 = vmatprep.subr.mxu0 0.0
    %1304 = vmatpush1.msra.mxu0 %v906
    %1305 = vmatprep.mubr.f32.mxu0 %v1142
    %1306 = vmatmul.mubr.f32.gmra.mrb[0].mxu0 %v1141
    %v1307 = vpop.f32.mrb[0].mxu0
    %v1308 = vadd.f32 %v1238, %v1307
    %v1309 = vpop.f32.mrb[0].mxu0
    %1310 = vdwg.mxu0
    %1311 = vmatprep.subr.mxu0 0.0
    %1312 = vmatpush1.msra.mxu0 %v907
    %1313 = vmatprep.subr.mxu0 0.0
    %1314 = vmatpush1.msra.mxu0 %v908
    %1315 = vmatprep.subr.mxu0 0.0
    %1316 = vmatpush1.msra.mxu0 %v909
    %1317 = vmatprep.subr.mxu0 0.0
    %1318 = vmatpush1.msra.mxu0 %v910
    %1319 = vmatprep.subr.mxu0 0.0
    %1320 = vmatpush1.msra.mxu0 %v911
    %1321 = vmatprep.subr.mxu0 0.0
    %1322 = vmatpush1.msra.mxu0 %v912
    %1323 = vmatprep.subr.mxu0 0.0
    %1324 = vmatpush1.msra.mxu0 %v913
    %1325 = vmatprep.subr.mxu0 0.0
    %1326 = vmatpush1.msra.mxu0 %v914
    %1327 = vmatprep.subr.mxu0 0.0
    %1328 = vmatpush1.msra.mxu0 %v915
    %1329 = vmatprep.subr.mxu0 0.0
    %1330 = vmatpush1.msra.mxu0 %v916
    %1331 = vmatprep.subr.mxu0 0.0
    %1332 = vmatpush1.msra.mxu0 %v917
    %1333 = vmatprep.subr.mxu0 0.0
    %1334 = vmatpush1.msra.mxu0 %v918
    %1335 = vmatprep.subr.mxu0 0.0
    %1336 = vmatpush1.msra.mxu0 %v919
    %1337 = vmatprep.subr.mxu0 0.0
    %1338 = vmatpush1.msra.mxu0 %v920
    %1339 = vmatprep.subr.mxu0 0.0
    %1340 = vmatpush1.msra.mxu0 %v921
    %1341 = vmatprep.subr.mxu0 0.0
    %1342 = vmatpush1.msra.mxu0 %v922
    %1343 = vmatprep.subr.mxu0 0.0
    %1344 = vmatpush1.msra.mxu0 %v923
    %1345 = vmatprep.subr.mxu0 0.0
    %1346 = vmatpush1.msra.mxu0 %v924
    %1347 = vmatprep.subr.mxu0 0.0
    %1348 = vmatpush1.msra.mxu0 %v925
    %1349 = vmatprep.subr.mxu0 0.0
    %1350 = vmatpush1.msra.mxu0 %v926
    %1351 = vmatprep.subr.mxu0 0.0
    %1352 = vmatpush1.msra.mxu0 %v927
    %1353 = vmatprep.subr.mxu0 0.0
    %1354 = vmatpush1.msra.mxu0 %v928
    %1355 = vmatprep.subr.mxu0 0.0
    %1356 = vmatpush1.msra.mxu0 %v929
    %1357 = vmatprep.subr.mxu0 0.0
    %1358 = vmatpush1.msra.mxu0 %v930
    %1359 = vmatprep.subr.mxu0 0.0
    %1360 = vmatpush1.msra.mxu0 %v931
    %1361 = vmatprep.subr.mxu0 0.0
    %1362 = vmatpush1.msra.mxu0 %v932
    %1363 = vmatprep.subr.mxu0 0.0
    %1364 = vmatpush1.msra.mxu0 %v933
    %1365 = vmatprep.subr.mxu0 0.0
    %1366 = vmatpush1.msra.mxu0 %v934
    %1367 = vmatprep.subr.mxu0 0.0
    %1368 = vmatpush1.msra.mxu0 %v935
    %1369 = vmatprep.subr.mxu0 0.0
    %1370 = vmatpush1.msra.mxu0 %v936
    %1371 = vmatprep.subr.mxu0 0.0
    %1372 = vmatpush1.msra.mxu0 %v937
    %1373 = vmatprep.subr.mxu0 0.0
    %1374 = vmatpush1.msra.mxu0 %v938
    %1375 = vmatprep.mubr.f32.mxu0 %v1144
    %1376 = vmatmul.mubr.f32.gmra.mrb[0].mxu0 %v1143
    %v1377 = vpop.f32.mrb[0].mxu0
    %v1378 = vadd.f32 %v1308, %v1377
    %v1379 = vpop.f32.mrb[0].mxu0
    %1380 = vdwg.mxu0
    %1381 = vmatprep.subr.mxu0 0.0
    %1382 = vmatpush1.msra.mxu0 %v939
    %1383 = vmatprep.subr.mxu0 0.0
    %1384 = vmatpush1.msra.mxu0 %v940
    %1385 = vmatprep.subr.mxu0 0.0
    %1386 = vmatpush1.msra.mxu0 %v941
    %1387 = vmatprep.subr.mxu0 0.0
    %1388 = vmatpush1.msra.mxu0 %v942
    %1389 = vmatprep.subr.mxu0 0.0
    %1390 = vmatpush1.msra.mxu0 %v943
    %1391 = vmatprep.subr.mxu0 0.0
    %1392 = vmatpush1.msra.mxu0 %v944
    %1393 = vmatprep.subr.mxu0 0.0
    %1394 = vmatpush1.msra.mxu0 %v945
    %1395 = vmatprep.subr.mxu0 0.0
    %1396 = vmatpush1.msra.mxu0 %v946
    %1397 = vmatprep.subr.mxu0 0.0
    %1398 = vmatpush1.msra.mxu0 %v947
    %1399 = vmatprep.subr.mxu0 0.0
    %1400 = vmatpush1.msra.mxu0 %v948
    %1401 = vmatprep.subr.mxu0 0.0
    %1402 = vmatpush1.msra.mxu0 %v949
    %1403 = vmatprep.subr.mxu0 0.0
    %1404 = vmatpush1.msra.mxu0 %v950
    %1405 = vmatprep.subr.mxu0 0.0
    %1406 = vmatpush1.msra.mxu0 %v951
    %1407 = vmatprep.subr.mxu0 0.0
    %1408 = vmatpush1.msra.mxu0 %v952
    %1409 = vmatprep.subr.mxu0 0.0
    %1410 = vmatpush1.msra.mxu0 %v953
    %1411 = vmatprep.subr.mxu0 0.0
    %1412 = vmatpush1.msra.mxu0 %v954
    %1413 = vmatprep.subr.mxu0 0.0
    %1414 = vmatpush1.msra.mxu0 %v955
    %1415 = vmatprep.subr.mxu0 0.0
    %1416 = vmatpush1.msra.mxu0 %v956
    %1417 = vmatprep.subr.mxu0 0.0
    %1418 = vmatpush1.msra.mxu0 %v957
    %1419 = vmatprep.subr.mxu0 0.0
    %1420 = vmatpush1.msra.mxu0 %v958
    %1421 = vmatprep.subr.mxu0 0.0
    %1422 = vmatpush1.msra.mxu0 %v959
    %1423 = vmatprep.subr.mxu0 0.0
    %1424 = vmatpush1.msra.mxu0 %v960
    %1425 = vmatprep.subr.mxu0 0.0
    %1426 = vmatpush1.msra.mxu0 %v961
    %1427 = vmatprep.subr.mxu0 0.0
    %1428 = vmatpush1.msra.mxu0 %v962
    %1429 = vmatprep.subr.mxu0 0.0
    %1430 = vmatpush1.msra.mxu0 %v963
    %1431 = vmatprep.subr.mxu0 0.0
    %1432 = vmatpush1.msra.mxu0 %v964
    %1433 = vmatprep.subr.mxu0 0.0
    %1434 = vmatpush1.msra.mxu0 %v965
    %1435 = vmatprep.subr.mxu0 0.0
    %1436 = vmatpush1.msra.mxu0 %v966
    %1437 = vmatprep.subr.mxu0 0.0
    %1438 = vmatpush1.msra.mxu0 %v967
    %1439 = vmatprep.subr.mxu0 0.0
    %1440 = vmatpush1.msra.mxu0 %v968
    %1441 = vmatprep.subr.mxu0 0.0
    %1442 = vmatpush1.msra.mxu0 %v969
    %1443 = vmatprep.subr.mxu0 0.0
    %1444 = vmatpush1.msra.mxu0 %v970
    %1445 = vmatprep.mubr.f32.mxu0 %v1146
    %1446 = vmatmul.mubr.f32.gmra.mrb[0].mxu0 %v1145
    %v1447 = vpop.f32.mrb[0].mxu0
    %v1448 = vadd.f32 %v1378, %v1447
    %v1449 = vpop.f32.mrb[0].mxu0
    %1450 = vdwg.mxu0
    %1451 = vmatprep.subr.mxu0 0.0
    %1452 = vmatpush1.msra.mxu0 %v971
    %1453 = vmatprep.subr.mxu0 0.0
    %1454 = vmatpush1.msra.mxu0 %v972
    %1455 = vmatprep.subr.mxu0 0.0
    %1456 = vmatpush1.msra.mxu0 %v973
    %1457 = vmatprep.subr.mxu0 0.0
    %1458 = vmatpush1.msra.mxu0 %v974
    %1459 = vmatprep.subr.mxu0 0.0
    %1460 = vmatpush1.msra.mxu0 %v975
    %1461 = vmatprep.subr.mxu0 0.0
    %1462 = vmatpush1.msra.mxu0 %v976
    %1463 = vmatprep.subr.mxu0 0.0
    %1464 = vmatpush1.msra.mxu0 %v977
    %1465 = vmatprep.subr.mxu0 0.0
    %1466 = vmatpush1.msra.mxu0 %v978
    %1467 = vmatprep.subr.mxu0 0.0
    %1468 = vmatpush1.msra.mxu0 %v979
    %1469 = vmatprep.subr.mxu0 0.0
    %1470 = vmatpush1.msra.mxu0 %v980
    %1471 = vmatprep.subr.mxu0 0.0
    %1472 = vmatpush1.msra.mxu0 %v981
    %1473 = vmatprep.subr.mxu0 0.0
    %1474 = vmatpush1.msra.mxu0 %v982
    %1475 = vmatprep.subr.mxu0 0.0
    %1476 = vmatpush1.msra.mxu0 %v983
    %1477 = vmatprep.subr.mxu0 0.0
    %1478 = vmatpush1.msra.mxu0 %v984
    %1479 = vmatprep.subr.mxu0 0.0
    %1480 = vmatpush1.msra.mxu0 %v985
    %1481 = vmatprep.subr.mxu0 0.0
    %1482 = vmatpush1.msra.mxu0 %v986
    %1483 = vmatprep.subr.mxu0 0.0
    %1484 = vmatpush1.msra.mxu0 %v987
    %1485 = vmatprep.subr.mxu0 0.0
    %1486 = vmatpush1.msra.mxu0 %v988
    %1487 = vmatprep.subr.mxu0 0.0
    %1488 = vmatpush1.msra.mxu0 %v989
    %1489 = vmatprep.subr.mxu0 0.0
    %1490 = vmatpush1.msra.mxu0 %v990
    %1491 = vmatprep.subr.mxu0 0.0
    %1492 = vmatpush1.msra.mxu0 %v991
    %1493 = vmatprep.subr.mxu0 0.0
    %1494 = vmatpush1.msra.mxu0 %v992
    %1495 = vmatprep.subr.mxu0 0.0
    %1496 = vmatpush1.msra.mxu0 %v993
    %1497 = vmatprep.subr.mxu0 0.0
    %1498 = vmatpush1.msra.mxu0 %v994
    %1499 = vmatprep.subr.mxu0 0.0
    %1500 = vmatpush1.msra.mxu0 %v995
    %1501 = vmatprep.subr.mxu0 0.0
    %1502 = vmatpush1.msra.mxu0 %v996
    %1503 = vmatprep.subr.mxu0 0.0
    %1504 = vmatpush1.msra.mxu0 %v997
    %1505 = vmatprep.subr.mxu0 0.0
    %1506 = vmatpush1.msra.mxu0 %v998
    %1507 = vmatprep.subr.mxu0 0.0
    %1508 = vmatpush1.msra.mxu0 %v999
    %1509 = vmatprep.subr.mxu0 0.0
    %1510 = vmatpush1.msra.mxu0 %v1000
    %1511 = vmatprep.subr.mxu0 0.0
    %1512 = vmatpush1.msra.mxu0 %v1001
    %1513 = vmatprep.subr.mxu0 0.0
    %1514 = vmatpush1.msra.mxu0 %v1002
    %1515 = vmatprep.mubr.f32.mxu0 %v1148
    %1516 = vmatmul.mubr.f32.gmra.mrb[0].mxu0 %v1147
    %v1517 = vpop.f32.mrb[0].mxu0
    %v1518 = vadd.f32 %v1448, %v1517
    %v1519 = vpop.f32.mrb[0].mxu0
    %1520 = vdwg.mxu0
    %1521 = vmatprep.subr.mxu0 0.0
    %1522 = vmatpush1.msra.mxu0 %v1003
    %1523 = vmatprep.subr.mxu0 0.0
    %1524 = vmatpush1.msra.mxu0 %v1004
    %1525 = vmatprep.subr.mxu0 0.0
    %1526 = vmatpush1.msra.mxu0 %v1005
    %1527 = vmatprep.subr.mxu0 0.0
    %1528 = vmatpush1.msra.mxu0 %v1006
    %1529 = vmatprep.subr.mxu0 0.0
    %1530 = vmatpush1.msra.mxu0 %v1007
    %1531 = vmatprep.subr.mxu0 0.0
    %1532 = vmatpush1.msra.mxu0 %v1008
    %1533 = vmatprep.subr.mxu0 0.0
    %1534 = vmatpush1.msra.mxu0 %v1009
    %1535 = vmatprep.subr.mxu0 0.0
    %1536 = vmatpush1.msra.mxu0 %v1010
    %1537 = vmatprep.subr.mxu0 0.0
    %1538 = vmatpush1.msra.mxu0 %v1011
    %1539 = vmatprep.subr.mxu0 0.0
    %1540 = vmatpush1.msra.mxu0 %v1012
    %1541 = vmatprep.subr.mxu0 0.0
    %1542 = vmatpush1.msra.mxu0 %v1013
    %1543 = vmatprep.subr.mxu0 0.0
    %1544 = vmatpush1.msra.mxu0 %v1014
    %1545 = vmatprep.subr.mxu0 0.0
    %1546 = vmatpush1.msra.mxu0 %v1015
    %1547 = vmatprep.subr.mxu0 0.0
    %1548 = vmatpush1.msra.mxu0 %v1016
    %1549 = vmatprep.subr.mxu0 0.0
    %1550 = vmatpush1.msra.mxu0 %v1017
    %1551 = vmatprep.subr.mxu0 0.0
    %1552 = vmatpush1.msra.mxu0 %v1018
    %1553 = vmatprep.subr.mxu0 0.0
    %1554 = vmatpush1.msra.mxu0 %v1019
    %1555 = vmatprep.subr.mxu0 0.0
    %1556 = vmatpush1.msra.mxu0 %v1020
    %1557 = vmatprep.subr.mxu0 0.0
    %1558 = vmatpush1.msra.mxu0 %v1021
    %1559 = vmatprep.subr.mxu0 0.0
    %1560 = vmatpush1.msra.mxu0 %v1022
    %1561 = vmatprep.subr.mxu0 0.0
    %1562 = vmatpush1.msra.mxu0 %v1023
    %1563 = vmatprep.subr.mxu0 0.0
    %1564 = vmatpush1.msra.mxu0 %v1024
    %1565 = vmatprep.subr.mxu0 0.0
    %1566 = vmatpush1.msra.mxu0 %v1025
    %1567 = vmatprep.subr.mxu0 0.0
    %1568 = vmatpush1.msra.mxu0 %v1026
    %1569 = vmatprep.subr.mxu0 0.0
    %1570 = vmatpush1.msra.mxu0 %v1027
    %1571 = vmatprep.subr.mxu0 0.0
    %1572 = vmatpush1.msra.mxu0 %v1028
    %1573 = vmatprep.subr.mxu0 0.0
    %1574 = vmatpush1.msra.mxu0 %v1029
    %1575 = vmatprep.subr.mxu0 0.0
    %1576 = vmatpush1.msra.mxu0 %v1030
    %1577 = vmatprep.subr.mxu0 0.0
    %1578 = vmatpush1.msra.mxu0 %v1031
    %1579 = vmatprep.subr.mxu0 0.0
    %1580 = vmatpush1.msra.mxu0 %v1032
    %1581 = vmatprep.subr.mxu0 0.0
    %1582 = vmatpush1.msra.mxu0 %v1033
    %1583 = vmatprep.subr.mxu0 0.0
    %1584 = vmatpush1.msra.mxu0 %v1034
    %1585 = vmatprep.mubr.f32.mxu0 %v1150
    %1586 = vmatmul.mubr.f32.gmra.mrb[0].mxu0 %v1149
    %v1587 = vpop.f32.mrb[0].mxu0
    %v1588 = vadd.f32 %v1518, %v1587
    %v1589 = vpop.f32.mrb[0].mxu0
    %1590 = vdwg.mxu0
    %1591 = vmatprep.subr.mxu0 0.0
    %1592 = vmatpush1.msra.mxu0 %v1035
    %1593 = vmatprep.subr.mxu0 0.0
    %1594 = vmatpush1.msra.mxu0 %v1036
    %1595 = vmatprep.subr.mxu0 0.0
    %1596 = vmatpush1.msra.mxu0 %v1037
    %1597 = vmatprep.subr.mxu0 0.0
    %1598 = vmatpush1.msra.mxu0 %v1038
    %1599 = vmatprep.subr.mxu0 0.0
    %1600 = vmatpush1.msra.mxu0 %v1039
    %1601 = vmatprep.subr.mxu0 0.0
    %1602 = vmatpush1.msra.mxu0 %v1040
    %1603 = vmatprep.subr.mxu0 0.0
    %1604 = vmatpush1.msra.mxu0 %v1041
    %1605 = vmatprep.subr.mxu0 0.0
    %1606 = vmatpush1.msra.mxu0 %v1042
    %1607 = vmatprep.subr.mxu0 0.0
    %1608 = vmatpush1.msra.mxu0 %v1043
    %1609 = vmatprep.subr.mxu0 0.0
    %1610 = vmatpush1.msra.mxu0 %v1044
    %1611 = vmatprep.subr.mxu0 0.0
    %1612 = vmatpush1.msra.mxu0 %v1045
    %1613 = vmatprep.subr.mxu0 0.0
    %1614 = vmatpush1.msra.mxu0 %v1046
    %1615 = vmatprep.subr.mxu0 0.0
    %1616 = vmatpush1.msra.mxu0 %v1047
    %1617 = vmatprep.subr.mxu0 0.0
    %1618 = vmatpush1.msra.mxu0 %v1048
    %1619 = vmatprep.subr.mxu0 0.0
    %1620 = vmatpush1.msra.mxu0 %v1049
    %1621 = vmatprep.subr.mxu0 0.0
    %1622 = vmatpush1.msra.mxu0 %v1050
    %1623 = vmatprep.subr.mxu0 0.0
    %1624 = vmatpush1.msra.mxu0 %v1051
    %1625 = vmatprep.subr.mxu0 0.0
    %1626 = vmatpush1.msra.mxu0 %v1052
    %1627 = vmatprep.subr.mxu0 0.0
    %1628 = vmatpush1.msra.mxu0 %v1053
    %1629 = vmatprep.subr.mxu0 0.0
    %1630 = vmatpush1.msra.mxu0 %v1054
    %1631 = vmatprep.subr.mxu0 0.0
    %1632 = vmatpush1.msra.mxu0 %v1055
    %1633 = vmatprep.subr.mxu0 0.0
    %1634 = vmatpush1.msra.mxu0 %v1056
    %1635 = vmatprep.subr.mxu0 0.0
    %1636 = vmatpush1.msra.mxu0 %v1057
    %1637 = vmatprep.subr.mxu0 0.0
    %1638 = vmatpush1.msra.mxu0 %v1058
    %1639 = vmatprep.subr.mxu0 0.0
    %1640 = vmatpush1.msra.mxu0 %v1059
    %1641 = vmatprep.subr.mxu0 0.0
    %1642 = vmatpush1.msra.mxu0 %v1060
    %1643 = vmatprep.subr.mxu0 0.0
    %1644 = vmatpush1.msra.mxu0 %v1061
    %1645 = vmatprep.subr.mxu0 0.0
    %1646 = vmatpush1.msra.mxu0 %v1062
    %1647 = vmatprep.subr.mxu0 0.0
    %1648 = vmatpush1.msra.mxu0 %v1063
    %1649 = vmatprep.subr.mxu0 0.0
    %1650 = vmatpush1.msra.mxu0 %v1064
    %1651 = vmatprep.subr.mxu0 0.0
    %1652 = vmatpush1.msra.mxu0 %v1065
    %1653 = vmatprep.subr.mxu0 0.0
    %1654 = vmatpush1.msra.mxu0 %v1066
    %1655 = vmatprep.mubr.f32.mxu0 %v1152
    %1656 = vmatmul.mubr.f32.gmra.mrb[0].mxu0 %v1151
    %v1657 = vpop.f32.mrb[0].mxu0
    %v1658 = vadd.f32 %v1588, %v1657
    %v1659 = vpop.f32.mrb[0].mxu0
    %1660 = vdwg.mxu0
    %1661 = vmatprep.subr.mxu0 0.0
    %1662 = vmatpush1.msra.mxu0 %v1067
    %1663 = vmatprep.subr.mxu0 0.0
    %1664 = vmatpush1.msra.mxu0 %v1068
    %1665 = vmatprep.subr.mxu0 0.0
    %1666 = vmatpush1.msra.mxu0 %v1069
    %1667 = vmatprep.subr.mxu0 0.0
    %1668 = vmatpush1.msra.mxu0 %v1070
    %1669 = vmatprep.subr.mxu0 0.0
    %1670 = vmatpush1.msra.mxu0 %v1071
    %1671 = vmatprep.subr.mxu0 0.0
    %1672 = vmatpush1.msra.mxu0 %v1072
    %1673 = vmatprep.subr.mxu0 0.0
    %1674 = vmatpush1.msra.mxu0 %v1073
    %1675 = vmatprep.subr.mxu0 0.0
    %1676 = vmatpush1.msra.mxu0 %v1074
    %1677 = vmatprep.subr.mxu0 0.0
    %1678 = vmatpush1.msra.mxu0 %v1075
    %1679 = vmatprep.subr.mxu0 0.0
    %1680 = vmatpush1.msra.mxu0 %v1076
    %1681 = vmatprep.subr.mxu0 0.0
    %1682 = vmatpush1.msra.mxu0 %v1077
    %1683 = vmatprep.subr.mxu0 0.0
    %1684 = vmatpush1.msra.mxu0 %v1078
    %1685 = vmatprep.subr.mxu0 0.0
    %1686 = vmatpush1.msra.mxu0 %v1079
    %1687 = vmatprep.subr.mxu0 0.0
    %1688 = vmatpush1.msra.mxu0 %v1080
    %1689 = vmatprep.subr.mxu0 0.0
    %1690 = vmatpush1.msra.mxu0 %v1081
    %1691 = vmatprep.subr.mxu0 0.0
    %1692 = vmatpush1.msra.mxu0 %v1082
    %1693 = vmatprep.subr.mxu0 0.0
    %1694 = vmatpush1.msra.mxu0 %v1083
    %1695 = vmatprep.subr.mxu0 0.0
    %1696 = vmatpush1.msra.mxu0 %v1084
    %1697 = vmatprep.subr.mxu0 0.0
    %1698 = vmatpush1.msra.mxu0 %v1085
    %1699 = vmatprep.subr.mxu0 0.0
    %1700 = vmatpush1.msra.mxu0 %v1086
    %1701 = vmatprep.subr.mxu0 0.0
    %1702 = vmatpush1.msra.mxu0 %v1087
    %1703 = vmatprep.subr.mxu0 0.0
    %1704 = vmatpush1.msra.mxu0 %v1088
    %1705 = vmatprep.subr.mxu0 0.0
    %1706 = vmatpush1.msra.mxu0 %v1089
    %1707 = vmatprep.subr.mxu0 0.0
    %1708 = vmatpush1.msra.mxu0 %v1090
    %1709 = vmatprep.subr.mxu0 0.0
    %1710 = vmatpush1.msra.mxu0 %v1091
    %1711 = vmatprep.subr.mxu0 0.0
    %1712 = vmatpush1.msra.mxu0 %v1092
    %1713 = vmatprep.subr.mxu0 0.0
    %1714 = vmatpush1.msra.mxu0 %v1093
    %1715 = vmatprep.subr.mxu0 0.0
    %1716 = vmatpush1.msra.mxu0 %v1094
    %1717 = vmatprep.subr.mxu0 0.0
    %1718 = vmatpush1.msra.mxu0 %v1095
    %1719 = vmatprep.subr.mxu0 0.0
    %1720 = vmatpush1.msra.mxu0 %v1096
    %1721 = vmatprep.subr.mxu0 0.0
    %1722 = vmatpush1.msra.mxu0 %v1097
    %1723 = vmatprep.subr.mxu0 0.0
    %1724 = vmatpush1.msra.mxu0 %v1098
    %1725 = vmatprep.mubr.f32.mxu0 %v1154
    %1726 = vmatmul.mubr.f32.gmra.mrb[0].mxu0 %v1153
    %v1727 = vpop.f32.mrb[0].mxu0
    %v1728 = vadd.f32 %v1658, %v1727
    %v1729 = vpop.f32.mrb[0].mxu0
    %1730 = vdwg.mxu0
    %1731 = vst [vmem:[#allocation7] sm:$0x3] %v1728
    // Predicated region
    $region22: #{tpu_custom_call.1} parent=1 // pred_check
      _
    $region23: #{tpu_custom_call.1} parent=1 // pred_check_branch
      %1733 = sbr.rel (0) target = $region25
    $region24: #{tpu_custom_call.1} parent=1 // pred_region
      %s1735 = ssub.s32 32, 32
      %1736 = vsyncadd [#allocation4], %s1735
      %s1738 = sshll.u32 [#allocation7], 4
      %s1739 = int_to_ptr.vmem [resolvable:$true] %s1738
      %1741 = dma.vmem_to_hbm [thread:$0]  %s1739, 32, %s3, [#allocation4]
    $region25: #{tpu_custom_call.1} parent=1 // pred_fallthru
      _
    // Predicated region
    $region26: #{tpu_custom_call.1} parent=1 // pred_check
      _
    $region27: #{tpu_custom_call.1} parent=1 // pred_check_branch
      %1743 = sbr.rel (0) target = $region29
    $region28: #{tpu_custom_call.1} parent=1 // pred_region
      %1744 = dma.done [#allocation4], 32
    $region29: #{tpu_custom_call.1} parent=1 // pred_fallthru
      _
    %1745 = vsyncpa [#allocation3], 1
    %1746 = vsyncpa [#allocation6], 1
    %1747 = vsyncpa [#allocation4], 1

// kernel: tpu_custom_call.1
$region0: #{tpu_custom_call.1}
  #allocation0 [shape = 'u32[]', space=smem, size = 0x4, offset = 0x4, fixed_abs, tag = 'smem constant byte address 0x4 - core index']
  #allocation1 [shape = 'u32[144,128]{1,0:T(1,128)}', space=vmem, size = 0x12000, scoped, tag = 'internal scratch']
  %s0 = inlined_call_operand.hbm [shape: bf16[2,64,2048], index: 0, kind: input, shape index: {}]
  %s1 = inlined_call_operand.hbm [shape: f32[2048,128], index: 1, kind: input, shape index: {}]
  %s2 = inlined_call_operand.vmem [shape: f32[1,128], index: 2, kind: input, shape index: {}]
  %s3 = inlined_call_operand.hbm [shape: f32[2,128], index: 3, kind: output, shape index: {}]
  %s4 = sld [smem:[#allocation0]]
  $region30: #{tpu_custom_call.1} parent=0
    _
  %s6 = ssub.s32 1, %s4
  %s7 = scalar_select 0, %s6, %s4
  $region1: #{tpu_custom_call.1} parent=0
    #allocation2 [shape = 'u8[524288]{0}', space=vmem, size = 0x80000, scoped, tag = 'input window, operand 0, single buffered']
    #allocation3 [shape = 's32[1]{0}', space=sflag, size = 0x4, scoped, tag = 'scoped memory for tpu_custom_call.1']
    #allocation4 [shape = 's32[1]{0}', space=sflag, size = 0x4, scoped, tag = 'scoped memory for tpu_custom_call.1']
    #allocation5 [shape = 'u8[1048576]{0}', space=vmem, size = 0x100000, scoped, tag = 'input window, operand 1, single buffered']
    #allocation6 [shape = 's32[1]{0}', space=sflag, size = 0x4, scoped, tag = 'scoped memory for tpu_custom_call.1']
    #allocation7 [shape = 'u8[1024]{0}', space=vmem, size = 0x400, scoped, tag = 'output window, operand 0, single buffered']
    %8 = vsyncpa [#allocation3], 0
    %9 = vsyncpa [#allocation6], 0
    %10 = vsyncpa [#allocation4], 0
    // Predicated region
    $region2: #{tpu_custom_call.1} parent=1 // pred_check
      _
    $region3: #{tpu_custom_call.1} parent=1 // pred_check_branch
      %12 = sbr.rel (0) target = $region5
    $region4: #{tpu_custom_call.1} parent=1 // pred_region
      %s14 = ssub.s32 16384, 16384
      %15 = vsyncadd [#allocation3], %s14
      %s16 = sshll.u32 [#allocation2], 4
      %s17 = int_to_ptr.vmem [resolvable:$true] %s16
      %22 = dma.hbm_to_vmem [thread:$0]  %s0, 16384, %s17, [#allocation3], 1024, 1024, 64
    $region5: #{tpu_custom_call.1} parent=1 // pred_fallthru
      _
    // Predicated region
    $region6: #{tpu_custom_call.1} parent=1 // pred_check
      _
    $region7: #{tpu_custom_call.1} parent=1 // pred_check_branch
      %24 = sbr.rel (0) target = $region9
    $region8: #{tpu_custom_call.1} parent=1 // pred_region
      %s26 = ssub.s32 32768, 32768
      %27 = vsyncadd [#allocation6], %s26
      %s28 = sshll.u32 [#allocation5], 4
      %s29 = int_to_ptr.vmem [resolvable:$true] %s28
      %34 = dma.hbm_to_vmem [thread:$0]  %s1, 32768, %s29, [#allocation6], 128, 128, 8
    $region9: #{tpu_custom_call.1} parent=1 // pred_fallthru
      _
    // Predicated region
    $region10: #{tpu_custom_call.1} parent=1 // pred_check
      _
    $region11: #{tpu_custom_call.1} parent=1 // pred_check_branch
      %36 = sbr.rel (0) target = $region13
    $region12: #{tpu_custom_call.1} parent=1 // pred_region
      _
    $region13: #{tpu_custom_call.1} parent=1 // pred_fallthru
      _
    // Predicated region
    $region14: #{tpu_custom_call.1} parent=1 // pred_check
      _
    $region15: #{tpu_custom_call.1} parent=1 // pred_check_branch
      %38 = sbr.rel (0) target = $region17
    $region16: #{tpu_custom_call.1} parent=1 // pred_region
      %39 = dma.done [#allocation3], 16384
    $region17: #{tpu_custom_call.1} parent=1 // pred_fallthru
      _
    // Predicated region
    $region18: #{tpu_custom_call.1} parent=1 // pred_check
      _
    $region19: #{tpu_custom_call.1} parent=1 // pred_check_branch
      %41 = sbr.rel (0) target = $region21
    $region20: #{tpu_custom_call.1} parent=1 // pred_region
      %42 = dma.done [#allocation6], 32768
    $region21: #{tpu_custom_call.1} parent=1 // pred_fallthru
      _
    %v43 = vld [vmem:[#allocation2] sm:$0xff]
    %v44 = vld [vmem:[#allocation2 + $0x8] sm:$0xff]
    %v45 = vld [vmem:[#allocation2 + $0x10] sm:$0xff]
    %v46 = vld [vmem:[#allocation2 + $0x18] sm:$0xff]
    %v47 = vld [vmem:[#allocation2 + $0x20] sm:$0xff]
    %v48 = vld [vmem:[#allocation2 + $0x28] sm:$0xff]
    %v49 = vld [vmem:[#allocation2 + $0x30] sm:$0xff]
    %v50 = vld [vmem:[#allocation2 + $0x38] sm:$0xff]
    %v51 = vld [vmem:[#allocation2 + $0x40] sm:$0xff]
    %v52 = vld [vmem:[#allocation2 + $0x48] sm:$0xff]
    %v53 = vld [vmem:[#allocation2 + $0x50] sm:$0xff]
    %v54 = vld [vmem:[#allocation2 + $0x58] sm:$0xff]
    %v55 = vld [vmem:[#allocation2 + $0x60] sm:$0xff]
    %v56 = vld [vmem:[#allocation2 + $0x68] sm:$0xff]
    %v57 = vld [vmem:[#allocation2 + $0x70] sm:$0xff]
    %v58 = vld [vmem:[#allocation2 + $0x78] sm:$0xff]
    %v59 = vld [vmem:[#allocation2 + $0x80] sm:$0xff]
    %v60 = vld [vmem:[#allocation2 + $0x88] sm:$0xff]
    %v61 = vld [vmem:[#allocation2 + $0x90] sm:$0xff]
    %v62 = vld [vmem:[#allocation2 + $0x98] sm:$0xff]
    %v63 = vld [vmem:[#allocation2 + $0xa0] sm:$0xff]
    %v64 = vld [vmem:[#allocation2 + $0xa8] sm:$0xff]
    %v65 = vld [vmem:[#allocation2 + $0xb0] sm:$0xff]
    %v66 = vld [vmem:[#allocation2 + $0xb8] sm:$0xff]
    %v67 = vld [vmem:[#allocation2 + $0xc0] sm:$0xff]
    %v68 = vld [vmem:[#allocation2 + $0xc8] sm:$0xff]
    %v69 = vld [vmem:[#allocation2 + $0xd0] sm:$0xff]
    %v70 = vld [vmem:[#allocation2 + $0xd8] sm:$0xff]
    %v71 = vld [vmem:[#allocation2 + $0xe0] sm:$0xff]
    %v72 = vld [vmem:[#allocation2 + $0xe8] sm:$0xff]
    %v73 = vld [vmem:[#allocation2 + $0xf0] sm:$0xff]
    %v74 = vld [vmem:[#allocation2 + $0xf8] sm:$0xff]
    %v75 = vld [vmem:[#allocation2 + $0x100] sm:$0xff]
    %v76 = vld [vmem:[#allocation2 + $0x108] sm:$0xff]
    %v77 = vld [vmem:[#allocation2 + $0x110] sm:$0xff]
    %v78 = vld [vmem:[#allocation2 + $0x118] sm:$0xff]
    %v79 = vld [vmem:[#allocation2 + $0x120] sm:$0xff]
    %v80 = vld [vmem:[#allocation2 + $0x128] sm:$0xff]
    %v81 = vld [vmem:[#allocation2 + $0x130] sm:$0xff]
    %v82 = vld [vmem:[#allocation2 + $0x138] sm:$0xff]
    %v83 = vld [vmem:[#allocation2 + $0x140] sm:$0xff]
    %v84 = vld [vmem:[#allocation2 + $0x148] sm:$0xff]
    %v85 = vld [vmem:[#allocation2 + $0x150] sm:$0xff]
    %v86 = vld [vmem:[#allocation2 + $0x158] sm:$0xff]
    %v87 = vld [vmem:[#allocation2 + $0x160] sm:$0xff]
    %v88 = vld [vmem:[#allocation2 + $0x168] sm:$0xff]
    %v89 = vld [vmem:[#allocation2 + $0x170] sm:$0xff]
    %v90 = vld [vmem:[#allocation2 + $0x178] sm:$0xff]
    %v91 = vld [vmem:[#allocation2 + $0x180] sm:$0xff]
    %v92 = vld [vmem:[#allocation2 + $0x188] sm:$0xff]
    %v93 = vld [vmem:[#allocation2 + $0x190] sm:$0xff]
    %v94 = vld [vmem:[#allocation2 + $0x198] sm:$0xff]
    %v95 = vld [vmem:[#allocation2 + $0x1a0] sm:$0xff]
    %v96 = vld [vmem:[#allocation2 + $0x1a8] sm:$0xff]
    %v97 = vld [vmem:[#allocation2 + $0x1b0] sm:$0xff]
    %v98 = vld [vmem:[#allocation2 + $0x1b8] sm:$0xff]
    %v99 = vld [vmem:[#allocation2 + $0x1c0] sm:$0xff]
    %v100 = vld [vmem:[#allocation2 + $0x1c8] sm:$0xff]
    %v101 = vld [vmem:[#allocation2 + $0x1d0] sm:$0xff]
    %v102 = vld [vmem:[#allocation2 + $0x1d8] sm:$0xff]
    %v103 = vld [vmem:[#allocation2 + $0x1e0] sm:$0xff]
    %v104 = vld [vmem:[#allocation2 + $0x1e8] sm:$0xff]
    %v105 = vld [vmem:[#allocation2 + $0x1f0] sm:$0xff]
    %v106 = vld [vmem:[#allocation2 + $0x1f8] sm:$0xff]
    %v107 = vld [vmem:[#allocation2 + $0x200] sm:$0xff]
    %v108 = vld [vmem:[#allocation2 + $0x208] sm:$0xff]
    %v109 = vld [vmem:[#allocation2 + $0x210] sm:$0xff]
    %v110 = vld [vmem:[#allocation2 + $0x218] sm:$0xff]
    %v111 = vld [vmem:[#allocation2 + $0x220] sm:$0xff]
    %v112 = vld [vmem:[#allocation2 + $0x228] sm:$0xff]
    %v113 = vld [vmem:[#allocation2 + $0x230] sm:$0xff]
    %v114 = vld [vmem:[#allocation2 + $0x238] sm:$0xff]
    %v115 = vld [vmem:[#allocation2 + $0x240] sm:$0xff]
    %v116 = vld [vmem:[#allocation2 + $0x248] sm:$0xff]
    %v117 = vld [vmem:[#allocation2 + $0x250] sm:$0xff]
    %v118 = vld [vmem:[#allocation2 + $0x258] sm:$0xff]
    %v119 = vld [vmem:[#allocation2 + $0x260] sm:$0xff]
    %v120 = vld [vmem:[#allocation2 + $0x268] sm:$0xff]
    %v121 = vld [vmem:[#allocation2 + $0x270] sm:$0xff]
    %v122 = vld [vmem:[#allocation2 + $0x278] sm:$0xff]
    %v123 = vld [vmem:[#allocation2 + $0x280] sm:$0xff]
    %v124 = vld [vmem:[#allocation2 + $0x288] sm:$0xff]
    %v125 = vld [vmem:[#allocation2 + $0x290] sm:$0xff]
    %v126 = vld [vmem:[#allocation2 + $0x298] sm:$0xff]
    %v127 = vld [vmem:[#allocation2 + $0x2a0] sm:$0xff]
    %v128 = vld [vmem:[#allocation2 + $0x2a8] sm:$0xff]
    %v129 = vld [vmem:[#allocation2 + $0x2b0] sm:$0xff]
    %v130 = vld [vmem:[#allocation2 + $0x2b8] sm:$0xff]
    %v131 = vld [vmem:[#allocation2 + $0x2c0] sm:$0xff]
    %v132 = vld [vmem:[#allocation2 + $0x2c8] sm:$0xff]
    %v133 = vld [vmem:[#allocation2 + $0x2d0] sm:$0xff]
    %v134 = vld [vmem:[#allocation2 + $0x2d8] sm:$0xff]
    %v135 = vld [vmem:[#allocation2 + $0x2e0] sm:$0xff]
    %v136 = vld [vmem:[#allocation2 + $0x2e8] sm:$0xff]
    %v137 = vld [vmem:[#allocation2 + $0x2f0] sm:$0xff]
    %v138 = vld [vmem:[#allocation2 + $0x2f8] sm:$0xff]
    %v139 = vld [vmem:[#allocation2 + $0x300] sm:$0xff]
    %v140 = vld [vmem:[#allocation2 + $0x308] sm:$0xff]
    %v141 = vld [vmem:[#allocation2 + $0x310] sm:$0xff]
    %v142 = vld [vmem:[#allocation2 + $0x318] sm:$0xff]
    %v143 = vld [vmem:[#allocation2 + $0x320] sm:$0xff]
    %v144 = vld [vmem:[#allocation2 + $0x328] sm:$0xff]
    %v145 = vld [vmem:[#allocation2 + $0x330] sm:$0xff]
    %v146 = vld [vmem:[#allocation2 + $0x338] sm:$0xff]
    %v147 = vld [vmem:[#allocation2 + $0x340] sm:$0xff]
    %v148 = vld [vmem:[#allocation2 + $0x348] sm:$0xff]
    %v149 = vld [vmem:[#allocation2 + $0x350] sm:$0xff]
    %v150 = vld [vmem:[#allocation2 + $0x358] sm:$0xff]
    %v151 = vld [vmem:[#allocation2 + $0x360] sm:$0xff]
    %v152 = vld [vmem:[#allocation2 + $0x368] sm:$0xff]
    %v153 = vld [vmem:[#allocation2 + $0x370] sm:$0xff]
    %v154 = vld [vmem:[#allocation2 + $0x378] sm:$0xff]
    %v155 = vld [vmem:[#allocation2 + $0x380] sm:$0xff]
    %v156 = vld [vmem:[#allocation2 + $0x388] sm:$0xff]
    %v157 = vld [vmem:[#allocation2 + $0x390] sm:$0xff]
    %v158 = vld [vmem:[#allocation2 + $0x398] sm:$0xff]
    %v159 = vld [vmem:[#allocation2 + $0x3a0] sm:$0xff]
    %v160 = vld [vmem:[#allocation2 + $0x3a8] sm:$0xff]
    %v161 = vld [vmem:[#allocation2 + $0x3b0] sm:$0xff]
    %v162 = vld [vmem:[#allocation2 + $0x3b8] sm:$0xff]
    %v163 = vld [vmem:[#allocation2 + $0x3c0] sm:$0xff]
    %v164 = vld [vmem:[#allocation2 + $0x3c8] sm:$0xff]
    %v165 = vld [vmem:[#allocation2 + $0x3d0] sm:$0xff]
    %v166 = vld [vmem:[#allocation2 + $0x3d8] sm:$0xff]
    %v167 = vld [vmem:[#allocation2 + $0x3e0] sm:$0xff]
    %v168 = vld [vmem:[#allocation2 + $0x3e8] sm:$0xff]
    %v169 = vld [vmem:[#allocation2 + $0x3f0] sm:$0xff]
    %v170 = vld [vmem:[#allocation2 + $0x3f8] sm:$0xff]
    %v171 = vunpack.c.l.bf16 %v43
    %v172 = vunpack.c.h.bf16 %v43
    %v173 = vunpack.c.l.bf16 %v44
    %v174 = vunpack.c.h.bf16 %v44
    %v175 = vunpack.c.l.bf16 %v45
    %v176 = vunpack.c.h.bf16 %v45
    %v177 = vunpack.c.l.bf16 %v46
    %v178 = vunpack.c.h.bf16 %v46
    %v179 = vunpack.c.l.bf16 %v47
    %v180 = vunpack.c.h.bf16 %v47
    %v181 = vunpack.c.l.bf16 %v48
    %v182 = vunpack.c.h.bf16 %v48
    %v183 = vunpack.c.l.bf16 %v49
    %v184 = vunpack.c.h.bf16 %v49
    %v185 = vunpack.c.l.bf16 %v50
    %v186 = vunpack.c.h.bf16 %v50
    %v187 = vunpack.c.l.bf16 %v51
    %v188 = vunpack.c.h.bf16 %v51
    %v189 = vunpack.c.l.bf16 %v52
    %v190 = vunpack.c.h.bf16 %v52
    %v191 = vunpack.c.l.bf16 %v53
    %v192 = vunpack.c.h.bf16 %v53
    %v193 = vunpack.c.l.bf16 %v54
    %v194 = vunpack.c.h.bf16 %v54
    %v195 = vunpack.c.l.bf16 %v55
    %v196 = vunpack.c.h.bf16 %v55
    %v197 = vunpack.c.l.bf16 %v56
    %v198 = vunpack.c.h.bf16 %v56
    %v199 = vunpack.c.l.bf16 %v57
    %v200 = vunpack.c.h.bf16 %v57
    %v201 = vunpack.c.l.bf16 %v58
    %v202 = vunpack.c.h.bf16 %v58
    %v203 = vunpack.c.l.bf16 %v59
    %v204 = vunpack.c.h.bf16 %v59
    %v205 = vunpack.c.l.bf16 %v60
    %v206 = vunpack.c.h.bf16 %v60
    %v207 = vunpack.c.l.bf16 %v61
    %v208 = vunpack.c.h.bf16 %v61
    %v209 = vunpack.c.l.bf16 %v62
    %v210 = vunpack.c.h.bf16 %v62
    %v211 = vunpack.c.l.bf16 %v63
    %v212 = vunpack.c.h.bf16 %v63
    %v213 = vunpack.c.l.bf16 %v64
    %v214 = vunpack.c.h.bf16 %v64
    %v215 = vunpack.c.l.bf16 %v65
    %v216 = vunpack.c.h.bf16 %v65
    %v217 = vunpack.c.l.bf16 %v66
    %v218 = vunpack.c.h.bf16 %v66
    %v219 = vunpack.c.l.bf16 %v67
    %v220 = vunpack.c.h.bf16 %v67
    %v221 = vunpack.c.l.bf16 %v68
    %v222 = vunpack.c.h.bf16 %v68
    %v223 = vunpack.c.l.bf16 %v69
    %v224 = vunpack.c.h.bf16 %v69
    %v225 = vunpack.c.l.bf16 %v70
    %v226 = vunpack.c.h.bf16 %v70
    %v227 = vunpack.c.l.bf16 %v71
    %v228 = vunpack.c.h.bf16 %v71
    %v229 = vunpack.c.l.bf16 %v72
    %v230 = vunpack.c.h.bf16 %v72
    %v231 = vunpack.c.l.bf16 %v73
    %v232 = vunpack.c.h.bf16 %v73
    %v233 = vunpack.c.l.bf16 %v74
    %v234 = vunpack.c.h.bf16 %v74
    %v235 = vunpack.c.l.bf16 %v75
    %v236 = vunpack.c.h.bf16 %v75
    %v237 = vunpack.c.l.bf16 %v76
    %v238 = vunpack.c.h.bf16 %v76
    %v239 = vunpack.c.l.bf16 %v77
    %v240 = vunpack.c.h.bf16 %v77
    %v241 = vunpack.c.l.bf16 %v78
    %v242 = vunpack.c.h.bf16 %v78
    %v243 = vunpack.c.l.bf16 %v79
    %v244 = vunpack.c.h.bf16 %v79
    %v245 = vunpack.c.l.bf16 %v80
    %v246 = vunpack.c.h.bf16 %v80
    %v247 = vunpack.c.l.bf16 %v81
    %v248 = vunpack.c.h.bf16 %v81
    %v249 = vunpack.c.l.bf16 %v82
    %v250 = vunpack.c.h.bf16 %v82
    %v251 = vunpack.c.l.bf16 %v83
    %v252 = vunpack.c.h.bf16 %v83
    %v253 = vunpack.c.l.bf16 %v84
    %v254 = vunpack.c.h.bf16 %v84
    %v255 = vunpack.c.l.bf16 %v85
    %v256 = vunpack.c.h.bf16 %v85
    %v257 = vunpack.c.l.bf16 %v86
    %v258 = vunpack.c.h.bf16 %v86
    %v259 = vunpack.c.l.bf16 %v87
    %v260 = vunpack.c.h.bf16 %v87
    %v261 = vunpack.c.l.bf16 %v88
    %v262 = vunpack.c.h.bf16 %v88
    %v263 = vunpack.c.l.bf16 %v89
    %v264 = vunpack.c.h.bf16 %v89
    %v265 = vunpack.c.l.bf16 %v90
    %v266 = vunpack.c.h.bf16 %v90
    %v267 = vunpack.c.l.bf16 %v91
    %v268 = vunpack.c.h.bf16 %v91
    %v269 = vunpack.c.l.bf16 %v92
    %v270 = vunpack.c.h.bf16 %v92
    %v271 = vunpack.c.l.bf16 %v93
    %v272 = vunpack.c.h.bf16 %v93
    %v273 = vunpack.c.l.bf16 %v94
    %v274 = vunpack.c.h.bf16 %v94
    %v275 = vunpack.c.l.bf16 %v95
    %v276 = vunpack.c.h.bf16 %v95
    %v277 = vunpack.c.l.bf16 %v96
    %v278 = vunpack.c.h.bf16 %v96
    %v279 = vunpack.c.l.bf16 %v97
    %v280 = vunpack.c.h.bf16 %v97
    %v281 = vunpack.c.l.bf16 %v98
    %v282 = vunpack.c.h.bf16 %v98
    %v283 = vunpack.c.l.bf16 %v99
    %v284 = vunpack.c.h.bf16 %v99
    %v285 = vunpack.c.l.bf16 %v100
    %v286 = vunpack.c.h.bf16 %v100
    %v287 = vunpack.c.l.bf16 %v101
    %v288 = vunpack.c.h.bf16 %v101
    %v289 = vunpack.c.l.bf16 %v102
    %v290 = vunpack.c.h.bf16 %v102
    %v291 = vunpack.c.l.bf16 %v103
    %v292 = vunpack.c.h.bf16 %v103
    %v293 = vunpack.c.l.bf16 %v104
    %v294 = vunpack.c.h.bf16 %v104
    %v295 = vunpack.c.l.bf16 %v105
    %v296 = vunpack.c.h.bf16 %v105
    %v297 = vunpack.c.l.bf16 %v106
    %v298 = vunpack.c.h.bf16 %v106
    %v299 = vunpack.c.l.bf16 %v107
    %v300 = vunpack.c.h.bf16 %v107
    %v301 = vunpack.c.l.bf16 %v108
    %v302 = vunpack.c.h.bf16 %v108
    %v303 = vunpack.c.l.bf16 %v109
    %v304 = vunpack.c.h.bf16 %v109
    %v305 = vunpack.c.l.bf16 %v110
    %v306 = vunpack.c.h.bf16 %v110
    %v307 = vunpack.c.l.bf16 %v111
    %v308 = vunpack.c.h.bf16 %v111
    %v309 = vunpack.c.l.bf16 %v112
    %v310 = vunpack.c.h.bf16 %v112
    %v311 = vunpack.c.l.bf16 %v113
    %v312 = vunpack.c.h.bf16 %v113
    %v313 = vunpack.c.l.bf16 %v114
    %v314 = vunpack.c.h.bf16 %v114
    %v315 = vunpack.c.l.bf16 %v115
    %v316 = vunpack.c.h.bf16 %v115
    %v317 = vunpack.c.l.bf16 %v116
    %v318 = vunpack.c.h.bf16 %v116
    %v319 = vunpack.c.l.bf16 %v117
    %v320 = vunpack.c.h.bf16 %v117
    %v321 = vunpack.c.l.bf16 %v118
    %v322 = vunpack.c.h.bf16 %v118
    %v323 = vunpack.c.l.bf16 %v119
    %v324 = vunpack.c.h.bf16 %v119
    %v325 = vunpack.c.l.bf16 %v120
    %v326 = vunpack.c.h.bf16 %v120
    %v327 = vunpack.c.l.bf16 %v121
    %v328 = vunpack.c.h.bf16 %v121
    %v329 = vunpack.c.l.bf16 %v122
    %v330 = vunpack.c.h.bf16 %v122
    %v331 = vunpack.c.l.bf16 %v123
    %v332 = vunpack.c.h.bf16 %v123
    %v333 = vunpack.c.l.bf16 %v124
    %v334 = vunpack.c.h.bf16 %v124
    %v335 = vunpack.c.l.bf16 %v125
    %v336 = vunpack.c.h.bf16 %v125
    %v337 = vunpack.c.l.bf16 %v126
    %v338 = vunpack.c.h.bf16 %v126
    %v339 = vunpack.c.l.bf16 %v127
    %v340 = vunpack.c.h.bf16 %v127
    %v341 = vunpack.c.l.bf16 %v128
    %v342 = vunpack.c.h.bf16 %v128
    %v343 = vunpack.c.l.bf16 %v129
    %v344 = vunpack.c.h.bf16 %v129
    %v345 = vunpack.c.l.bf16 %v130
    %v346 = vunpack.c.h.bf16 %v130
    %v347 = vunpack.c.l.bf16 %v131
    %v348 = vunpack.c.h.bf16 %v131
    %v349 = vunpack.c.l.bf16 %v132
    %v350 = vunpack.c.h.bf16 %v132
    %v351 = vunpack.c.l.bf16 %v133
    %v352 = vunpack.c.h.bf16 %v133
    %v353 = vunpack.c.l.bf16 %v134
    %v354 = vunpack.c.h.bf16 %v134
    %v355 = vunpack.c.l.bf16 %v135
    %v356 = vunpack.c.h.bf16 %v135
    %v357 = vunpack.c.l.bf16 %v136
    %v358 = vunpack.c.h.bf16 %v136
    %v359 = vunpack.c.l.bf16 %v137
    %v360 = vunpack.c.h.bf16 %v137
    %v361 = vunpack.c.l.bf16 %v138
    %v362 = vunpack.c.h.bf16 %v138
    %v363 = vunpack.c.l.bf16 %v139
    %v364 = vunpack.c.h.bf16 %v139
    %v365 = vunpack.c.l.bf16 %v140
    %v366 = vunpack.c.h.bf16 %v140
    %v367 = vunpack.c.l.bf16 %v141
    %v368 = vunpack.c.h.bf16 %v141
    %v369 = vunpack.c.l.bf16 %v142
    %v370 = vunpack.c.h.bf16 %v142
    %v371 = vunpack.c.l.bf16 %v143
    %v372 = vunpack.c.h.bf16 %v143
    %v373 = vunpack.c.l.bf16 %v144
    %v374 = vunpack.c.h.bf16 %v144
    %v375 = vunpack.c.l.bf16 %v145
    %v376 = vunpack.c.h.bf16 %v145
    %v377 = vunpack.c.l.bf16 %v146
    %v378 = vunpack.c.h.bf16 %v146
    %v379 = vunpack.c.l.bf16 %v147
    %v380 = vunpack.c.h.bf16 %v147
    %v381 = vunpack.c.l.bf16 %v148
    %v382 = vunpack.c.h.bf16 %v148
    %v383 = vunpack.c.l.bf16 %v149
    %v384 = vunpack.c.h.bf16 %v149
    %v385 = vunpack.c.l.bf16 %v150
    %v386 = vunpack.c.h.bf16 %v150
    %v387 = vunpack.c.l.bf16 %v151
    %v388 = vunpack.c.h.bf16 %v151
    %v389 = vunpack.c.l.bf16 %v152
    %v390 = vunpack.c.h.bf16 %v152
    %v391 = vunpack.c.l.bf16 %v153
    %v392 = vunpack.c.h.bf16 %v153
    %v393 = vunpack.c.l.bf16 %v154
    %v394 = vunpack.c.h.bf16 %v154
    %v395 = vunpack.c.l.bf16 %v155
    %v396 = vunpack.c.h.bf16 %v155
    %v397 = vunpack.c.l.bf16 %v156
    %v398 = vunpack.c.h.bf16 %v156
    %v399 = vunpack.c.l.bf16 %v157
    %v400 = vunpack.c.h.bf16 %v157
    %v401 = vunpack.c.l.bf16 %v158
    %v402 = vunpack.c.h.bf16 %v158
    %v403 = vunpack.c.l.bf16 %v159
    %v404 = vunpack.c.h.bf16 %v159
    %v405 = vunpack.c.l.bf16 %v160
    %v406 = vunpack.c.h.bf16 %v160
    %v407 = vunpack.c.l.bf16 %v161
    %v408 = vunpack.c.h.bf16 %v161
    %v409 = vunpack.c.l.bf16 %v162
    %v410 = vunpack.c.h.bf16 %v162
    %v411 = vunpack.c.l.bf16 %v163
    %v412 = vunpack.c.h.bf16 %v163
    %v413 = vunpack.c.l.bf16 %v164
    %v414 = vunpack.c.h.bf16 %v164
    %v415 = vunpack.c.l.bf16 %v165
    %v416 = vunpack.c.h.bf16 %v165
    %v417 = vunpack.c.l.bf16 %v166
    %v418 = vunpack.c.h.bf16 %v166
    %v419 = vunpack.c.l.bf16 %v167
    %v420 = vunpack.c.h.bf16 %v167
    %v421 = vunpack.c.l.bf16 %v168
    %v422 = vunpack.c.h.bf16 %v168
    %v423 = vunpack.c.l.bf16 %v169
    %v424 = vunpack.c.h.bf16 %v169
    %v425 = vunpack.c.l.bf16 %v170
    %v426 = vunpack.c.h.bf16 %v170
    %v427 = vadd.f32 %v171, %v187
    %v428 = vadd.f32 %v427, %v203
    %v429 = vadd.f32 %v428, %v219
    %v430 = vadd.f32 %v429, %v235
    %v431 = vadd.f32 %v430, %v251
    %v432 = vadd.f32 %v431, %v267
    %v433 = vadd.f32 %v432, %v283
    %v434 = vrot.slane %v433, 4
    %v435 = vadd.f32 %v433, %v434
    %v436 = vrot.slane %v435, 2
    %v437 = vadd.f32 %v435, %v436
    %v438 = vrot.slane %v437, 1
    %v439 = vadd.f32 %v437, %v438
    %v440 = vadd.f32 %v172, %v188
    %v441 = vadd.f32 %v440, %v204
    %v442 = vadd.f32 %v441, %v220
    %v443 = vadd.f32 %v442, %v236
    %v444 = vadd.f32 %v443, %v252
    %v445 = vadd.f32 %v444, %v268
    %v446 = vadd.f32 %v445, %v284
    %v447 = vrot.slane %v446, 4
    %v448 = vadd.f32 %v446, %v447
    %v449 = vrot.slane %v448, 2
    %v450 = vadd.f32 %v448, %v449
    %v451 = vrot.slane %v450, 1
    %v452 = vadd.f32 %v450, %v451
    %v453 = vadd.f32 %v173, %v189
    %v454 = vadd.f32 %v453, %v205
    %v455 = vadd.f32 %v454, %v221
    %v456 = vadd.f32 %v455, %v237
    %v457 = vadd.f32 %v456, %v253
    %v458 = vadd.f32 %v457, %v269
    %v459 = vadd.f32 %v458, %v285
    %v460 = vrot.slane %v459, 4
    %v461 = vadd.f32 %v459, %v460
    %v462 = vrot.slane %v461, 2
    %v463 = vadd.f32 %v461, %v462
    %v464 = vrot.slane %v463, 1
    %v465 = vadd.f32 %v463, %v464
    %v466 = vadd.f32 %v174, %v190
    %v467 = vadd.f32 %v466, %v206
    %v468 = vadd.f32 %v467, %v222
    %v469 = vadd.f32 %v468, %v238
    %v470 = vadd.f32 %v469, %v254
    %v471 = vadd.f32 %v470, %v270
    %v472 = vadd.f32 %v471, %v286
    %v473 = vrot.slane %v472, 4
    %v474 = vadd.f32 %v472, %v473
    %v475 = vrot.slane %v474, 2
    %v476 = vadd.f32 %v474, %v475
    %v477 = vrot.slane %v476, 1
    %v478 = vadd.f32 %v476, %v477
    %v479 = vadd.f32 %v175, %v191
    %v480 = vadd.f32 %v479, %v207
    %v481 = vadd.f32 %v480, %v223
    %v482 = vadd.f32 %v481, %v239
    %v483 = vadd.f32 %v482, %v255
    %v484 = vadd.f32 %v483, %v271
    %v485 = vadd.f32 %v484, %v287
    %v486 = vrot.slane %v485, 4
    %v487 = vadd.f32 %v485, %v486
    %v488 = vrot.slane %v487, 2
    %v489 = vadd.f32 %v487, %v488
    %v490 = vrot.slane %v489, 1
    %v491 = vadd.f32 %v489, %v490
    %v492 = vadd.f32 %v176, %v192
    %v493 = vadd.f32 %v492, %v208
    %v494 = vadd.f32 %v493, %v224
    %v495 = vadd.f32 %v494, %v240
    %v496 = vadd.f32 %v495, %v256
    %v497 = vadd.f32 %v496, %v272
    %v498 = vadd.f32 %v497, %v288
    %v499 = vrot.slane %v498, 4
    %v500 = vadd.f32 %v498, %v499
    %v501 = vrot.slane %v500, 2
    %v502 = vadd.f32 %v500, %v501
    %v503 = vrot.slane %v502, 1
    %v504 = vadd.f32 %v502, %v503
    %v505 = vadd.f32 %v177, %v193
    %v506 = vadd.f32 %v505, %v209
    %v507 = vadd.f32 %v506, %v225
    %v508 = vadd.f32 %v507, %v241
    %v509 = vadd.f32 %v508, %v257
    %v510 = vadd.f32 %v509, %v273
    %v511 = vadd.f32 %v510, %v289
    %v512 = vrot.slane %v511, 4
    %v513 = vadd.f32 %v511, %v512
    %v514 = vrot.slane %v513, 2
    %v515 = vadd.f32 %v513, %v514
    %v516 = vrot.slane %v515, 1
    %v517 = vadd.f32 %v515, %v516
    %v518 = vadd.f32 %v178, %v194
    %v519 = vadd.f32 %v518, %v210
    %v520 = vadd.f32 %v519, %v226
    %v521 = vadd.f32 %v520, %v242
    %v522 = vadd.f32 %v521, %v258
    %v523 = vadd.f32 %v522, %v274
    %v524 = vadd.f32 %v523, %v290
    %v525 = vrot.slane %v524, 4
    %v526 = vadd.f32 %v524, %v525
    %v527 = vrot.slane %v526, 2
    %v528 = vadd.f32 %v526, %v527
    %v529 = vrot.slane %v528, 1
    %v530 = vadd.f32 %v528, %v529
    %v531 = vadd.f32 %v179, %v195
    %v532 = vadd.f32 %v531, %v211
    %v533 = vadd.f32 %v532, %v227
    %v534 = vadd.f32 %v533, %v243
    %v535 = vadd.f32 %v534, %v259
    %v536 = vadd.f32 %v535, %v275
    %v537 = vadd.f32 %v536, %v291
    %v538 = vrot.slane %v537, 4
    %v539 = vadd.f32 %v537, %v538
    %v540 = vrot.slane %v539, 2
    %v541 = vadd.f32 %v539, %v540
    %v542 = vrot.slane %v541, 1
    %v543 = vadd.f32 %v541, %v542
    %v544 = vadd.f32 %v180, %v196
    %v545 = vadd.f32 %v544, %v212
    %v546 = vadd.f32 %v545, %v228
    %v547 = vadd.f32 %v546, %v244
    %v548 = vadd.f32 %v547, %v260
    %v549 = vadd.f32 %v548, %v276
    %v550 = vadd.f32 %v549, %v292
    %v551 = vrot.slane %v550, 4
    %v552 = vadd.f32 %v550, %v551
    %v553 = vrot.slane %v552, 2
    %v554 = vadd.f32 %v552, %v553
    %v555 = vrot.slane %v554, 1
    %v556 = vadd.f32 %v554, %v555
    %v557 = vadd.f32 %v181, %v197
    %v558 = vadd.f32 %v557, %v213
    %v559 = vadd.f32 %v558, %v229
    %v560 = vadd.f32 %v559, %v245
    %v561 = vadd.f32 %v560, %v261
    %v562 = vadd.f32 %v561, %v277
    %v563 = vadd.f32 %v562, %v293
    %v564 = vrot.slane %v563, 4
    %v565 = vadd.f32 %v563, %v564
    %v566 = vrot.slane %v565, 2
    %v567 = vadd.f32 %v565, %v566
    %v568 = vrot.slane %v567, 1
    %v569 = vadd.f32 %v567, %v568
    %v570 = vadd.f32 %v182, %v198
    %v571 = vadd.f32 %v570, %v214
    %v572 = vadd.f32 %v571, %v230
    %v573 = vadd.f32 %v572, %v246
    %v574 = vadd.f32 %v573, %v262
    %v575 = vadd.f32 %v574, %v278
    %v576 = vadd.f32 %v575, %v294
    %v577 = vrot.slane %v576, 4
    %v578 = vadd.f32 %v576, %v577
    %v579 = vrot.slane %v578, 2
    %v580 = vadd.f32 %v578, %v579
    %v581 = vrot.slane %v580, 1
    %v582 = vadd.f32 %v580, %v581
    %v583 = vadd.f32 %v183, %v199
    %v584 = vadd.f32 %v583, %v215
    %v585 = vadd.f32 %v584, %v231
    %v586 = vadd.f32 %v585, %v247
    %v587 = vadd.f32 %v586, %v263
    %v588 = vadd.f32 %v587, %v279
    %v589 = vadd.f32 %v588, %v295
    %v590 = vrot.slane %v589, 4
    %v591 = vadd.f32 %v589, %v590
    %v592 = vrot.slane %v591, 2
    %v593 = vadd.f32 %v591, %v592
    %v594 = vrot.slane %v593, 1
    %v595 = vadd.f32 %v593, %v594
    %v596 = vadd.f32 %v184, %v200
    %v597 = vadd.f32 %v596, %v216
    %v598 = vadd.f32 %v597, %v232
    %v599 = vadd.f32 %v598, %v248
    %v600 = vadd.f32 %v599, %v264
    %v601 = vadd.f32 %v600, %v280
    %v602 = vadd.f32 %v601, %v296
    %v603 = vrot.slane %v602, 4
    %v604 = vadd.f32 %v602, %v603
    %v605 = vrot.slane %v604, 2
    %v606 = vadd.f32 %v604, %v605
    %v607 = vrot.slane %v606, 1
    %v608 = vadd.f32 %v606, %v607
    %v609 = vadd.f32 %v185, %v201
    %v610 = vadd.f32 %v609, %v217
    %v611 = vadd.f32 %v610, %v233
    %v612 = vadd.f32 %v611, %v249
    %v613 = vadd.f32 %v612, %v265
    %v614 = vadd.f32 %v613, %v281
    %v615 = vadd.f32 %v614, %v297
    %v616 = vrot.slane %v615, 4
    %v617 = vadd.f32 %v615, %v616
    %v618 = vrot.slane %v617, 2
    %v619 = vadd.f32 %v617, %v618
    %v620 = vrot.slane %v619, 1
    %v621 = vadd.f32 %v619, %v620
    %v622 = vadd.f32 %v186, %v202
    %v623 = vadd.f32 %v622, %v218
    %v624 = vadd.f32 %v623, %v234
    %v625 = vadd.f32 %v624, %v250
    %v626 = vadd.f32 %v625, %v266
    %v627 = vadd.f32 %v626, %v282
    %v628 = vadd.f32 %v627, %v298
    %v629 = vrot.slane %v628, 4
    %v630 = vadd.f32 %v628, %v629
    %v631 = vrot.slane %v630, 2
    %v632 = vadd.f32 %v630, %v631
    %v633 = vrot.slane %v632, 1
    %v634 = vadd.f32 %v632, %v633
    %v635 = vadd.f32 %v299, %v315
    %v636 = vadd.f32 %v635, %v331
    %v637 = vadd.f32 %v636, %v347
    %v638 = vadd.f32 %v637, %v363
    %v639 = vadd.f32 %v638, %v379
    %v640 = vadd.f32 %v639, %v395
    %v641 = vadd.f32 %v640, %v411
    %v642 = vrot.slane %v641, 4
    %v643 = vadd.f32 %v641, %v642
    %v644 = vrot.slane %v643, 2
    %v645 = vadd.f32 %v643, %v644
    %v646 = vrot.slane %v645, 1
    %v647 = vadd.f32 %v645, %v646
    %v648 = vadd.f32 %v300, %v316
    %v649 = vadd.f32 %v648, %v332
    %v650 = vadd.f32 %v649, %v348
    %v651 = vadd.f32 %v650, %v364
    %v652 = vadd.f32 %v651, %v380
    %v653 = vadd.f32 %v652, %v396
    %v654 = vadd.f32 %v653, %v412
    %v655 = vrot.slane %v654, 4
    %v656 = vadd.f32 %v654, %v655
    %v657 = vrot.slane %v656, 2
    %v658 = vadd.f32 %v656, %v657
    %v659 = vrot.slane %v658, 1
    %v660 = vadd.f32 %v658, %v659
    %v661 = vadd.f32 %v301, %v317
    %v662 = vadd.f32 %v661, %v333
    %v663 = vadd.f32 %v662, %v349
    %v664 = vadd.f32 %v663, %v365
    %v665 = vadd.f32 %v664, %v381
    %v666 = vadd.f32 %v665, %v397
    %v667 = vadd.f32 %v666, %v413
    %v668 = vrot.slane %v667, 4
    %v669 = vadd.f32 %v667, %v668
    %v670 = vrot.slane %v669, 2
    %v671 = vadd.f32 %v669, %v670
    %v672 = vrot.slane %v671, 1
    %v673 = vadd.f32 %v671, %v672
    %v674 = vadd.f32 %v302, %v318
    %v675 = vadd.f32 %v674, %v334
    %v676 = vadd.f32 %v675, %v350
    %v677 = vadd.f32 %v676, %v366
    %v678 = vadd.f32 %v677, %v382
    %v679 = vadd.f32 %v678, %v398
    %v680 = vadd.f32 %v679, %v414
    %v681 = vrot.slane %v680, 4
    %v682 = vadd.f32 %v680, %v681
    %v683 = vrot.slane %v682, 2
    %v684 = vadd.f32 %v682, %v683
    %v685 = vrot.slane %v684, 1
    %v686 = vadd.f32 %v684, %v685
    %v687 = vadd.f32 %v303, %v319
    %v688 = vadd.f32 %v687, %v335
    %v689 = vadd.f32 %v688, %v351
    %v690 = vadd.f32 %v689, %v367
    %v691 = vadd.f32 %v690, %v383
    %v692 = vadd.f32 %v691, %v399
    %v693 = vadd.f32 %v692, %v415
    %v694 = vrot.slane %v693, 4
    %v695 = vadd.f32 %v693, %v694
    %v696 = vrot.slane %v695, 2
    %v697 = vadd.f32 %v695, %v696
    %v698 = vrot.slane %v697, 1
    %v699 = vadd.f32 %v697, %v698
    %v700 = vadd.f32 %v304, %v320
    %v701 = vadd.f32 %v700, %v336
    %v702 = vadd.f32 %v701, %v352
    %v703 = vadd.f32 %v702, %v368
    %v704 = vadd.f32 %v703, %v384
    %v705 = vadd.f32 %v704, %v400
    %v706 = vadd.f32 %v705, %v416
    %v707 = vrot.slane %v706, 4
    %v708 = vadd.f32 %v706, %v707
    %v709 = vrot.slane %v708, 2
    %v710 = vadd.f32 %v708, %v709
    %v711 = vrot.slane %v710, 1
    %v712 = vadd.f32 %v710, %v711
    %v713 = vadd.f32 %v305, %v321
    %v714 = vadd.f32 %v713, %v337
    %v715 = vadd.f32 %v714, %v353
    %v716 = vadd.f32 %v715, %v369
    %v717 = vadd.f32 %v716, %v385
    %v718 = vadd.f32 %v717, %v401
    %v719 = vadd.f32 %v718, %v417
    %v720 = vrot.slane %v719, 4
    %v721 = vadd.f32 %v719, %v720
    %v722 = vrot.slane %v721, 2
    %v723 = vadd.f32 %v721, %v722
    %v724 = vrot.slane %v723, 1
    %v725 = vadd.f32 %v723, %v724
    %v726 = vadd.f32 %v306, %v322
    %v727 = vadd.f32 %v726, %v338
    %v728 = vadd.f32 %v727, %v354
    %v729 = vadd.f32 %v728, %v370
    %v730 = vadd.f32 %v729, %v386
    %v731 = vadd.f32 %v730, %v402
    %v732 = vadd.f32 %v731, %v418
    %v733 = vrot.slane %v732, 4
    %v734 = vadd.f32 %v732, %v733
    %v735 = vrot.slane %v734, 2
    %v736 = vadd.f32 %v734, %v735
    %v737 = vrot.slane %v736, 1
    %v738 = vadd.f32 %v736, %v737
    %v739 = vadd.f32 %v307, %v323
    %v740 = vadd.f32 %v739, %v339
    %v741 = vadd.f32 %v740, %v355
    %v742 = vadd.f32 %v741, %v371
    %v743 = vadd.f32 %v742, %v387
    %v744 = vadd.f32 %v743, %v403
    %v745 = vadd.f32 %v744, %v419
    %v746 = vrot.slane %v745, 4
    %v747 = vadd.f32 %v745, %v746
    %v748 = vrot.slane %v747, 2
    %v749 = vadd.f32 %v747, %v748
    %v750 = vrot.slane %v749, 1
    %v751 = vadd.f32 %v749, %v750
    %v752 = vadd.f32 %v308, %v324
    %v753 = vadd.f32 %v752, %v340
    %v754 = vadd.f32 %v753, %v356
    %v755 = vadd.f32 %v754, %v372
    %v756 = vadd.f32 %v755, %v388
    %v757 = vadd.f32 %v756, %v404
    %v758 = vadd.f32 %v757, %v420
    %v759 = vrot.slane %v758, 4
    %v760 = vadd.f32 %v758, %v759
    %v761 = vrot.slane %v760, 2
    %v762 = vadd.f32 %v760, %v761
    %v763 = vrot.slane %v762, 1
    %v764 = vadd.f32 %v762, %v763
    %v765 = vadd.f32 %v309, %v325
    %v766 = vadd.f32 %v765, %v341
    %v767 = vadd.f32 %v766, %v357
    %v768 = vadd.f32 %v767, %v373
    %v769 = vadd.f32 %v768, %v389
    %v770 = vadd.f32 %v769, %v405
    %v771 = vadd.f32 %v770, %v421
    %v772 = vrot.slane %v771, 4
    %v773 = vadd.f32 %v771, %v772
    %v774 = vrot.slane %v773, 2
    %v775 = vadd.f32 %v773, %v774
    %v776 = vrot.slane %v775, 1
    %v777 = vadd.f32 %v775, %v776
    %v778 = vadd.f32 %v310, %v326
    %v779 = vadd.f32 %v778, %v342
    %v780 = vadd.f32 %v779, %v358
    %v781 = vadd.f32 %v780, %v374
    %v782 = vadd.f32 %v781, %v390
    %v783 = vadd.f32 %v782, %v406
    %v784 = vadd.f32 %v783, %v422
    %v785 = vrot.slane %v784, 4
    %v786 = vadd.f32 %v784, %v785
    %v787 = vrot.slane %v786, 2
    %v788 = vadd.f32 %v786, %v787
    %v789 = vrot.slane %v788, 1
    %v790 = vadd.f32 %v788, %v789
    %v791 = vadd.f32 %v311, %v327
    %v792 = vadd.f32 %v791, %v343
    %v793 = vadd.f32 %v792, %v359
    %v794 = vadd.f32 %v793, %v375
    %v795 = vadd.f32 %v794, %v391
    %v796 = vadd.f32 %v795, %v407
    %v797 = vadd.f32 %v796, %v423
    %v798 = vrot.slane %v797, 4
    %v799 = vadd.f32 %v797, %v798
    %v800 = vrot.slane %v799, 2
    %v801 = vadd.f32 %v799, %v800
    %v802 = vrot.slane %v801, 1
    %v803 = vadd.f32 %v801, %v802
    %v804 = vadd.f32 %v312, %v328
    %v805 = vadd.f32 %v804, %v344
    %v806 = vadd.f32 %v805, %v360
    %v807 = vadd.f32 %v806, %v376
    %v808 = vadd.f32 %v807, %v392
    %v809 = vadd.f32 %v808, %v408
    %v810 = vadd.f32 %v809, %v424
    %v811 = vrot.slane %v810, 4
    %v812 = vadd.f32 %v810, %v811
    %v813 = vrot.slane %v812, 2
    %v814 = vadd.f32 %v812, %v813
    %v815 = vrot.slane %v814, 1
    %v816 = vadd.f32 %v814, %v815
    %v817 = vadd.f32 %v313, %v329
    %v818 = vadd.f32 %v817, %v345
    %v819 = vadd.f32 %v818, %v361
    %v820 = vadd.f32 %v819, %v377
    %v821 = vadd.f32 %v820, %v393
    %v822 = vadd.f32 %v821, %v409
    %v823 = vadd.f32 %v822, %v425
    %v824 = vrot.slane %v823, 4
    %v825 = vadd.f32 %v823, %v824
    %v826 = vrot.slane %v825, 2
    %v827 = vadd.f32 %v825, %v826
    %v828 = vrot.slane %v827, 1
    %v829 = vadd.f32 %v827, %v828
    %v830 = vadd.f32 %v314, %v330
    %v831 = vadd.f32 %v830, %v346
    %v832 = vadd.f32 %v831, %v362
    %v833 = vadd.f32 %v832, %v378
    %v834 = vadd.f32 %v833, %v394
    %v835 = vadd.f32 %v834, %v410
    %v836 = vadd.f32 %v835, %v426
    %v837 = vrot.slane %v836, 4
    %v838 = vadd.f32 %v836, %v837
    %v839 = vrot.slane %v838, 2
    %v840 = vadd.f32 %v838, %v839
    %v841 = vrot.slane %v840, 1
    %v842 = vadd.f32 %v840, %v841
    %v843 = vld [vmem:[#allocation5] sm:$0xff]
    %v844 = vld [vmem:[#allocation5 + $0x8] sm:$0xff]
    %v845 = vld [vmem:[#allocation5 + $0x10] sm:$0xff]
    %v846 = vld [vmem:[#allocation5 + $0x18] sm:$0xff]
    %v847 = vld [vmem:[#allocation5 + $0x20] sm:$0xff]
    %v848 = vld [vmem:[#allocation5 + $0x28] sm:$0xff]
    %v849 = vld [vmem:[#allocation5 + $0x30] sm:$0xff]
    %v850 = vld [vmem:[#allocation5 + $0x38] sm:$0xff]
    %v851 = vld [vmem:[#allocation5 + $0x40] sm:$0xff]
    %v852 = vld [vmem:[#allocation5 + $0x48] sm:$0xff]
    %v853 = vld [vmem:[#allocation5 + $0x50] sm:$0xff]
    %v854 = vld [vmem:[#allocation5 + $0x58] sm:$0xff]
    %v855 = vld [vmem:[#allocation5 + $0x60] sm:$0xff]
    %v856 = vld [vmem:[#allocation5 + $0x68] sm:$0xff]
    %v857 = vld [vmem:[#allocation5 + $0x70] sm:$0xff]
    %v858 = vld [vmem:[#allocation5 + $0x78] sm:$0xff]
    %v859 = vld [vmem:[#allocation5 + $0x80] sm:$0xff]
    %v860 = vld [vmem:[#allocation5 + $0x88] sm:$0xff]
    %v861 = vld [vmem:[#allocation5 + $0x90] sm:$0xff]
    %v862 = vld [vmem:[#allocation5 + $0x98] sm:$0xff]
    %v863 = vld [vmem:[#allocation5 + $0xa0] sm:$0xff]
    %v864 = vld [vmem:[#allocation5 + $0xa8] sm:$0xff]
    %v865 = vld [vmem:[#allocation5 + $0xb0] sm:$0xff]
    %v866 = vld [vmem:[#allocation5 + $0xb8] sm:$0xff]
    %v867 = vld [vmem:[#allocation5 + $0xc0] sm:$0xff]
    %v868 = vld [vmem:[#allocation5 + $0xc8] sm:$0xff]
    %v869 = vld [vmem:[#allocation5 + $0xd0] sm:$0xff]
    %v870 = vld [vmem:[#allocation5 + $0xd8] sm:$0xff]
    %v871 = vld [vmem:[#allocation5 + $0xe0] sm:$0xff]
    %v872 = vld [vmem:[#allocation5 + $0xe8] sm:$0xff]
    %v873 = vld [vmem:[#allocation5 + $0xf0] sm:$0xff]
    %v874 = vld [vmem:[#allocation5 + $0xf8] sm:$0xff]
    %v875 = vld [vmem:[#allocation5 + $0x100] sm:$0xff]
    %v876 = vld [vmem:[#allocation5 + $0x108] sm:$0xff]
    %v877 = vld [vmem:[#allocation5 + $0x110] sm:$0xff]
    %v878 = vld [vmem:[#allocation5 + $0x118] sm:$0xff]
    %v879 = vld [vmem:[#allocation5 + $0x120] sm:$0xff]
    %v880 = vld [vmem:[#allocation5 + $0x128] sm:$0xff]
    %v881 = vld [vmem:[#allocation5 + $0x130] sm:$0xff]
    %v882 = vld [vmem:[#allocation5 + $0x138] sm:$0xff]
    %v883 = vld [vmem:[#allocation5 + $0x140] sm:$0xff]
    %v884 = vld [vmem:[#allocation5 + $0x148] sm:$0xff]
    %v885 = vld [vmem:[#allocation5 + $0x150] sm:$0xff]
    %v886 = vld [vmem:[#allocation5 + $0x158] sm:$0xff]
    %v887 = vld [vmem:[#allocation5 + $0x160] sm:$0xff]
    %v888 = vld [vmem:[#allocation5 + $0x168] sm:$0xff]
    %v889 = vld [vmem:[#allocation5 + $0x170] sm:$0xff]
    %v890 = vld [vmem:[#allocation5 + $0x178] sm:$0xff]
    %v891 = vld [vmem:[#allocation5 + $0x180] sm:$0xff]
    %v892 = vld [vmem:[#allocation5 + $0x188] sm:$0xff]
    %v893 = vld [vmem:[#allocation5 + $0x190] sm:$0xff]
    %v894 = vld [vmem:[#allocation5 + $0x198] sm:$0xff]
    %v895 = vld [vmem:[#allocation5 + $0x1a0] sm:$0xff]
    %v896 = vld [vmem:[#allocation5 + $0x1a8] sm:$0xff]
    %v897 = vld [vmem:[#allocation5 + $0x1b0] sm:$0xff]
    %v898 = vld [vmem:[#allocation5 + $0x1b8] sm:$0xff]
    %v899 = vld [vmem:[#allocation5 + $0x1c0] sm:$0xff]
    %v900 = vld [vmem:[#allocation5 + $0x1c8] sm:$0xff]
    %v901 = vld [vmem:[#allocation5 + $0x1d0] sm:$0xff]
    %v902 = vld [vmem:[#allocation5 + $0x1d8] sm:$0xff]
    %v903 = vld [vmem:[#allocation5 + $0x1e0] sm:$0xff]
    %v904 = vld [vmem:[#allocation5 + $0x1e8] sm:$0xff]
    %v905 = vld [vmem:[#allocation5 + $0x1f0] sm:$0xff]
    %v906 = vld [vmem:[#allocation5 + $0x1f8] sm:$0xff]
    %v907 = vld [vmem:[#allocation5 + $0x200] sm:$0xff]
    %v908 = vld [vmem:[#allocation5 + $0x208] sm:$0xff]
    %v909 = vld [vmem:[#allocation5 + $0x210] sm:$0xff]
    %v910 = vld [vmem:[#allocation5 + $0x218] sm:$0xff]
    %v911 = vld [vmem:[#allocation5 + $0x220] sm:$0xff]
    %v912 = vld [vmem:[#allocation5 + $0x228] sm:$0xff]
    %v913 = vld [vmem:[#allocation5 + $0x230] sm:$0xff]
    %v914 = vld [vmem:[#allocation5 + $0x238] sm:$0xff]
    %v915 = vld [vmem:[#allocation5 + $0x240] sm:$0xff]
    %v916 = vld [vmem:[#allocation5 + $0x248] sm:$0xff]
    %v917 = vld [vmem:[#allocation5 + $0x250] sm:$0xff]
    %v918 = vld [vmem:[#allocation5 + $0x258] sm:$0xff]
    %v919 = vld [vmem:[#allocation5 + $0x260] sm:$0xff]
    %v920 = vld [vmem:[#allocation5 + $0x268] sm:$0xff]
    %v921 = vld [vmem:[#allocation5 + $0x270] sm:$0xff]
    %v922 = vld [vmem:[#allocation5 + $0x278] sm:$0xff]
    %v923 = vld [vmem:[#allocation5 + $0x280] sm:$0xff]
    %v924 = vld [vmem:[#allocation5 + $0x288] sm:$0xff]
    %v925 = vld [vmem:[#allocation5 + $0x290] sm:$0xff]
    %v926 = vld [vmem:[#allocation5 + $0x298] sm:$0xff]
    %v927 = vld [vmem:[#allocation5 + $0x2a0] sm:$0xff]
    %v928 = vld [vmem:[#allocation5 + $0x2a8] sm:$0xff]
    %v929 = vld [vmem:[#allocation5 + $0x2b0] sm:$0xff]
    %v930 = vld [vmem:[#allocation5 + $0x2b8] sm:$0xff]
    %v931 = vld [vmem:[#allocation5 + $0x2c0] sm:$0xff]
    %v932 = vld [vmem:[#allocation5 + $0x2c8] sm:$0xff]
    %v933 = vld [vmem:[#allocation5 + $0x2d0] sm:$0xff]
    %v934 = vld [vmem:[#allocation5 + $0x2d8] sm:$0xff]
    %v935 = vld [vmem:[#allocation5 + $0x2e0] sm:$0xff]
    %v936 = vld [vmem:[#allocation5 + $0x2e8] sm:$0xff]
    %v937 = vld [vmem:[#allocation5 + $0x2f0] sm:$0xff]
    %v938 = vld [vmem:[#allocation5 + $0x2f8] sm:$0xff]
    %v939 = vld [vmem:[#allocation5 + $0x300] sm:$0xff]
    %v940 = vld [vmem:[#allocation5 + $0x308] sm:$0xff]
    %v941 = vld [vmem:[#allocation5 + $0x310] sm:$0xff]
    %v942 = vld [vmem:[#allocation5 + $0x318] sm:$0xff]
    %v943 = vld [vmem:[#allocation5 + $0x320] sm:$0xff]
    %v944 = vld [vmem:[#allocation5 + $0x328] sm:$0xff]
    %v945 = vld [vmem:[#allocation5 + $0x330] sm:$0xff]
    %v946 = vld [vmem:[#allocation5 + $0x338] sm:$0xff]
    %v947 = vld [vmem:[#allocation5 + $0x340] sm:$0xff]
    %v948 = vld [vmem:[#allocation5 + $0x348] sm:$0xff]
    %v949 = vld [vmem:[#allocation5 + $0x350] sm:$0xff]
    %v950 = vld [vmem:[#allocation5 + $0x358] sm:$0xff]
    %v951 = vld [vmem:[#allocation5 + $0x360] sm:$0xff]
    %v952 = vld [vmem:[#allocation5 + $0x368] sm:$0xff]
    %v953 = vld [vmem:[#allocation5 + $0x370] sm:$0xff]
    %v954 = vld [vmem:[#allocation5 + $0x378] sm:$0xff]
    %v955 = vld [vmem:[#allocation5 + $0x380] sm:$0xff]
    %v956 = vld [vmem:[#allocation5 + $0x388] sm:$0xff]
    %v957 = vld [vmem:[#allocation5 + $0x390] sm:$0xff]
    %v958 = vld [vmem:[#allocation5 + $0x398] sm:$0xff]
    %v959 = vld [vmem:[#allocation5 + $0x3a0] sm:$0xff]
    %v960 = vld [vmem:[#allocation5 + $0x3a8] sm:$0xff]
    %v961 = vld [vmem:[#allocation5 + $0x3b0] sm:$0xff]
    %v962 = vld [vmem:[#allocation5 + $0x3b8] sm:$0xff]
    %v963 = vld [vmem:[#allocation5 + $0x3c0] sm:$0xff]
    %v964 = vld [vmem:[#allocation5 + $0x3c8] sm:$0xff]
    %v965 = vld [vmem:[#allocation5 + $0x3d0] sm:$0xff]
    %v966 = vld [vmem:[#allocation5 + $0x3d8] sm:$0xff]
    %v967 = vld [vmem:[#allocation5 + $0x3e0] sm:$0xff]
    %v968 = vld [vmem:[#allocation5 + $0x3e8] sm:$0xff]
    %v969 = vld [vmem:[#allocation5 + $0x3f0] sm:$0xff]
    %v970 = vld [vmem:[#allocation5 + $0x3f8] sm:$0xff]
    %v971 = vld [vmem:[#allocation5 + $0x400] sm:$0xff]
    %v972 = vld [vmem:[#allocation5 + $0x408] sm:$0xff]
    %v973 = vld [vmem:[#allocation5 + $0x410] sm:$0xff]
    %v974 = vld [vmem:[#allocation5 + $0x418] sm:$0xff]
    %v975 = vld [vmem:[#allocation5 + $0x420] sm:$0xff]
    %v976 = vld [vmem:[#allocation5 + $0x428] sm:$0xff]
    %v977 = vld [vmem:[#allocation5 + $0x430] sm:$0xff]
    %v978 = vld [vmem:[#allocation5 + $0x438] sm:$0xff]
    %v979 = vld [vmem:[#allocation5 + $0x440] sm:$0xff]
    %v980 = vld [vmem:[#allocation5 + $0x448] sm:$0xff]
    %v981 = vld [vmem:[#allocation5 + $0x450] sm:$0xff]
    %v982 = vld [vmem:[#allocation5 + $0x458] sm:$0xff]
    %v983 = vld [vmem:[#allocation5 + $0x460] sm:$0xff]
    %v984 = vld [vmem:[#allocation5 + $0x468] sm:$0xff]
    %v985 = vld [vmem:[#allocation5 + $0x470] sm:$0xff]
    %v986 = vld [vmem:[#allocation5 + $0x478] sm:$0xff]
    %v987 = vld [vmem:[#allocation5 + $0x480] sm:$0xff]
    %v988 = vld [vmem:[#allocation5 + $0x488] sm:$0xff]
    %v989 = vld [vmem:[#allocation5 + $0x490] sm:$0xff]
    %v990 = vld [vmem:[#allocation5 + $0x498] sm:$0xff]
    %v991 = vld [vmem:[#allocation5 + $0x4a0] sm:$0xff]
    %v992 = vld [vmem:[#allocation5 + $0x4a8] sm:$0xff]
    %v993 = vld [vmem:[#allocation5 + $0x4b0] sm:$0xff]
    %v994 = vld [vmem:[#allocation5 + $0x4b8] sm:$0xff]
    %v995 = vld [vmem:[#allocation5 + $0x4c0] sm:$0xff]
    %v996 = vld [vmem:[#allocation5 + $0x4c8] sm:$0xff]
    %v997 = vld [vmem:[#allocation5 + $0x4d0] sm:$0xff]
    %v998 = vld [vmem:[#allocation5 + $0x4d8] sm:$0xff]
    %v999 = vld [vmem:[#allocation5 + $0x4e0] sm:$0xff]
    %v1000 = vld [vmem:[#allocation5 + $0x4e8] sm:$0xff]
    %v1001 = vld [vmem:[#allocation5 + $0x4f0] sm:$0xff]
    %v1002 = vld [vmem:[#allocation5 + $0x4f8] sm:$0xff]
    %v1003 = vld [vmem:[#allocation5 + $0x500] sm:$0xff]
    %v1004 = vld [vmem:[#allocation5 + $0x508] sm:$0xff]
    %v1005 = vld [vmem:[#allocation5 + $0x510] sm:$0xff]
    %v1006 = vld [vmem:[#allocation5 + $0x518] sm:$0xff]
    %v1007 = vld [vmem:[#allocation5 + $0x520] sm:$0xff]
    %v1008 = vld [vmem:[#allocation5 + $0x528] sm:$0xff]
    %v1009 = vld [vmem:[#allocation5 + $0x530] sm:$0xff]
    %v1010 = vld [vmem:[#allocation5 + $0x538] sm:$0xff]
    %v1011 = vld [vmem:[#allocation5 + $0x540] sm:$0xff]
    %v1012 = vld [vmem:[#allocation5 + $0x548] sm:$0xff]
    %v1013 = vld [vmem:[#allocation5 + $0x550] sm:$0xff]
    %v1014 = vld [vmem:[#allocation5 + $0x558] sm:$0xff]
    %v1015 = vld [vmem:[#allocation5 + $0x560] sm:$0xff]
    %v1016 = vld [vmem:[#allocation5 + $0x568] sm:$0xff]
    %v1017 = vld [vmem:[#allocation5 + $0x570] sm:$0xff]
    %v1018 = vld [vmem:[#allocation5 + $0x578] sm:$0xff]
    %v1019 = vld [vmem:[#allocation5 + $0x580] sm:$0xff]
    %v1020 = vld [vmem:[#allocation5 + $0x588] sm:$0xff]
    %v1021 = vld [vmem:[#allocation5 + $0x590] sm:$0xff]
    %v1022 = vld [vmem:[#allocation5 + $0x598] sm:$0xff]
    %v1023 = vld [vmem:[#allocation5 + $0x5a0] sm:$0xff]
    %v1024 = vld [vmem:[#allocation5 + $0x5a8] sm:$0xff]
    %v1025 = vld [vmem:[#allocation5 + $0x5b0] sm:$0xff]
    %v1026 = vld [vmem:[#allocation5 + $0x5b8] sm:$0xff]
    %v1027 = vld [vmem:[#allocation5 + $0x5c0] sm:$0xff]
    %v1028 = vld [vmem:[#allocation5 + $0x5c8] sm:$0xff]
    %v1029 = vld [vmem:[#allocation5 + $0x5d0] sm:$0xff]
    %v1030 = vld [vmem:[#allocation5 + $0x5d8] sm:$0xff]
    %v1031 = vld [vmem:[#allocation5 + $0x5e0] sm:$0xff]
    %v1032 = vld [vmem:[#allocation5 + $0x5e8] sm:$0xff]
    %v1033 = vld [vmem:[#allocation5 + $0x5f0] sm:$0xff]
    %v1034 = vld [vmem:[#allocation5 + $0x5f8] sm:$0xff]
    %v1035 = vld [vmem:[#allocation5 + $0x600] sm:$0xff]
    %v1036 = vld [vmem:[#allocation5 + $0x608] sm:$0xff]
    %v1037 = vld [vmem:[#allocation5 + $0x610] sm:$0xff]
    %v1038 = vld [vmem:[#allocation5 + $0x618] sm:$0xff]
    %v1039 = vld [vmem:[#allocation5 + $0x620] sm:$0xff]
    %v1040 = vld [vmem:[#allocation5 + $0x628] sm:$0xff]
    %v1041 = vld [vmem:[#allocation5 + $0x630] sm:$0xff]
    %v1042 = vld [vmem:[#allocation5 + $0x638] sm:$0xff]
    %v1043 = vld [vmem:[#allocation5 + $0x640] sm:$0xff]
    %v1044 = vld [vmem:[#allocation5 + $0x648] sm:$0xff]
    %v1045 = vld [vmem:[#allocation5 + $0x650] sm:$0xff]
    %v1046 = vld [vmem:[#allocation5 + $0x658] sm:$0xff]
    %v1047 = vld [vmem:[#allocation5 + $0x660] sm:$0xff]
    %v1048 = vld [vmem:[#allocation5 + $0x668] sm:$0xff]
    %v1049 = vld [vmem:[#allocation5 + $0x670] sm:$0xff]
    %v1050 = vld [vmem:[#allocation5 + $0x678] sm:$0xff]
    %v1051 = vld [vmem:[#allocation5 + $0x680] sm:$0xff]
    %v1052 = vld [vmem:[#allocation5 + $0x688] sm:$0xff]
    %v1053 = vld [vmem:[#allocation5 + $0x690] sm:$0xff]
    %v1054 = vld [vmem:[#allocation5 + $0x698] sm:$0xff]
    %v1055 = vld [vmem:[#allocation5 + $0x6a0] sm:$0xff]
    %v1056 = vld [vmem:[#allocation5 + $0x6a8] sm:$0xff]
    %v1057 = vld [vmem:[#allocation5 + $0x6b0] sm:$0xff]
    %v1058 = vld [vmem:[#allocation5 + $0x6b8] sm:$0xff]
    %v1059 = vld [vmem:[#allocation5 + $0x6c0] sm:$0xff]
    %v1060 = vld [vmem:[#allocation5 + $0x6c8] sm:$0xff]
    %v1061 = vld [vmem:[#allocation5 + $0x6d0] sm:$0xff]
    %v1062 = vld [vmem:[#allocation5 + $0x6d8] sm:$0xff]
    %v1063 = vld [vmem:[#allocation5 + $0x6e0] sm:$0xff]
    %v1064 = vld [vmem:[#allocation5 + $0x6e8] sm:$0xff]
    %v1065 = vld [vmem:[#allocation5 + $0x6f0] sm:$0xff]
    %v1066 = vld [vmem:[#allocation5 + $0x6f8] sm:$0xff]
    %v1067 = vld [vmem:[#allocation5 + $0x700] sm:$0xff]
    %v1068 = vld [vmem:[#allocation5 + $0x708] sm:$0xff]
    %v1069 = vld [vmem:[#allocation5 + $0x710] sm:$0xff]
    %v1070 = vld [vmem:[#allocation5 + $0x718] sm:$0xff]
    %v1071 = vld [vmem:[#allocation5 + $0x720] sm:$0xff]
    %v1072 = vld [vmem:[#allocation5 + $0x728] sm:$0xff]
    %v1073 = vld [vmem:[#allocation5 + $0x730] sm:$0xff]
    %v1074 = vld [vmem:[#allocation5 + $0x738] sm:$0xff]
    %v1075 = vld [vmem:[#allocation5 + $0x740] sm:$0xff]
    %v1076 = vld [vmem:[#allocation5 + $0x748] sm:$0xff]
    %v1077 = vld [vmem:[#allocation5 + $0x750] sm:$0xff]
    %v1078 = vld [vmem:[#allocation5 + $0x758] sm:$0xff]
    %v1079 = vld [vmem:[#allocation5 + $0x760] sm:$0xff]
    %v1080 = vld [vmem:[#allocation5 + $0x768] sm:$0xff]
    %v1081 = vld [vmem:[#allocation5 + $0x770] sm:$0xff]
    %v1082 = vld [vmem:[#allocation5 + $0x778] sm:$0xff]
    %v1083 = vld [vmem:[#allocation5 + $0x780] sm:$0xff]
    %v1084 = vld [vmem:[#allocation5 + $0x788] sm:$0xff]
    %v1085 = vld [vmem:[#allocation5 + $0x790] sm:$0xff]
    %v1086 = vld [vmem:[#allocation5 + $0x798] sm:$0xff]
    %v1087 = vld [vmem:[#allocation5 + $0x7a0] sm:$0xff]
    %v1088 = vld [vmem:[#allocation5 + $0x7a8] sm:$0xff]
    %v1089 = vld [vmem:[#allocation5 + $0x7b0] sm:$0xff]
    %v1090 = vld [vmem:[#allocation5 + $0x7b8] sm:$0xff]
    %v1091 = vld [vmem:[#allocation5 + $0x7c0] sm:$0xff]
    %v1092 = vld [vmem:[#allocation5 + $0x7c8] sm:$0xff]
    %v1093 = vld [vmem:[#allocation5 + $0x7d0] sm:$0xff]
    %v1094 = vld [vmem:[#allocation5 + $0x7d8] sm:$0xff]
    %v1095 = vld [vmem:[#allocation5 + $0x7e0] sm:$0xff]
    %v1096 = vld [vmem:[#allocation5 + $0x7e8] sm:$0xff]
    %v1097 = vld [vmem:[#allocation5 + $0x7f0] sm:$0xff]
    %v1098 = vld [vmem:[#allocation5 + $0x7f8] sm:$0xff]
    %v1099 = vld [vmem:[%s2] sm:$0x1]
    %v1101 = vlaneseq
    %v1102 = vshrl.u32 %v1101, 7
    %v1103 = vsub.s32 0, %v1102
    %v1104 = vrot.slane %v1099, %v1103
    %vm1138 = vcmask 1041409
    %v1139 = vsel %vm1138, %v647, %v439
    %v1140 = vsel %vm1138, %v660, %v452
    %v1141 = vsel %vm1138, %v673, %v465
    %v1142 = vsel %vm1138, %v686, %v478
    %v1143 = vsel %vm1138, %v699, %v491
    %v1144 = vsel %vm1138, %v712, %v504
    %v1145 = vsel %vm1138, %v725, %v517
    %v1146 = vsel %vm1138, %v738, %v530
    %v1147 = vsel %vm1138, %v751, %v543
    %v1148 = vsel %vm1138, %v764, %v556
    %v1149 = vsel %vm1138, %v777, %v569
    %v1150 = vsel %vm1138, %v790, %v582
    %v1151 = vsel %vm1138, %v803, %v595
    %v1152 = vsel %vm1138, %v816, %v608
    %v1153 = vsel %vm1138, %v829, %v621
    %v1154 = vsel %vm1138, %v842, %v634
    %1171 = vmatprep.subr.mxu0 0.0
    %1172 = vmatpush1.msra.mxu0 %v843
    %1173 = vmatprep.subr.mxu0 0.0
    %1174 = vmatpush1.msra.mxu0 %v844
    %1175 = vmatprep.subr.mxu0 0.0
    %1176 = vmatpush1.msra.mxu0 %v845
    %1177 = vmatprep.subr.mxu0 0.0
    %1178 = vmatpush1.msra.mxu0 %v846
    %1179 = vmatprep.subr.mxu0 0.0
    %1180 = vmatpush1.msra.mxu0 %v847
    %1181 = vmatprep.subr.mxu0 0.0
    %1182 = vmatpush1.msra.mxu0 %v848
    %1183 = vmatprep.subr.mxu0 0.0
    %1184 = vmatpush1.msra.mxu0 %v849
    %1185 = vmatprep.subr.mxu0 0.0
    %1186 = vmatpush1.msra.mxu0 %v850
    %1187 = vmatprep.subr.mxu0 0.0
    %1188 = vmatpush1.msra.mxu0 %v851
    %1189 = vmatprep.subr.mxu0 0.0
    %1190 = vmatpush1.msra.mxu0 %v852
    %1191 = vmatprep.subr.mxu0 0.0
    %1192 = vmatpush1.msra.mxu0 %v853
    %1193 = vmatprep.subr.mxu0 0.0
    %1194 = vmatpush1.msra.mxu0 %v854
    %1195 = vmatprep.subr.mxu0 0.0
    %1196 = vmatpush1.msra.mxu0 %v855
    %1197 = vmatprep.subr.mxu0 0.0
    %1198 = vmatpush1.msra.mxu0 %v856
    %1199 = vmatprep.subr.mxu0 0.0
    %1200 = vmatpush1.msra.mxu0 %v857
    %1201 = vmatprep.subr.mxu0 0.0
    %1202 = vmatpush1.msra.mxu0 %v858
    %1203 = vmatprep.subr.mxu0 0.0
    %1204 = vmatpush1.msra.mxu0 %v859
    %1205 = vmatprep.subr.mxu0 0.0
    %1206 = vmatpush1.msra.mxu0 %v860
    %1207 = vmatprep.subr.mxu0 0.0
    %1208 = vmatpush1.msra.mxu0 %v861
    %1209 = vmatprep.subr.mxu0 0.0
    %1210 = vmatpush1.msra.mxu0 %v862
    %1211 = vmatprep.subr.mxu0 0.0
    %1212 = vmatpush1.msra.mxu0 %v863
    %1213 = vmatprep.subr.mxu0 0.0
    %1214 = vmatpush1.msra.mxu0 %v864
    %1215 = vmatprep.subr.mxu0 0.0
    %1216 = vmatpush1.msra.mxu0 %v865
    %1217 = vmatprep.subr.mxu0 0.0
    %1218 = vmatpush1.msra.mxu0 %v866
    %1219 = vmatprep.subr.mxu0 0.0
    %1220 = vmatpush1.msra.mxu0 %v867
    %1221 = vmatprep.subr.mxu0 0.0
    %1222 = vmatpush1.msra.mxu0 %v868
    %1223 = vmatprep.subr.mxu0 0.0
    %1224 = vmatpush1.msra.mxu0 %v869
    %1225 = vmatprep.subr.mxu0 0.0
    %1226 = vmatpush1.msra.mxu0 %v870
    %1227 = vmatprep.subr.mxu0 0.0
    %1228 = vmatpush1.msra.mxu0 %v871
    %1229 = vmatprep.subr.mxu0 0.0
    %1230 = vmatpush1.msra.mxu0 %v872
    %1231 = vmatprep.subr.mxu0 0.0
    %1232 = vmatpush1.msra.mxu0 %v873
    %1233 = vmatprep.subr.mxu0 0.0
    %1234 = vmatpush1.msra.mxu0 %v874
    %1235 = vmatprep.mubr.f32.mxu0 %v1140
    %1236 = vmatmul.mubr.f32.gmra.mrb[0].mxu0 %v1139
    %v1237 = vpop.f32.mrb[0].mxu0
    %v1238 = vadd.f32 %v1104, %v1237
    %v1239 = vpop.f32.mrb[0].mxu0
    %1240 = vdwg.mxu0
    %1241 = vmatprep.subr.mxu0 0.0
    %1242 = vmatpush1.msra.mxu0 %v875
    %1243 = vmatprep.subr.mxu0 0.0
    %1244 = vmatpush1.msra.mxu0 %v876
    %1245 = vmatprep.subr.mxu0 0.0
    %1246 = vmatpush1.msra.mxu0 %v877
    %1247 = vmatprep.subr.mxu0 0.0
    %1248 = vmatpush1.msra.mxu0 %v878
    %1249 = vmatprep.subr.mxu0 0.0
    %1250 = vmatpush1.msra.mxu0 %v879
    %1251 = vmatprep.subr.mxu0 0.0
    %1252 = vmatpush1.msra.mxu0 %v880
    %1253 = vmatprep.subr.mxu0 0.0
    %1254 = vmatpush1.msra.mxu0 %v881
    %1255 = vmatprep.subr.mxu0 0.0
    %1256 = vmatpush1.msra.mxu0 %v882
    %1257 = vmatprep.subr.mxu0 0.0
    %1258 = vmatpush1.msra.mxu0 %v883
    %1259 = vmatprep.subr.mxu0 0.0
    %1260 = vmatpush1.msra.mxu0 %v884
    %1261 = vmatprep.subr.mxu0 0.0
    %1262 = vmatpush1.msra.mxu0 %v885
    %1263 = vmatprep.subr.mxu0 0.0
    %1264 = vmatpush1.msra.mxu0 %v886
    %1265 = vmatprep.subr.mxu0 0.0
    %1266 = vmatpush1.msra.mxu0 %v887
    %1267 = vmatprep.subr.mxu0 0.0
    %1268 = vmatpush1.msra.mxu0 %v888
    %1269 = vmatprep.subr.mxu0 0.0
    %1270 = vmatpush1.msra.mxu0 %v889
    %1271 = vmatprep.subr.mxu0 0.0
    %1272 = vmatpush1.msra.mxu0 %v890
    %1273 = vmatprep.subr.mxu0 0.0
    %1274 = vmatpush1.msra.mxu0 %v891
    %1275 = vmatprep.subr.mxu0 0.0
    %1276 = vmatpush1.msra.mxu0 %v892
    %1277 = vmatprep.subr.mxu0 0.0
    %1278 = vmatpush1.msra.mxu0 %v893
    %1279 = vmatprep.subr.mxu0 0.0
    %1280 = vmatpush1.msra.mxu0 %v894
    %1281 = vmatprep.subr.mxu0 0.0
    %1282 = vmatpush1.msra.mxu0 %v895
    %1283 = vmatprep.subr.mxu0 0.0
    %1284 = vmatpush1.msra.mxu0 %v896
    %1285 = vmatprep.subr.mxu0 0.0
    %1286 = vmatpush1.msra.mxu0 %v897
    %1287 = vmatprep.subr.mxu0 0.0
    %1288 = vmatpush1.msra.mxu0 %v898
    %1289 = vmatprep.subr.mxu0 0.0
    %1290 = vmatpush1.msra.mxu0 %v899
    %1291 = vmatprep.subr.mxu0 0.0
    %1292 = vmatpush1.msra.mxu0 %v900
    %1293 = vmatprep.subr.mxu0 0.0
    %1294 = vmatpush1.msra.mxu0 %v901
    %1295 = vmatprep.subr.mxu0 0.0
    %1296 = vmatpush1.msra.mxu0 %v902
    %1297 = vmatprep.subr.mxu0 0.0
    %1298 = vmatpush1.msra.mxu0 %v903
    %1299 = vmatprep.subr.mxu0 0.0
    %1300 = vmatpush1.msra.mxu0 %v904
    %1301 = vmatprep.subr.mxu0 0.0
    %1302 = vmatpush1.msra.mxu0 %v905
    %1303 = vmatprep.subr.mxu0 0.0
    %1304 = vmatpush1.msra.mxu0 %v906
    %1305 = vmatprep.mubr.f32.mxu0 %v1142
    %1306 = vmatmul.mubr.f32.gmra.mrb[0].mxu0 %v1141
    %v1307 = vpop.f32.mrb[0].mxu0
    %v1308 = vadd.f32 %v1238, %v1307
    %v1309 = vpop.f32.mrb[0].mxu0
    %1310 = vdwg.mxu0
    %1311 = vmatprep.subr.mxu0 0.0
    %1312 = vmatpush1.msra.mxu0 %v907
    %1313 = vmatprep.subr.mxu0 0.0
    %1314 = vmatpush1.msra.mxu0 %v908
    %1315 = vmatprep.subr.mxu0 0.0
    %1316 = vmatpush1.msra.mxu0 %v909
    %1317 = vmatprep.subr.mxu0 0.0
    %1318 = vmatpush1.msra.mxu0 %v910
    %1319 = vmatprep.subr.mxu0 0.0
    %1320 = vmatpush1.msra.mxu0 %v911
    %1321 = vmatprep.subr.mxu0 0.0
    %1322 = vmatpush1.msra.mxu0 %v912
    %1323 = vmatprep.subr.mxu0 0.0
    %1324 = vmatpush1.msra.mxu0 %v913
    %1325 = vmatprep.subr.mxu0 0.0
    %1326 = vmatpush1.msra.mxu0 %v914
    %1327 = vmatprep.subr.mxu0 0.0
    %1328 = vmatpush1.msra.mxu0 %v915
    %1329 = vmatprep.subr.mxu0 0.0
    %1330 = vmatpush1.msra.mxu0 %v916
    %1331 = vmatprep.subr.mxu0 0.0
    %1332 = vmatpush1.msra.mxu0 %v917
    %1333 = vmatprep.subr.mxu0 0.0
    %1334 = vmatpush1.msra.mxu0 %v918
    %1335 = vmatprep.subr.mxu0 0.0
    %1336 = vmatpush1.msra.mxu0 %v919
    %1337 = vmatprep.subr.mxu0 0.0
    %1338 = vmatpush1.msra.mxu0 %v920
    %1339 = vmatprep.subr.mxu0 0.0
    %1340 = vmatpush1.msra.mxu0 %v921
    %1341 = vmatprep.subr.mxu0 0.0
    %1342 = vmatpush1.msra.mxu0 %v922
    %1343 = vmatprep.subr.mxu0 0.0
    %1344 = vmatpush1.msra.mxu0 %v923
    %1345 = vmatprep.subr.mxu0 0.0
    %1346 = vmatpush1.msra.mxu0 %v924
    %1347 = vmatprep.subr.mxu0 0.0
    %1348 = vmatpush1.msra.mxu0 %v925
    %1349 = vmatprep.subr.mxu0 0.0
    %1350 = vmatpush1.msra.mxu0 %v926
    %1351 = vmatprep.subr.mxu0 0.0
    %1352 = vmatpush1.msra.mxu0 %v927
    %1353 = vmatprep.subr.mxu0 0.0
    %1354 = vmatpush1.msra.mxu0 %v928
    %1355 = vmatprep.subr.mxu0 0.0
    %1356 = vmatpush1.msra.mxu0 %v929
    %1357 = vmatprep.subr.mxu0 0.0
    %1358 = vmatpush1.msra.mxu0 %v930
    %1359 = vmatprep.subr.mxu0 0.0
    %1360 = vmatpush1.msra.mxu0 %v931
    %1361 = vmatprep.subr.mxu0 0.0
    %1362 = vmatpush1.msra.mxu0 %v932
    %1363 = vmatprep.subr.mxu0 0.0
    %1364 = vmatpush1.msra.mxu0 %v933
    %1365 = vmatprep.subr.mxu0 0.0
    %1366 = vmatpush1.msra.mxu0 %v934
    %1367 = vmatprep.subr.mxu0 0.0
    %1368 = vmatpush1.msra.mxu0 %v935
    %1369 = vmatprep.subr.mxu0 0.0
    %1370 = vmatpush1.msra.mxu0 %v936
    %1371 = vmatprep.subr.mxu0 0.0
    %1372 = vmatpush1.msra.mxu0 %v937
    %1373 = vmatprep.subr.mxu0 0.0
    %1374 = vmatpush1.msra.mxu0 %v938
    %1375 = vmatprep.mubr.f32.mxu0 %v1144
    %1376 = vmatmul.mubr.f32.gmra.mrb[0].mxu0 %v1143
    %v1377 = vpop.f32.mrb[0].mxu0
    %v1378 = vadd.f32 %v1308, %v1377
    %v1379 = vpop.f32.mrb[0].mxu0
    %1380 = vdwg.mxu0
    %1381 = vmatprep.subr.mxu0 0.0
    %1382 = vmatpush1.msra.mxu0 %v939
    %1383 = vmatprep.subr.mxu0 0.0
    %1384 = vmatpush1.msra.mxu0 %v940
    %1385 = vmatprep.subr.mxu0 0.0
    %1386 = vmatpush1.msra.mxu0 %v941
    %1387 = vmatprep.subr.mxu0 0.0
    %1388 = vmatpush1.msra.mxu0 %v942
    %1389 = vmatprep.subr.mxu0 0.0
    %1390 = vmatpush1.msra.mxu0 %v943
    %1391 = vmatprep.subr.mxu0 0.0
    %1392 = vmatpush1.msra.mxu0 %v944
    %1393 = vmatprep.subr.mxu0 0.0
    %1394 = vmatpush1.msra.mxu0 %v945
    %1395 = vmatprep.subr.mxu0 0.0
    %1396 = vmatpush1.msra.mxu0 %v946
    %1397 = vmatprep.subr.mxu0 0.0
    %1398 = vmatpush1.msra.mxu0 %v947
    %1399 = vmatprep.subr.mxu0 0.0
    %1400 = vmatpush1.msra.mxu0 %v948
    %1401 = vmatprep.subr.mxu0 0.0
    %1402 = vmatpush1.msra.mxu0 %v949
    %1403 = vmatprep.subr.mxu0 0.0
    %1404 = vmatpush1.msra.mxu0 %v950
    %1405 = vmatprep.subr.mxu0 0.0
    %1406 = vmatpush1.msra.mxu0 %v951
    %1407 = vmatprep.subr.mxu0 0.0
    %1408 = vmatpush1.msra.mxu0 %v952
    %1409 = vmatprep.subr.mxu0 0.0
    %1410 = vmatpush1.msra.mxu0 %v953
    %1411 = vmatprep.subr.mxu0 0.0
    %1412 = vmatpush1.msra.mxu0 %v954
    %1413 = vmatprep.subr.mxu0 0.0
    %1414 = vmatpush1.msra.mxu0 %v955
    %1415 = vmatprep.subr.mxu0 0.0
    %1416 = vmatpush1.msra.mxu0 %v956
    %1417 = vmatprep.subr.mxu0 0.0
    %1418 = vmatpush1.msra.mxu0 %v957
    %1419 = vmatprep.subr.mxu0 0.0
    %1420 = vmatpush1.msra.mxu0 %v958
    %1421 = vmatprep.subr.mxu0 0.0
    %1422 = vmatpush1.msra.mxu0 %v959
    %1423 = vmatprep.subr.mxu0 0.0
    %1424 = vmatpush1.msra.mxu0 %v960
    %1425 = vmatprep.subr.mxu0 0.0
    %1426 = vmatpush1.msra.mxu0 %v961
    %1427 = vmatprep.subr.mxu0 0.0
    %1428 = vmatpush1.msra.mxu0 %v962
    %1429 = vmatprep.subr.mxu0 0.0
    %1430 = vmatpush1.msra.mxu0 %v963
    %1431 = vmatprep.subr.mxu0 0.0
    %1432 = vmatpush1.msra.mxu0 %v964
    %1433 = vmatprep.subr.mxu0 0.0
    %1434 = vmatpush1.msra.mxu0 %v965
    %1435 = vmatprep.subr.mxu0 0.0
    %1436 = vmatpush1.msra.mxu0 %v966
    %1437 = vmatprep.subr.mxu0 0.0
    %1438 = vmatpush1.msra.mxu0 %v967
    %1439 = vmatprep.subr.mxu0 0.0
    %1440 = vmatpush1.msra.mxu0 %v968
    %1441 = vmatprep.subr.mxu0 0.0
    %1442 = vmatpush1.msra.mxu0 %v969
    %1443 = vmatprep.subr.mxu0 0.0
    %1444 = vmatpush1.msra.mxu0 %v970
    %1445 = vmatprep.mubr.f32.mxu0 %v1146
    %1446 = vmatmul.mubr.f32.gmra.mrb[0].mxu0 %v1145
    %v1447 = vpop.f32.mrb[0].mxu0
    %v1448 = vadd.f32 %v1378, %v1447
    %v1449 = vpop.f32.mrb[0].mxu0
    %1450 = vdwg.mxu0
    %1451 = vmatprep.subr.mxu0 0.0
    %1452 = vmatpush1.msra.mxu0 %v971
    %1453 = vmatprep.subr.mxu0 0.0
    %1454 = vmatpush1.msra.mxu0 %v972
    %1455 = vmatprep.subr.mxu0 0.0
    %1456 = vmatpush1.msra.mxu0 %v973
    %1457 = vmatprep.subr.mxu0 0.0
    %1458 = vmatpush1.msra.mxu0 %v974
    %1459 = vmatprep.subr.mxu0 0.0
    %1460 = vmatpush1.msra.mxu0 %v975
    %1461 = vmatprep.subr.mxu0 0.0
    %1462 = vmatpush1.msra.mxu0 %v976
    %1463 = vmatprep.subr.mxu0 0.0
    %1464 = vmatpush1.msra.mxu0 %v977
    %1465 = vmatprep.subr.mxu0 0.0
    %1466 = vmatpush1.msra.mxu0 %v978
    %1467 = vmatprep.subr.mxu0 0.0
    %1468 = vmatpush1.msra.mxu0 %v979
    %1469 = vmatprep.subr.mxu0 0.0
    %1470 = vmatpush1.msra.mxu0 %v980
    %1471 = vmatprep.subr.mxu0 0.0
    %1472 = vmatpush1.msra.mxu0 %v981
    %1473 = vmatprep.subr.mxu0 0.0
    %1474 = vmatpush1.msra.mxu0 %v982
    %1475 = vmatprep.subr.mxu0 0.0
    %1476 = vmatpush1.msra.mxu0 %v983
    %1477 = vmatprep.subr.mxu0 0.0
    %1478 = vmatpush1.msra.mxu0 %v984
    %1479 = vmatprep.subr.mxu0 0.0
    %1480 = vmatpush1.msra.mxu0 %v985
    %1481 = vmatprep.subr.mxu0 0.0
    %1482 = vmatpush1.msra.mxu0 %v986
    %1483 = vmatprep.subr.mxu0 0.0
    %1484 = vmatpush1.msra.mxu0 %v987
    %1485 = vmatprep.subr.mxu0 0.0
    %1486 = vmatpush1.msra.mxu0 %v988
    %1487 = vmatprep.subr.mxu0 0.0
    %1488 = vmatpush1.msra.mxu0 %v989
    %1489 = vmatprep.subr.mxu0 0.0
    %1490 = vmatpush1.msra.mxu0 %v990
    %1491 = vmatprep.subr.mxu0 0.0
    %1492 = vmatpush1.msra.mxu0 %v991
    %1493 = vmatprep.subr.mxu0 0.0
    %1494 = vmatpush1.msra.mxu0 %v992
    %1495 = vmatprep.subr.mxu0 0.0
    %1496 = vmatpush1.msra.mxu0 %v993
    %1497 = vmatprep.subr.mxu0 0.0
    %1498 = vmatpush1.msra.mxu0 %v994
    %1499 = vmatprep.subr.mxu0 0.0
    %1500 = vmatpush1.msra.mxu0 %v995
    %1501 = vmatprep.subr.mxu0 0.0
    %1502 = vmatpush1.msra.mxu0 %v996
    %1503 = vmatprep.subr.mxu0 0.0
    %1504 = vmatpush1.msra.mxu0 %v997
    %1505 = vmatprep.subr.mxu0 0.0
    %1506 = vmatpush1.msra.mxu0 %v998
    %1507 = vmatprep.subr.mxu0 0.0
    %1508 = vmatpush1.msra.mxu0 %v999
    %1509 = vmatprep.subr.mxu0 0.0
    %1510 = vmatpush1.msra.mxu0 %v1000
    %1511 = vmatprep.subr.mxu0 0.0
    %1512 = vmatpush1.msra.mxu0 %v1001
    %1513 = vmatprep.subr.mxu0 0.0
    %1514 = vmatpush1.msra.mxu0 %v1002
    %1515 = vmatprep.mubr.f32.mxu0 %v1148
    %1516 = vmatmul.mubr.f32.gmra.mrb[0].mxu0 %v1147
    %v1517 = vpop.f32.mrb[0].mxu0
    %v1518 = vadd.f32 %v1448, %v1517
    %v1519 = vpop.f32.mrb[0].mxu0
    %1520 = vdwg.mxu0
    %1521 = vmatprep.subr.mxu0 0.0
    %1522 = vmatpush1.msra.mxu0 %v1003
    %1523 = vmatprep.subr.mxu0 0.0
    %1524 = vmatpush1.msra.mxu0 %v1004
    %1525 = vmatprep.subr.mxu0 0.0
    %1526 = vmatpush1.msra.mxu0 %v1005
    %1527 = vmatprep.subr.mxu0 0.0
    %1528 = vmatpush1.msra.mxu0 %v1006
    %1529 = vmatprep.subr.mxu0 0.0
    %1530 = vmatpush1.msra.mxu0 %v1007
    %1531 = vmatprep.subr.mxu0 0.0
    %1532 = vmatpush1.msra.mxu0 %v1008
    %1533 = vmatprep.subr.mxu0 0.0
    %1534 = vmatpush1.msra.mxu0 %v1009
    %1535 = vmatprep.subr.mxu0 0.0
    %1536 = vmatpush1.msra.mxu0 %v1010
    %1537 = vmatprep.subr.mxu0 0.0
    %1538 = vmatpush1.msra.mxu0 %v1011
    %1539 = vmatprep.subr.mxu0 0.0
    %1540 = vmatpush1.msra.mxu0 %v1012
    %1541 = vmatprep.subr.mxu0 0.0
    %1542 = vmatpush1.msra.mxu0 %v1013
    %1543 = vmatprep.subr.mxu0 0.0
    %1544 = vmatpush1.msra.mxu0 %v1014
    %1545 = vmatprep.subr.mxu0 0.0
    %1546 = vmatpush1.msra.mxu0 %v1015
    %1547 = vmatprep.subr.mxu0 0.0
    %1548 = vmatpush1.msra.mxu0 %v1016
    %1549 = vmatprep.subr.mxu0 0.0
    %1550 = vmatpush1.msra.mxu0 %v1017
    %1551 = vmatprep.subr.mxu0 0.0
    %1552 = vmatpush1.msra.mxu0 %v1018
    %1553 = vmatprep.subr.mxu0 0.0
    %1554 = vmatpush1.msra.mxu0 %v1019
    %1555 = vmatprep.subr.mxu0 0.0
    %1556 = vmatpush1.msra.mxu0 %v1020
    %1557 = vmatprep.subr.mxu0 0.0
    %1558 = vmatpush1.msra.mxu0 %v1021
    %1559 = vmatprep.subr.mxu0 0.0
    %1560 = vmatpush1.msra.mxu0 %v1022
    %1561 = vmatprep.subr.mxu0 0.0
    %1562 = vmatpush1.msra.mxu0 %v1023
    %1563 = vmatprep.subr.mxu0 0.0
    %1564 = vmatpush1.msra.mxu0 %v1024
    %1565 = vmatprep.subr.mxu0 0.0
    %1566 = vmatpush1.msra.mxu0 %v1025
    %1567 = vmatprep.subr.mxu0 0.0
    %1568 = vmatpush1.msra.mxu0 %v1026
    %1569 = vmatprep.subr.mxu0 0.0
    %1570 = vmatpush1.msra.mxu0 %v1027
    %1571 = vmatprep.subr.mxu0 0.0
    %1572 = vmatpush1.msra.mxu0 %v1028
    %1573 = vmatprep.subr.mxu0 0.0
    %1574 = vmatpush1.msra.mxu0 %v1029
    %1575 = vmatprep.subr.mxu0 0.0
    %1576 = vmatpush1.msra.mxu0 %v1030
    %1577 = vmatprep.subr.mxu0 0.0
    %1578 = vmatpush1.msra.mxu0 %v1031
    %1579 = vmatprep.subr.mxu0 0.0
    %1580 = vmatpush1.msra.mxu0 %v1032
    %1581 = vmatprep.subr.mxu0 0.0
    %1582 = vmatpush1.msra.mxu0 %v1033
    %1583 = vmatprep.subr.mxu0 0.0
    %1584 = vmatpush1.msra.mxu0 %v1034
    %1585 = vmatprep.mubr.f32.mxu0 %v1150
    %1586 = vmatmul.mubr.f32.gmra.mrb[0].mxu0 %v1149
    %v1587 = vpop.f32.mrb[0].mxu0
    %v1588 = vadd.f32 %v1518, %v1587
    %v1589 = vpop.f32.mrb[0].mxu0
    %1590 = vdwg.mxu0
    %1591 = vmatprep.subr.mxu0 0.0
    %1592 = vmatpush1.msra.mxu0 %v1035
    %1593 = vmatprep.subr.mxu0 0.0
    %1594 = vmatpush1.msra.mxu0 %v1036
    %1595 = vmatprep.subr.mxu0 0.0
    %1596 = vmatpush1.msra.mxu0 %v1037
    %1597 = vmatprep.subr.mxu0 0.0
    %1598 = vmatpush1.msra.mxu0 %v1038
    %1599 = vmatprep.subr.mxu0 0.0
    %1600 = vmatpush1.msra.mxu0 %v1039
    %1601 = vmatprep.subr.mxu0 0.0
    %1602 = vmatpush1.msra.mxu0 %v1040
    %1603 = vmatprep.subr.mxu0 0.0
    %1604 = vmatpush1.msra.mxu0 %v1041
    %1605 = vmatprep.subr.mxu0 0.0
    %1606 = vmatpush1.msra.mxu0 %v1042
    %1607 = vmatprep.subr.mxu0 0.0
    %1608 = vmatpush1.msra.mxu0 %v1043
    %1609 = vmatprep.subr.mxu0 0.0
    %1610 = vmatpush1.msra.mxu0 %v1044
    %1611 = vmatprep.subr.mxu0 0.0
    %1612 = vmatpush1.msra.mxu0 %v1045
    %1613 = vmatprep.subr.mxu0 0.0
    %1614 = vmatpush1.msra.mxu0 %v1046
    %1615 = vmatprep.subr.mxu0 0.0
    %1616 = vmatpush1.msra.mxu0 %v1047
    %1617 = vmatprep.subr.mxu0 0.0
    %1618 = vmatpush1.msra.mxu0 %v1048
    %1619 = vmatprep.subr.mxu0 0.0
    %1620 = vmatpush1.msra.mxu0 %v1049
    %1621 = vmatprep.subr.mxu0 0.0
    %1622 = vmatpush1.msra.mxu0 %v1050
    %1623 = vmatprep.subr.mxu0 0.0
    %1624 = vmatpush1.msra.mxu0 %v1051
    %1625 = vmatprep.subr.mxu0 0.0
    %1626 = vmatpush1.msra.mxu0 %v1052
    %1627 = vmatprep.subr.mxu0 0.0
    %1628 = vmatpush1.msra.mxu0 %v1053
    %1629 = vmatprep.subr.mxu0 0.0
    %1630 = vmatpush1.msra.mxu0 %v1054
    %1631 = vmatprep.subr.mxu0 0.0
    %1632 = vmatpush1.msra.mxu0 %v1055
    %1633 = vmatprep.subr.mxu0 0.0
    %1634 = vmatpush1.msra.mxu0 %v1056
    %1635 = vmatprep.subr.mxu0 0.0
    %1636 = vmatpush1.msra.mxu0 %v1057
    %1637 = vmatprep.subr.mxu0 0.0
    %1638 = vmatpush1.msra.mxu0 %v1058
    %1639 = vmatprep.subr.mxu0 0.0
    %1640 = vmatpush1.msra.mxu0 %v1059
    %1641 = vmatprep.subr.mxu0 0.0
    %1642 = vmatpush1.msra.mxu0 %v1060
    %1643 = vmatprep.subr.mxu0 0.0
    %1644 = vmatpush1.msra.mxu0 %v1061
    %1645 = vmatprep.subr.mxu0 0.0
    %1646 = vmatpush1.msra.mxu0 %v1062
    %1647 = vmatprep.subr.mxu0 0.0
    %1648 = vmatpush1.msra.mxu0 %v1063
    %1649 = vmatprep.subr.mxu0 0.0
    %1650 = vmatpush1.msra.mxu0 %v1064
    %1651 = vmatprep.subr.mxu0 0.0
    %1652 = vmatpush1.msra.mxu0 %v1065
    %1653 = vmatprep.subr.mxu0 0.0
    %1654 = vmatpush1.msra.mxu0 %v1066
    %1655 = vmatprep.mubr.f32.mxu0 %v1152
    %1656 = vmatmul.mubr.f32.gmra.mrb[0].mxu0 %v1151
    %v1657 = vpop.f32.mrb[0].mxu0
    %v1658 = vadd.f32 %v1588, %v1657
    %v1659 = vpop.f32.mrb[0].mxu0
    %1660 = vdwg.mxu0
    %1661 = vmatprep.subr.mxu0 0.0
    %1662 = vmatpush1.msra.mxu0 %v1067
    %1663 = vmatprep.subr.mxu0 0.0
    %1664 = vmatpush1.msra.mxu0 %v1068
    %1665 = vmatprep.subr.mxu0 0.0
    %1666 = vmatpush1.msra.mxu0 %v1069
    %1667 = vmatprep.subr.mxu0 0.0
    %1668 = vmatpush1.msra.mxu0 %v1070
    %1669 = vmatprep.subr.mxu0 0.0
    %1670 = vmatpush1.msra.mxu0 %v1071
    %1671 = vmatprep.subr.mxu0 0.0
    %1672 = vmatpush1.msra.mxu0 %v1072
    %1673 = vmatprep.subr.mxu0 0.0
    %1674 = vmatpush1.msra.mxu0 %v1073
    %1675 = vmatprep.subr.mxu0 0.0
    %1676 = vmatpush1.msra.mxu0 %v1074
    %1677 = vmatprep.subr.mxu0 0.0
    %1678 = vmatpush1.msra.mxu0 %v1075
    %1679 = vmatprep.subr.mxu0 0.0
    %1680 = vmatpush1.msra.mxu0 %v1076
    %1681 = vmatprep.subr.mxu0 0.0
    %1682 = vmatpush1.msra.mxu0 %v1077
    %1683 = vmatprep.subr.mxu0 0.0
    %1684 = vmatpush1.msra.mxu0 %v1078
    %1685 = vmatprep.subr.mxu0 0.0
    %1686 = vmatpush1.msra.mxu0 %v1079
    %1687 = vmatprep.subr.mxu0 0.0
    %1688 = vmatpush1.msra.mxu0 %v1080
    %1689 = vmatprep.subr.mxu0 0.0
    %1690 = vmatpush1.msra.mxu0 %v1081
    %1691 = vmatprep.subr.mxu0 0.0
    %1692 = vmatpush1.msra.mxu0 %v1082
    %1693 = vmatprep.subr.mxu0 0.0
    %1694 = vmatpush1.msra.mxu0 %v1083
    %1695 = vmatprep.subr.mxu0 0.0
    %1696 = vmatpush1.msra.mxu0 %v1084
    %1697 = vmatprep.subr.mxu0 0.0
    %1698 = vmatpush1.msra.mxu0 %v1085
    %1699 = vmatprep.subr.mxu0 0.0
    %1700 = vmatpush1.msra.mxu0 %v1086
    %1701 = vmatprep.subr.mxu0 0.0
    %1702 = vmatpush1.msra.mxu0 %v1087
    %1703 = vmatprep.subr.mxu0 0.0
    %1704 = vmatpush1.msra.mxu0 %v1088
    %1705 = vmatprep.subr.mxu0 0.0
    %1706 = vmatpush1.msra.mxu0 %v1089
    %1707 = vmatprep.subr.mxu0 0.0
    %1708 = vmatpush1.msra.mxu0 %v1090
    %1709 = vmatprep.subr.mxu0 0.0
    %1710 = vmatpush1.msra.mxu0 %v1091
    %1711 = vmatprep.subr.mxu0 0.0
    %1712 = vmatpush1.msra.mxu0 %v1092
    %1713 = vmatprep.subr.mxu0 0.0
    %1714 = vmatpush1.msra.mxu0 %v1093
    %1715 = vmatprep.subr.mxu0 0.0
    %1716 = vmatpush1.msra.mxu0 %v1094
    %1717 = vmatprep.subr.mxu0 0.0
    %1718 = vmatpush1.msra.mxu0 %v1095
    %1719 = vmatprep.subr.mxu0 0.0
    %1720 = vmatpush1.msra.mxu0 %v1096
    %1721 = vmatprep.subr.mxu0 0.0
    %1722 = vmatpush1.msra.mxu0 %v1097
    %1723 = vmatprep.subr.mxu0 0.0
    %1724 = vmatpush1.msra.mxu0 %v1098
    %1725 = vmatprep.mubr.f32.mxu0 %v1154
    %1726 = vmatmul.mubr.f32.gmra.mrb[0].mxu0 %v1153
    %v1727 = vpop.f32.mrb[0].mxu0
    %v1728 = vadd.f32 %v1658, %v1727
    %v1729 = vpop.f32.mrb[0].mxu0
    %1730 = vdwg.mxu0
    %1731 = vst [vmem:[#allocation7] sm:$0x3] %v1728
    // Predicated region
    $region22: #{tpu_custom_call.1} parent=1 // pred_check
      _
    $region23: #{tpu_custom_call.1} parent=1 // pred_check_branch
      %1733 = sbr.rel (0) target = $region25
    $region24: #{tpu_custom_call.1} parent=1 // pred_region
      %s1735 = ssub.s32 32, 32
      %1736 = vsyncadd [#allocation4], %s1735
      %s1738 = sshll.u32 [#allocation7], 4
      %s1739 = int_to_ptr.vmem [resolvable:$true] %s1738
      %1741 = dma.vmem_to_hbm [thread:$0]  %s1739, 32, %s3, [#allocation4]
    $region25: #{tpu_custom_call.1} parent=1 // pred_fallthru
      _
    // Predicated region
    $region26: #{tpu_custom_call.1} parent=1 // pred_check
      _
    $region27: #{tpu_custom_call.1} parent=1 // pred_check_branch
      %1743 = sbr.rel (0) target = $region29
    $region28: #{tpu_custom_call.1} parent=1 // pred_region
      %1744 = dma.done [#allocation4], 32
    $region29: #{tpu_custom_call.1} parent=1 // pred_fallthru
      _
    %1745 = vsyncpa [#allocation3], 1
    %1746 = vsyncpa [#allocation6], 1
    %1747 = vsyncpa [#allocation4], 1

</llo_original>
